<compile_context>
chip_gen: v5e
topology: v5e:2x2
jax: 0.10.0
libtpu: 0.0.40
codegen_flags: <defaults>
</compile_context>

<pallas_src>
import jax
import jax.numpy as jnp
from jax.experimental import pallas as pl
from jax.experimental.pallas import tpu as pltpu

HIDDEN = 32    # hidden_size
EMBED = 32     # embedding_dim
VOCAB = 64     # output_size
N_LAYERS = 1

H_PAD = 128    # hidden padded to a full lane vector
E_PAD = 128    # embedding padded to a full lane vector
V_PAD = 128    # vocab padded to a full lane vector
G_PAD = 128    # each GRU gate occupies its own 128-lane block
NEG = -1e30    # bias for the masked (padded) vocab lanes


def decoder_seq_kernel(tok_ref,                                   # (1, T*B_BLK, 1) int32 (t-major rows)
                       h0_ref, emb_ref, wx_ref, bx_ref,
                       wh_ref, bh_ref, wout_ref, bout_ref,        # resident weights (constant index_maps)
                       logp_ref, hfin_ref,                        # outputs
                       gi_scr, h_hist, h_scr):                    # VMEM scratch
    B_BLK = h0_ref.shape[0]
    TB = tok_ref.shape[1]                  # T * B_BLK rows handled by this batch block
    T = TB // B_BLK

    # ---------------- batched, non-recurrent pre-work (all T steps at once) ----------------
    # Embedding gather as ONE one-hot matmul: (T*B_BLK, V_PAD) @ (V_PAD, E_PAD).
    tok_col = tok_ref[0]                                                     # (TB, 1) int32
    vocab_iota = jax.lax.broadcasted_iota(jnp.int32, (TB, V_PAD), 1)
    onehot = (vocab_iota == tok_col).astype(jnp.float32).astype(jnp.bfloat16)
    emb_all = jnp.dot(onehot, emb_ref[...], preferred_element_type=jnp.float32)   # (TB, E_PAD)

    # dropout(embedded): identity in eval mode.
    # TODO(synk): training-mode dropout (pltpu.prng_seed/prng_random_bits mask + 1/(1-p) scale).
    x_all = jnp.maximum(emb_all, 0.0)      # F.relu(embedded); padded lanes stay exactly zero

    # Input-path gate pre-activations for every step in ONE matmul (r/z hidden biases pre-folded).
    gi_scr[...] = jnp.dot(x_all.astype(jnp.bfloat16), wx_ref[...],
                          preferred_element_type=jnp.float32) + bx_ref[...]       # (TB, 3*G_PAD)

    # ---------------- serial GRU recurrence: only h @ W_hh remains on the critical path ------
    bh_full = jnp.broadcast_to(bh_ref[...], (B_BLK, 3 * G_PAD))   # hoisted out of the loop
    h_scr[...] = h0_ref[...]                                      # (B_BLK, H_PAD), pad lanes zero

    def step(t, carry):
        row = pl.multiple_of(t * B_BLK, B_BLK)
        h = h_scr[...]
        gi = gi_scr[pl.ds(row, B_BLK), :]                                          # (B_BLK, 3*G_PAD)
        gh = jnp.dot(h.astype(jnp.bfloat16), wh_ref[...],
                     preferred_element_type=jnp.float32) + bh_full                 # (B_BLK, 3*G_PAD)
        r = jax.nn.sigmoid(gi[:, 0 * G_PAD:1 * G_PAD] + gh[:, 0 * G_PAD:1 * G_PAD])
        z = jax.nn.sigmoid(gi[:, 1 * G_PAD:2 * G_PAD] + gh[:, 1 * G_PAD:2 * G_PAD])
        n = jnp.tanh(gi[:, 2 * G_PAD:3 * G_PAD] + r * gh[:, 2 * G_PAD:3 * G_PAD])
        h_new = (1.0 - z) * n + z * h                            # pad lanes remain exactly zero
        h_scr[...] = h_new
        h_hist[pl.ds(row, B_BLK), :] = h_new
        return carry

    jax.lax.fori_loop(0, T, step, 0, unroll=True)
    hfin_ref[...] = h_scr[...]

    # ---------------- batched output head: one Linear + LogSoftmax over all T*B_BLK rows -----
    logits = jnp.dot(h_hist[...].astype(jnp.bfloat16), wout_ref[...],
                     preferred_element_type=jnp.float32) + bout_ref[...]    # pad lanes get -1e30
    m = jnp.max(logits, axis=-1, keepdims=True)
    shifted = logits - m
    lse = jnp.log(jnp.sum(jnp.exp(shifted), axis=-1, keepdims=True))
    logp_ref[0] = shifted - lse


def _n_batch_blocks(B):
    """One batch block per TensorCore: 2 on v7x (2 TCs/chip), 1 on single-TC v5e/v6e."""
    try:
        kind = jax.devices()[0].device_kind.lower()
    except Exception:
        kind = ""
    n = 2 if "v7" in kind else 1
    return n if B % (8 * n) == 0 else 1


@jax.jit
def decoder_rnn_sequence(tokens, hidden, packed):
    """Runs DecoderRNN.forward for every token in `tokens`, carrying the hidden state.

    tokens : (T, B) int32 token ids
    hidden : (n_layers=1, B, HIDDEN) float32 initial hidden state
    returns: (log_probs (T, B, VOCAB), hidden (1, B, HIDDEN))
    """
    T, B = tokens.shape
    assert B % 8 == 0, "batch must be a multiple of 8 (f32 sublanes)"
    n_bblk = _n_batch_blocks(B)
    B_BLK = B // n_bblk
    TB = T * B_BLK

    tokens = tokens.astype(jnp.int32)
    # Per-block, t-major token column: tok_blk[bi, t*B_BLK + j, 0] = tokens[t, bi*B_BLK + j]
    tok_blk = tokens.reshape(T, n_bblk, B_BLK).transpose(1, 0, 2).reshape(n_bblk, TB, 1)
    h0 = jnp.zeros((B, H_PAD), jnp.float32).at[:, :HIDDEN].set(hidden.reshape(B, HIDDEN))

    const = lambda bi: (0, 0)          # weights: same block for every batch block -> copied once
    grid_spec = pltpu.PrefetchScalarGridSpec(
        num_scalar_prefetch=0,
        grid=(n_bblk,),
        in_specs=[
            pl.BlockSpec((1, TB, 1), lambda bi: (bi, 0, 0)),        # tokens (t-major rows)
            pl.BlockSpec((B_BLK, H_PAD), lambda bi: (bi, 0)),       # h0
            pl.BlockSpec((V_PAD, E_PAD), const),                    # embedding table (bf16)
            pl.BlockSpec((E_PAD, 3 * G_PAD), const),                # W_ih all gates (bf16)
            pl.BlockSpec((1, 3 * G_PAD), const),                    # input-path bias (r/z hidden bias folded)
            pl.BlockSpec((H_PAD, 3 * G_PAD), const),                # W_hh all gates (bf16)
            pl.BlockSpec((1, 3 * G_PAD), const),                    # hidden-path bias (n gate only)
            pl.BlockSpec((H_PAD, V_PAD), const),                    # W_out (bf16)
            pl.BlockSpec((1, V_PAD), const),                        # b_out (+ -1e30 vocab pad)
        ],
        out_specs=(
            pl.BlockSpec((1, TB, V_PAD), lambda bi: (bi, 0, 0)),    # per-block log-probs (t-major rows)
            pl.BlockSpec((B_BLK, H_PAD), lambda bi: (bi, 0)),       # final hidden
        ),
        scratch_shapes=[
            pltpu.VMEM((TB, 3 * G_PAD), jnp.float32),               # precomputed input-gate activations
            pltpu.VMEM((TB, H_PAD), jnp.float32),                   # h_t history for the batched head
            pltpu.VMEM((B_BLK, H_PAD), jnp.float32),                # carried hidden state
        ],
    )

    logp_blk, h_pad = pl.pallas_call(
        decoder_seq_kernel,
        grid_spec=grid_spec,
        out_shape=(jax.ShapeDtypeStruct((n_bblk, TB, V_PAD), jnp.float32),
                   jax.ShapeDtypeStruct((B, H_PAD), jnp.float32)),
        compiler_params=pltpu.CompilerParams(dimension_semantics=("parallel",)),
    )(tok_blk, h0,
      packed["emb"], packed["w_ih"], packed["b_i"],
      packed["w_hh"], packed["b_h"], packed["w_out"], packed["b_out"])

    # Undo the per-block, t-major packing: (n_bblk, T*B_BLK, V_PAD) -> (T, B, VOCAB)
    logp = logp_blk.reshape(n_bblk, T, B_BLK, V_PAD).transpose(1, 0, 2, 3).reshape(T, B, V_PAD)
    return logp[:, :, :VOCAB], h_pad[:, :HIDDEN].reshape(N_LAYERS, B, HIDDEN)


def init_raw_params(key):
    """PyTorch-shaped parameters (deterministic)."""
    ks = jax.random.split(key, 7)
    s = 0.1
    return {
        "embedding": jax.random.normal(ks[0], (VOCAB, EMBED), jnp.float32) * s,   # wordVecs
        "w_ih": jax.random.normal(ks[1], (3 * HIDDEN, EMBED), jnp.float32) * s,   # GRU weight_ih_l0
        "w_hh": jax.random.normal(ks[2], (3 * HIDDEN, HIDDEN), jnp.float32) * s,  # GRU weight_hh_l0
        "b_ih": jax.random.normal(ks[3], (3 * HIDDEN,), jnp.float32) * s,
        "b_hh": jax.random.normal(ks[4], (3 * HIDDEN,), jnp.float32) * s,
        "w_out": jax.random.normal(ks[5], (VOCAB, HIDDEN), jnp.float32) * s,      # Linear(H, V)
        "b_out": jax.random.normal(ks[6], (VOCAB,), jnp.float32) * s,
    }


def pack_params(raw):
    """Pack PyTorch-layout weights into padded, kernel-friendly layouts (done once on host)."""
    H, E, V = HIDDEN, EMBED, VOCAB
    f32, bf16 = jnp.float32, jnp.bfloat16
    w_ih, w_hh, b_ih, b_hh = raw["w_ih"], raw["w_hh"], raw["b_ih"], raw["b_hh"]

    emb = jnp.zeros((V_PAD, E_PAD), f32).at[:V, :E].set(raw["embedding"])

    # Input-path gate weights (x @ W): gate k occupies columns [k*G_PAD, k*G_PAD + H).
    w_x = jnp.zeros((E_PAD, 3 * G_PAD), f32)
    for k in range(3):
        w_x = w_x.at[:E, k * G_PAD:k * G_PAD + H].set(w_ih[k * H:(k + 1) * H, :].T)

    # Hidden-path gate weights (h @ W): all three gates.
    w_h = jnp.zeros((H_PAD, 3 * G_PAD), f32)
    for k in range(3):
        w_h = w_h.at[:H, k * G_PAD:k * G_PAD + H].set(w_hh[k * H:(k + 1) * H, :].T)

    # Biases: r/z hidden biases fold into the (precomputed) input path; the n gate keeps b_hn
    # on the hidden path because it sits inside r * (h @ W_hn + b_hn).
    b_i = jnp.zeros((1, 3 * G_PAD), f32)
    b_i = b_i.at[0, 0:H].set(b_ih[0:H] + b_hh[0:H])                              # b_ir + b_hr
    b_i = b_i.at[0, G_PAD:G_PAD + H].set(b_ih[H:2 * H] + b_hh[H:2 * H])          # b_iz + b_hz
    b_i = b_i.at[0, 2 * G_PAD:2 * G_PAD + H].set(b_ih[2 * H:3 * H])              # b_in
    b_h = jnp.zeros((1, 3 * G_PAD), f32).at[0, 2 * G_PAD:2 * G_PAD + H].set(b_hh[2 * H:3 * H])

    w_out = jnp.zeros((H_PAD, V_PAD), f32).at[:H, :V].set(raw["w_out"].T)
    b_out = jnp.full((1, V_PAD), NEG, f32).at[0, :V].set(raw["b_out"])

    # Matmul operands go to bf16 (MXU-native); biases stay f32.
    return dict(emb=emb.astype(bf16), w_ih=w_x.astype(bf16), b_i=b_i,
                w_hh=w_h.astype(bf16), b_h=b_h, w_out=w_out.astype(bf16), b_out=b_out)


def reference_forward(tokens, hidden, raw):
    """Pure-JAX mirror of DecoderRNN.forward applied per token (for verification)."""
    H = HIDDEN
    def step(h, tok):
        x = jnp.maximum(raw["embedding"][tok], 0.0)                 # dropout(eval) + relu
        gi = x @ raw["w_ih"].T + raw["b_ih"]
        gh = h @ raw["w_hh"].T + raw["b_hh"]
        i_r, i_z, i_n = gi[:, :H], gi[:, H:2 * H], gi[:, 2 * H:]
        h_r, h_z, h_n = gh[:, :H], gh[:, H:2 * H], gh[:, 2 * H:]
        r = jax.nn.sigmoid(i_r + h_r)
        z = jax.nn.sigmoid(i_z + h_z)
        n = jnp.tanh(i_n + r * h_n)
        h_new = (1.0 - z) * n + z * h
        logits = h_new @ raw["w_out"].T + raw["b_out"]
        return h_new, jax.nn.log_softmax(logits, axis=-1)
    h_fin, logps = jax.lax.scan(step, hidden.reshape(-1, H), tokens)
    return logps, h_fin.reshape(N_LAYERS, -1, H)


if __name__ == "__main__":
    key = jax.random.PRNGKey(0)
    raw = init_raw_params(key)
    packed = pack_params(raw)

    T, B = 8, 16                              # 8 decode steps, 16 sequences
    tokens = jax.random.randint(jax.random.PRNGKey(1), (T, B), 0, VOCAB, dtype=jnp.int32)
    hidden = jnp.zeros((N_LAYERS, B, HIDDEN), jnp.float32)    # initHidden()

    log_probs, new_hidden = decoder_rnn_sequence(tokens, hidden, packed)
    jax.block_until_ready((log_probs, new_hidden))

    assert log_probs.shape == (T, B, VOCAB)
    assert new_hidden.shape == (N_LAYERS, B, HIDDEN)
    assert bool(jnp.all(jnp.isfinite(log_probs)))
    # log-softmax rows must sum to ~1 in prob space
    assert bool(jnp.allclose(jnp.sum(jnp.exp(log_probs), axis=-1), 1.0, atol=1e-4))

    # numerics must match the plain-JAX (PyTorch-equivalent) f32 reference
    # (tolerance covers the bf16 MXU operands; elementwise/softmax math is f32)
    logp_ref, h_ref = reference_forward(tokens, hidden, raw)
    assert bool(jnp.allclose(log_probs, logp_ref, atol=2e-2, rtol=2e-2))
    assert bool(jnp.allclose(new_hidden, h_ref, atol=2e-2, rtol=2e-2))

    print("KERNEL_OK")
</pallas_src>

<mosaic_0001>
module attributes {stable_mosaic.version = 11 : i64} {
  func.func @decoder_seq_kernel(%arg0: i32, %arg1: memref<1x128x1xi32, #tpu.memory_space<vmem>>, %arg2: memref<16x128xf32, #tpu.memory_space<vmem>>, %arg3: memref<128x128xbf16, #tpu.memory_space<vmem>>, %arg4: memref<128x384xbf16, #tpu.memory_space<vmem>>, %arg5: memref<1x384xf32, #tpu.memory_space<vmem>>, %arg6: memref<128x384xbf16, #tpu.memory_space<vmem>>, %arg7: memref<1x384xf32, #tpu.memory_space<vmem>>, %arg8: memref<128x128xbf16, #tpu.memory_space<vmem>>, %arg9: memref<1x128xf32, #tpu.memory_space<vmem>>, %arg10: memref<1x128x128xf32, #tpu.memory_space<vmem>>, %arg11: memref<16x128xf32, #tpu.memory_space<vmem>>, %arg12: memref<128x384xf32, #tpu.memory_space<vmem>>, %arg13: memref<128x128xf32, #tpu.memory_space<vmem>>, %arg14: memref<16x128xf32, #tpu.memory_space<vmem>>) attributes {dimension_semantics = [#tpu.dimension_semantics<parallel>], iteration_bounds = array<i64: 1>, scalar_prefetch = 0 : i64, scratch_operands = 3 : i64, tpu.core_type = #tpu.core_type<tc>, window_params = [{transform_indices = @transform_0, window_bounds = array<i64: 1, 128, 1>}, {transform_indices = @transform_1, window_bounds = array<i64: 16, 128>}, {pipeline_mode = #tpu.pipeline_mode<synchronous>, transform_indices = @transform_2, window_bounds = array<i64: 128, 128>}, {pipeline_mode = #tpu.pipeline_mode<synchronous>, transform_indices = @transform_3, window_bounds = array<i64: 128, 384>}, {pipeline_mode = #tpu.pipeline_mode<synchronous>, transform_indices = @transform_4, window_bounds = array<i64: 1, 384>}, {pipeline_mode = #tpu.pipeline_mode<synchronous>, transform_indices = @transform_5, window_bounds = array<i64: 128, 384>}, {pipeline_mode = #tpu.pipeline_mode<synchronous>, transform_indices = @transform_6, window_bounds = array<i64: 1, 384>}, {pipeline_mode = #tpu.pipeline_mode<synchronous>, transform_indices = @transform_7, window_bounds = array<i64: 128, 128>}, {pipeline_mode = #tpu.pipeline_mode<synchronous>, transform_indices = @transform_8, window_bounds = array<i64: 1, 128>}, {transform_indices = @transform_9, window_bounds = array<i64: 1, 128, 128>}, {transform_indices = @transform_10, window_bounds = array<i64: 16, 128>}]} {
    %c0 = arith.constant 0 : index
    %c0_0 = arith.constant 0 : index
    %c0_1 = arith.constant 0 : index
    %0 = vector.load %arg1[%c0, %c0_0, %c0_1] : memref<1x128x1xi32, #tpu.memory_space<vmem>>, vector<1x128x1xi32>
    %1 = vector.shape_cast %0 : vector<1x128x1xi32> to vector<128x1xi32>
    %2 = tpu.iota {dimensions = array<i32: 1>} : vector<128x128xi32>
    %3 = vector.broadcast %1 : vector<128x1xi32> to vector<128x128xi32>
    %4 = arith.cmpi eq, %2, %3 : vector<128x128xi32>
    %5 = arith.extui %4 : vector<128x128xi1> to vector<128x128xi32>
    %6 = arith.sitofp %5 : vector<128x128xi32> to vector<128x128xf32>
    %7 = arith.truncf %6 : vector<128x128xf32> to vector<128x128xbf16>
    %c0_2 = arith.constant 0 : index
    %c0_3 = arith.constant 0 : index
    %8 = vector.load %arg3[%c0_2, %c0_3] : memref<128x128xbf16, #tpu.memory_space<vmem>>, vector<128x128xbf16>
    %cst = arith.constant dense<0.000000e+00> : vector<128x128xf32>
    %9 = tpu.matmul %7, %8, %cst {dimension_numbers = #tpu.dot_dimension_numbers<[1], [0], [0], [1], [0, 0, 1, 1], [], []>} : vector<128x128xbf16>, vector<128x128xbf16>, vector<128x128xf32> -> vector<128x128xf32>
    %cst_4 = arith.constant 0.000000e+00 : f32
    %10 = vector.broadcast %cst_4 : f32 to vector<128x128xf32>
    %11 = arith.maximumf %9, %10 : vector<128x128xf32>
    %12 = arith.truncf %11 : vector<128x128xf32> to vector<128x128xbf16>
    %c0_5 = arith.constant 0 : index
    %c0_6 = arith.constant 0 : index
    %13 = vector.load %arg4[%c0_5, %c0_6] : memref<128x384xbf16, #tpu.memory_space<vmem>>, vector<128x384xbf16>
    %cst_7 = arith.constant dense<0.000000e+00> : vector<128x384xf32>
    %14 = tpu.matmul %12, %13, %cst_7 {dimension_numbers = #tpu.dot_dimension_numbers<[1], [0], [0], [1], [0, 0, 1, 1], [], []>} : vector<128x128xbf16>, vector<128x384xbf16>, vector<128x384xf32> -> vector<128x384xf32>
    %c0_8 = arith.constant 0 : index
    %c0_9 = arith.constant 0 : index
    %15 = vector.load %arg5[%c0_8, %c0_9] : memref<1x384xf32, #tpu.memory_space<vmem>>, vector<1x384xf32>
    %16 = vector.broadcast %15 : vector<1x384xf32> to vector<128x384xf32>
    %17 = arith.addf %14, %16 : vector<128x384xf32>
    %c0_10 = arith.constant 0 : index
    %c0_11 = arith.constant 0 : index
    %18 = vector.load %arg12[%c0_10, %c0_11] : memref<128x384xf32, #tpu.memory_space<vmem>>, vector<128x384xf32>
    tpu.vector_store %arg12[%c0_10, %c0_11], %17 {strides = array<i32>} : memref<128x384xf32, #tpu.memory_space<vmem>>, vector<128x384xf32>,
    %c0_12 = arith.constant 0 : index
    %c0_13 = arith.constant 0 : index
    %19 = vector.load %arg7[%c0_12, %c0_13] : memref<1x384xf32, #tpu.memory_space<vmem>>, vector<1x384xf32>
    %20 = vector.shape_cast %19 : vector<1x384xf32> to vector<1x384xf32>
    %21 = vector.broadcast %20 : vector<1x384xf32> to vector<16x384xf32>
    %c0_14 = arith.constant 0 : index
    %c0_15 = arith.constant 0 : index
    %22 = vector.load %arg2[%c0_14, %c0_15] : memref<16x128xf32, #tpu.memory_space<vmem>>, vector<16x128xf32>
    %c0_16 = arith.constant 0 : index
    %c0_17 = arith.constant 0 : index
    %23 = vector.load %arg14[%c0_16, %c0_17] : memref<16x128xf32, #tpu.memory_space<vmem>>, vector<16x128xf32>
    tpu.vector_store %arg14[%c0_16, %c0_17], %22 {strides = array<i32>} : memref<16x128xf32, #tpu.memory_space<vmem>>, vector<16x128xf32>,
    %c0_i32 = arith.constant 0 : i32
    %c16_i32 = arith.constant 16 : i32
    %24 = arith.muli %c0_i32, %c16_i32 : i32
    %25 = tpu.assume_multiple %24, 16 : i32
    %c0_18 = arith.constant 0 : index
    %c0_19 = arith.constant 0 : index
    %26 = vector.load %arg14[%c0_18, %c0_19] : memref<16x128xf32, #tpu.memory_space<vmem>>, vector<16x128xf32>
    %27 = arith.index_cast %25 : i32 to index
    %c0_20 = arith.constant 0 : index
    %28 = vector.load %arg12[%27, %c0_20] : memref<128x384xf32, #tpu.memory_space<vmem>>, vector<16x384xf32>
    %29 = arith.truncf %26 : vector<16x128xf32> to vector<16x128xbf16>
    %c0_21 = arith.constant 0 : index
    %c0_22 = arith.constant 0 : index
    %30 = vector.load %arg6[%c0_21, %c0_22] : memref<128x384xbf16, #tpu.memory_space<vmem>>, vector<128x384xbf16>
    %cst_23 = arith.constant dense<0.000000e+00> : vector<16x384xf32>
    %31 = tpu.matmul %29, %30, %cst_23 {dimension_numbers = #tpu.dot_dimension_numbers<[1], [0], [0], [1], [0, 0, 1, 1], [], []>} : vector<16x128xbf16>, vector<128x384xbf16>, vector<16x384xf32> -> vector<16x384xf32>
    %32 = arith.addf %31, %21 : vector<16x384xf32>
    %33 = vector.extract_strided_slice %28 {offsets = [0, 0], sizes = [16, 128], strides = [1, 1]} : vector<16x384xf32> to vector<16x128xf32>
    %34 = vector.extract_strided_slice %32 {offsets = [0, 0], sizes = [16, 128], strides = [1, 1]} : vector<16x384xf32> to vector<16x128xf32>
    %35 = arith.addf %33, %34 : vector<16x128xf32>
    %36 = arith.negf %35 : vector<16x128xf32>
    %37 = math.exp %36 : vector<16x128xf32>
    %cst_24 = arith.constant 1.000000e+00 : f32
    %38 = vector.broadcast %cst_24 : f32 to vector<16x128xf32>
    %39 = arith.addf %38, %37 : vector<16x128xf32>
    %40 = arith.divf %38, %39 : vector<16x128xf32>
    %41 = vector.extract_strided_slice %28 {offsets = [0, 128], sizes = [16, 128], strides = [1, 1]} : vector<16x384xf32> to vector<16x128xf32>
    %42 = vector.extract_strided_slice %32 {offsets = [0, 128], sizes = [16, 128], strides = [1, 1]} : vector<16x384xf32> to vector<16x128xf32>
    %43 = arith.addf %41, %42 : vector<16x128xf32>
    %44 = arith.negf %43 : vector<16x128xf32>
    %45 = math.exp %44 : vector<16x128xf32>
    %cst_25 = arith.constant 1.000000e+00 : f32
    %46 = vector.broadcast %cst_25 : f32 to vector<16x128xf32>
    %47 = arith.addf %46, %45 : vector<16x128xf32>
    %48 = arith.divf %46, %47 : vector<16x128xf32>
    %49 = vector.extract_strided_slice %28 {offsets = [0, 256], sizes = [16, 128], strides = [1, 1]} : vector<16x384xf32> to vector<16x128xf32>
    %50 = vector.extract_strided_slice %32 {offsets = [0, 256], sizes = [16, 128], strides = [1, 1]} : vector<16x384xf32> to vector<16x128xf32>
    %51 = arith.mulf %40, %50 : vector<16x128xf32>
    %52 = arith.addf %49, %51 : vector<16x128xf32>
    %53 = math.tanh %52 : vector<16x128xf32>
    %cst_26 = arith.constant 1.000000e+00 : f32
    %54 = vector.broadcast %cst_26 : f32 to vector<16x128xf32>
    %55 = arith.subf %54, %48 : vector<16x128xf32>
    %56 = arith.mulf %55, %53 : vector<16x128xf32>
    %57 = arith.mulf %48, %26 : vector<16x128xf32>
    %58 = arith.addf %56, %57 : vector<16x128xf32>
    %c0_27 = arith.constant 0 : index
    %c0_28 = arith.constant 0 : index
    %59 = vector.load %arg14[%c0_27, %c0_28] : memref<16x128xf32, #tpu.memory_space<vmem>>, vector<16x128xf32>
    tpu.vector_store %arg14[%c0_27, %c0_28], %58 {strides = array<i32>} : memref<16x128xf32, #tpu.memory_space<vmem>>, vector<16x128xf32>,
    %60 = arith.index_cast %25 : i32 to index
    %c0_29 = arith.constant 0 : index
    %61 = vector.load %arg13[%60, %c0_29] : memref<128x128xf32, #tpu.memory_space<vmem>>, vector<16x128xf32>
    tpu.vector_store %arg13[%60, %c0_29], %58 {strides = array<i32>} : memref<128x128xf32, #tpu.memory_space<vmem>>, vector<16x128xf32>,
    %c1_i32 = arith.constant 1 : i32
    %c16_i32_30 = arith.constant 16 : i32
    %62 = arith.muli %c1_i32, %c16_i32_30 : i32
    %63 = tpu.assume_multiple %62, 16 : i32
    %c0_31 = arith.constant 0 : index
    %c0_32 = arith.constant 0 : index
    %64 = vector.load %arg14[%c0_31, %c0_32] : memref<16x128xf32, #tpu.memory_space<vmem>>, vector<16x128xf32>
    %65 = arith.index_cast %63 : i32 to index
    %c0_33 = arith.constant 0 : index
    %66 = vector.load %arg12[%65, %c0_33] : memref<128x384xf32, #tpu.memory_space<vmem>>, vector<16x384xf32>
    %67 = arith.truncf %64 : vector<16x128xf32> to vector<16x128xbf16>
    %c0_34 = arith.constant 0 : index
    %c0_35 = arith.constant 0 : index
    %68 = vector.load %arg6[%c0_34, %c0_35] : memref<128x384xbf16, #tpu.memory_space<vmem>>, vector<128x384xbf16>
    %cst_36 = arith.constant dense<0.000000e+00> : vector<16x384xf32>
    %69 = tpu.matmul %67, %68, %cst_36 {dimension_numbers = #tpu.dot_dimension_numbers<[1], [0], [0], [1], [0, 0, 1, 1], [], []>} : vector<16x128xbf16>, vector<128x384xbf16>, vector<16x384xf32> -> vector<16x384xf32>
    %70 = arith.addf %69, %21 : vector<16x384xf32>
    %71 = vector.extract_strided_slice %66 {offsets = [0, 0], sizes = [16, 128], strides = [1, 1]} : vector<16x384xf32> to vector<16x128xf32>
    %72 = vector.extract_strided_slice %70 {offsets = [0, 0], sizes = [16, 128], strides = [1, 1]} : vector<16x384xf32> to vector<16x128xf32>
    %73 = arith.addf %71, %72 : vector<16x128xf32>
    %74 = arith.negf %73 : vector<16x128xf32>
    %75 = math.exp %74 : vector<16x128xf32>
    %cst_37 = arith.constant 1.000000e+00 : f32
    %76 = vector.broadcast %cst_37 : f32 to vector<16x128xf32>
    %77 = arith.addf %76, %75 : vector<16x128xf32>
    %78 = arith.divf %76, %77 : vector<16x128xf32>
    %79 = vector.extract_strided_slice %66 {offsets = [0, 128], sizes = [16, 128], strides = [1, 1]} : vector<16x384xf32> to vector<16x128xf32>
    %80 = vector.extract_strided_slice %70 {offsets = [0, 128], sizes = [16, 128], strides = [1, 1]} : vector<16x384xf32> to vector<16x128xf32>
    %81 = arith.addf %79, %80 : vector<16x128xf32>
    %82 = arith.negf %81 : vector<16x128xf32>
    %83 = math.exp %82 : vector<16x128xf32>
    %cst_38 = arith.constant 1.000000e+00 : f32
    %84 = vector.broadcast %cst_38 : f32 to vector<16x128xf32>
    %85 = arith.addf %84, %83 : vector<16x128xf32>
    %86 = arith.divf %84, %85 : vector<16x128xf32>
    %87 = vector.extract_strided_slice %66 {offsets = [0, 256], sizes = [16, 128], strides = [1, 1]} : vector<16x384xf32> to vector<16x128xf32>
    %88 = vector.extract_strided_slice %70 {offsets = [0, 256], sizes = [16, 128], strides = [1, 1]} : vector<16x384xf32> to vector<16x128xf32>
    %89 = arith.mulf %78, %88 : vector<16x128xf32>
    %90 = arith.addf %87, %89 : vector<16x128xf32>
    %91 = math.tanh %90 : vector<16x128xf32>
    %cst_39 = arith.constant 1.000000e+00 : f32
    %92 = vector.broadcast %cst_39 : f32 to vector<16x128xf32>
    %93 = arith.subf %92, %86 : vector<16x128xf32>
    %94 = arith.mulf %93, %91 : vector<16x128xf32>
    %95 = arith.mulf %86, %64 : vector<16x128xf32>
    %96 = arith.addf %94, %95 : vector<16x128xf32>
    %c0_40 = arith.constant 0 : index
    %c0_41 = arith.constant 0 : index
    %97 = vector.load %arg14[%c0_40, %c0_41] : memref<16x128xf32, #tpu.memory_space<vmem>>, vector<16x128xf32>
    tpu.vector_store %arg14[%c0_40, %c0_41], %96 {strides = array<i32>} : memref<16x128xf32, #tpu.memory_space<vmem>>, vector<16x128xf32>,
    %98 = arith.index_cast %63 : i32 to index
    %c0_42 = arith.constant 0 : index
    %99 = vector.load %arg13[%98, %c0_42] : memref<128x128xf32, #tpu.memory_space<vmem>>, vector<16x128xf32>
    tpu.vector_store %arg13[%98, %c0_42], %96 {strides = array<i32>} : memref<128x128xf32, #tpu.memory_space<vmem>>, vector<16x128xf32>,
    %c2_i32 = arith.constant 2 : i32
    %c16_i32_43 = arith.constant 16 : i32
    %100 = arith.muli %c2_i32, %c16_i32_43 : i32
    %101 = tpu.assume_multiple %100, 16 : i32
    %c0_44 = arith.constant 0 : index
    %c0_45 = arith.constant 0 : index
    %102 = vector.load %arg14[%c0_44, %c0_45] : memref<16x128xf32, #tpu.memory_space<vmem>>, vector<16x128xf32>
    %103 = arith.index_cast %101 : i32 to index
    %c0_46 = arith.constant 0 : index
    %104 = vector.load %arg12[%103, %c0_46] : memref<128x384xf32, #tpu.memory_space<vmem>>, vector<16x384xf32>
    %105 = arith.truncf %102 : vector<16x128xf32> to vector<16x128xbf16>
    %c0_47 = arith.constant 0 : index
    %c0_48 = arith.constant 0 : index
    %106 = vector.load %arg6[%c0_47, %c0_48] : memref<128x384xbf16, #tpu.memory_space<vmem>>, vector<128x384xbf16>
    %cst_49 = arith.constant dense<0.000000e+00> : vector<16x384xf32>
    %107 = tpu.matmul %105, %106, %cst_49 {dimension_numbers = #tpu.dot_dimension_numbers<[1], [0], [0], [1], [0, 0, 1, 1], [], []>} : vector<16x128xbf16>, vector<128x384xbf16>, vector<16x384xf32> -> vector<16x384xf32>
    %108 = arith.addf %107, %21 : vector<16x384xf32>
    %109 = vector.extract_strided_slice %104 {offsets = [0, 0], sizes = [16, 128], strides = [1, 1]} : vector<16x384xf32> to vector<16x128xf32>
    %110 = vector.extract_strided_slice %108 {offsets = [0, 0], sizes = [16, 128], strides = [1, 1]} : vector<16x384xf32> to vector<16x128xf32>
    %111 = arith.addf %109, %110 : vector<16x128xf32>
    %112 = arith.negf %111 : vector<16x128xf32>
    %113 = math.exp %112 : vector<16x128xf32>
    %cst_50 = arith.constant 1.000000e+00 : f32
    %114 = vector.broadcast %cst_50 : f32 to vector<16x128xf32>
    %115 = arith.addf %114, %113 : vector<16x128xf32>
    %116 = arith.divf %114, %115 : vector<16x128xf32>
    %117 = vector.extract_strided_slice %104 {offsets = [0, 128], sizes = [16, 128], strides = [1, 1]} : vector<16x384xf32> to vector<16x128xf32>
    %118 = vector.extract_strided_slice %108 {offsets = [0, 128], sizes = [16, 128], strides = [1, 1]} : vector<16x384xf32> to vector<16x128xf32>
    %119 = arith.addf %117, %118 : vector<16x128xf32>
    %120 = arith.negf %119 : vector<16x128xf32>
    %121 = math.exp %120 : vector<16x128xf32>
    %cst_51 = arith.constant 1.000000e+00 : f32
    %122 = vector.broadcast %cst_51 : f32 to vector<16x128xf32>
    %123 = arith.addf %122, %121 : vector<16x128xf32>
    %124 = arith.divf %122, %123 : vector<16x128xf32>
    %125 = vector.extract_strided_slice %104 {offsets = [0, 256], sizes = [16, 128], strides = [1, 1]} : vector<16x384xf32> to vector<16x128xf32>
    %126 = vector.extract_strided_slice %108 {offsets = [0, 256], sizes = [16, 128], strides = [1, 1]} : vector<16x384xf32> to vector<16x128xf32>
    %127 = arith.mulf %116, %126 : vector<16x128xf32>
    %128 = arith.addf %125, %127 : vector<16x128xf32>
    %129 = math.tanh %128 : vector<16x128xf32>
    %cst_52 = arith.constant 1.000000e+00 : f32
    %130 = vector.broadcast %cst_52 : f32 to vector<16x128xf32>
    %131 = arith.subf %130, %124 : vector<16x128xf32>
    %132 = arith.mulf %131, %129 : vector<16x128xf32>
    %133 = arith.mulf %124, %102 : vector<16x128xf32>
    %134 = arith.addf %132, %133 : vector<16x128xf32>
    %c0_53 = arith.constant 0 : index
    %c0_54 = arith.constant 0 : index
    %135 = vector.load %arg14[%c0_53, %c0_54] : memref<16x128xf32, #tpu.memory_space<vmem>>, vector<16x128xf32>
    tpu.vector_store %arg14[%c0_53, %c0_54], %134 {strides = array<i32>} : memref<16x128xf32, #tpu.memory_space<vmem>>, vector<16x128xf32>,
    %136 = arith.index_cast %101 : i32 to index
    %c0_55 = arith.constant 0 : index
    %137 = vector.load %arg13[%136, %c0_55] : memref<128x128xf32, #tpu.memory_space<vmem>>, vector<16x128xf32>
    tpu.vector_store %arg13[%136, %c0_55], %134 {strides = array<i32>} : memref<128x128xf32, #tpu.memory_space<vmem>>, vector<16x128xf32>,
    %c3_i32 = arith.constant 3 : i32
    %c16_i32_56 = arith.constant 16 : i32
    %138 = arith.muli %c3_i32, %c16_i32_56 : i32
    %139 = tpu.assume_multiple %138, 16 : i32
    %c0_57 = arith.constant 0 : index
    %c0_58 = arith.constant 0 : index
    %140 = vector.load %arg14[%c0_57, %c0_58] : memref<16x128xf32, #tpu.memory_space<vmem>>, vector<16x128xf32>
    %141 = arith.index_cast %139 : i32 to index
    %c0_59 = arith.constant 0 : index
    %142 = vector.load %arg12[%141, %c0_59] : memref<128x384xf32, #tpu.memory_space<vmem>>, vector<16x384xf32>
    %143 = arith.truncf %140 : vector<16x128xf32> to vector<16x128xbf16>
    %c0_60 = arith.constant 0 : index
    %c0_61 = arith.constant 0 : index
    %144 = vector.load %arg6[%c0_60, %c0_61] : memref<128x384xbf16, #tpu.memory_space<vmem>>, vector<128x384xbf16>
    %cst_62 = arith.constant dense<0.000000e+00> : vector<16x384xf32>
    %145 = tpu.matmul %143, %144, %cst_62 {dimension_numbers = #tpu.dot_dimension_numbers<[1], [0], [0], [1], [0, 0, 1, 1], [], []>} : vector<16x128xbf16>, vector<128x384xbf16>, vector<16x384xf32> -> vector<16x384xf32>
    %146 = arith.addf %145, %21 : vector<16x384xf32>
    %147 = vector.extract_strided_slice %142 {offsets = [0, 0], sizes = [16, 128], strides = [1, 1]} : vector<16x384xf32> to vector<16x128xf32>
    %148 = vector.extract_strided_slice %146 {offsets = [0, 0], sizes = [16, 128], strides = [1, 1]} : vector<16x384xf32> to vector<16x128xf32>
    %149 = arith.addf %147, %148 : vector<16x128xf32>
    %150 = arith.negf %149 : vector<16x128xf32>
    %151 = math.exp %150 : vector<16x128xf32>
    %cst_63 = arith.constant 1.000000e+00 : f32
    %152 = vector.broadcast %cst_63 : f32 to vector<16x128xf32>
    %153 = arith.addf %152, %151 : vector<16x128xf32>
    %154 = arith.divf %152, %153 : vector<16x128xf32>
    %155 = vector.extract_strided_slice %142 {offsets = [0, 128], sizes = [16, 128], strides = [1, 1]} : vector<16x384xf32> to vector<16x128xf32>
    %156 = vector.extract_strided_slice %146 {offsets = [0, 128], sizes = [16, 128], strides = [1, 1]} : vector<16x384xf32> to vector<16x128xf32>
    %157 = arith.addf %155, %156 : vector<16x128xf32>
    %158 = arith.negf %157 : vector<16x128xf32>
    %159 = math.exp %158 : vector<16x128xf32>
    %cst_64 = arith.constant 1.000000e+00 : f32
    %160 = vector.broadcast %cst_64 : f32 to vector<16x128xf32>
    %161 = arith.addf %160, %159 : vector<16x128xf32>
    %162 = arith.divf %160, %161 : vector<16x128xf32>
    %163 = vector.extract_strided_slice %142 {offsets = [0, 256], sizes = [16, 128], strides = [1, 1]} : vector<16x384xf32> to vector<16x128xf32>
    %164 = vector.extract_strided_slice %146 {offsets = [0, 256], sizes = [16, 128], strides = [1, 1]} : vector<16x384xf32> to vector<16x128xf32>
    %165 = arith.mulf %154, %164 : vector<16x128xf32>
    %166 = arith.addf %163, %165 : vector<16x128xf32>
    %167 = math.tanh %166 : vector<16x128xf32>
    %cst_65 = arith.constant 1.000000e+00 : f32
    %168 = vector.broadcast %cst_65 : f32 to vector<16x128xf32>
    %169 = arith.subf %168, %162 : vector<16x128xf32>
    %170 = arith.mulf %169, %167 : vector<16x128xf32>
    %171 = arith.mulf %162, %140 : vector<16x128xf32>
    %172 = arith.addf %170, %171 : vector<16x128xf32>
    %c0_66 = arith.constant 0 : index
    %c0_67 = arith.constant 0 : index
    %173 = vector.load %arg14[%c0_66, %c0_67] : memref<16x128xf32, #tpu.memory_space<vmem>>, vector<16x128xf32>
    tpu.vector_store %arg14[%c0_66, %c0_67], %172 {strides = array<i32>} : memref<16x128xf32, #tpu.memory_space<vmem>>, vector<16x128xf32>,
    %174 = arith.index_cast %139 : i32 to index
    %c0_68 = arith.constant 0 : index
    %175 = vector.load %arg13[%174, %c0_68] : memref<128x128xf32, #tpu.memory_space<vmem>>, vector<16x128xf32>
    tpu.vector_store %arg13[%174, %c0_68], %172 {strides = array<i32>} : memref<128x128xf32, #tpu.memory_space<vmem>>, vector<16x128xf32>,
    %c4_i32 = arith.constant 4 : i32
    %c16_i32_69 = arith.constant 16 : i32
    %176 = arith.muli %c4_i32, %c16_i32_69 : i32
    %177 = tpu.assume_multiple %176, 16 : i32
    %c0_70 = arith.constant 0 : index
    %c0_71 = arith.constant 0 : index
    %178 = vector.load %arg14[%c0_70, %c0_71] : memref<16x128xf32, #tpu.memory_space<vmem>>, vector<16x128xf32>
    %179 = arith.index_cast %177 : i32 to index
    %c0_72 = arith.constant 0 : index
    %180 = vector.load %arg12[%179, %c0_72] : memref<128x384xf32, #tpu.memory_space<vmem>>, vector<16x384xf32>
    %181 = arith.truncf %178 : vector<16x128xf32> to vector<16x128xbf16>
    %c0_73 = arith.constant 0 : index
    %c0_74 = arith.constant 0 : index
    %182 = vector.load %arg6[%c0_73, %c0_74] : memref<128x384xbf16, #tpu.memory_space<vmem>>, vector<128x384xbf16>
    %cst_75 = arith.constant dense<0.000000e+00> : vector<16x384xf32>
    %183 = tpu.matmul %181, %182, %cst_75 {dimension_numbers = #tpu.dot_dimension_numbers<[1], [0], [0], [1], [0, 0, 1, 1], [], []>} : vector<16x128xbf16>, vector<128x384xbf16>, vector<16x384xf32> -> vector<16x384xf32>
    %184 = arith.addf %183, %21 : vector<16x384xf32>
    %185 = vector.extract_strided_slice %180 {offsets = [0, 0], sizes = [16, 128], strides = [1, 1]} : vector<16x384xf32> to vector<16x128xf32>
    %186 = vector.extract_strided_slice %184 {offsets = [0, 0], sizes = [16, 128], strides = [1, 1]} : vector<16x384xf32> to vector<16x128xf32>
    %187 = arith.addf %185, %186 : vector<16x128xf32>
    %188 = arith.negf %187 : vector<16x128xf32>
    %189 = math.exp %188 : vector<16x128xf32>
    %cst_76 = arith.constant 1.000000e+00 : f32
    %190 = vector.broadcast %cst_76 : f32 to vector<16x128xf32>
    %191 = arith.addf %190, %189 : vector<16x128xf32>
    %192 = arith.divf %190, %191 : vector<16x128xf32>
    %193 = vector.extract_strided_slice %180 {offsets = [0, 128], sizes = [16, 128], strides = [1, 1]} : vector<16x384xf32> to vector<16x128xf32>
    %194 = vector.extract_strided_slice %184 {offsets = [0, 128], sizes = [16, 128], strides = [1, 1]} : vector<16x384xf32> to vector<16x128xf32>
    %195 = arith.addf %193, %194 : vector<16x128xf32>
    %196 = arith.negf %195 : vector<16x128xf32>
    %197 = math.exp %196 : vector<16x128xf32>
    %cst_77 = arith.constant 1.000000e+00 : f32
    %198 = vector.broadcast %cst_77 : f32 to vector<16x128xf32>
    %199 = arith.addf %198, %197 : vector<16x128xf32>
    %200 = arith.divf %198, %199 : vector<16x128xf32>
    %201 = vector.extract_strided_slice %180 {offsets = [0, 256], sizes = [16, 128], strides = [1, 1]} : vector<16x384xf32> to vector<16x128xf32>
    %202 = vector.extract_strided_slice %184 {offsets = [0, 256], sizes = [16, 128], strides = [1, 1]} : vector<16x384xf32> to vector<16x128xf32>
    %203 = arith.mulf %192, %202 : vector<16x128xf32>
    %204 = arith.addf %201, %203 : vector<16x128xf32>
    %205 = math.tanh %204 : vector<16x128xf32>
    %cst_78 = arith.constant 1.000000e+00 : f32
    %206 = vector.broadcast %cst_78 : f32 to vector<16x128xf32>
    %207 = arith.subf %206, %200 : vector<16x128xf32>
    %208 = arith.mulf %207, %205 : vector<16x128xf32>
    %209 = arith.mulf %200, %178 : vector<16x128xf32>
    %210 = arith.addf %208, %209 : vector<16x128xf32>
    %c0_79 = arith.constant 0 : index
    %c0_80 = arith.constant 0 : index
    %211 = vector.load %arg14[%c0_79, %c0_80] : memref<16x128xf32, #tpu.memory_space<vmem>>, vector<16x128xf32>
    tpu.vector_store %arg14[%c0_79, %c0_80], %210 {strides = array<i32>} : memref<16x128xf32, #tpu.memory_space<vmem>>, vector<16x128xf32>,
    %212 = arith.index_cast %177 : i32 to index
    %c0_81 = arith.constant 0 : index
    %213 = vector.load %arg13[%212, %c0_81] : memref<128x128xf32, #tpu.memory_space<vmem>>, vector<16x128xf32>
    tpu.vector_store %arg13[%212, %c0_81], %210 {strides = array<i32>} : memref<128x128xf32, #tpu.memory_space<vmem>>, vector<16x128xf32>,
    %c5_i32 = arith.constant 5 : i32
    %c16_i32_82 = arith.constant 16 : i32
    %214 = arith.muli %c5_i32, %c16_i32_82 : i32
    %215 = tpu.assume_multiple %214, 16 : i32
    %c0_83 = arith.constant 0 : index
    %c0_84 = arith.constant 0 : index
    %216 = vector.load %arg14[%c0_83, %c0_84] : memref<16x128xf32, #tpu.memory_space<vmem>>, vector<16x128xf32>
    %217 = arith.index_cast %215 : i32 to index
    %c0_85 = arith.constant 0 : index
    %218 = vector.load %arg12[%217, %c0_85] : memref<128x384xf32, #tpu.memory_space<vmem>>, vector<16x384xf32>
    %219 = arith.truncf %216 : vector<16x128xf32> to vector<16x128xbf16>
    %c0_86 = arith.constant 0 : index
    %c0_87 = arith.constant 0 : index
    %220 = vector.load %arg6[%c0_86, %c0_87] : memref<128x384xbf16, #tpu.memory_space<vmem>>, vector<128x384xbf16>
    %cst_88 = arith.constant dense<0.000000e+00> : vector<16x384xf32>
    %221 = tpu.matmul %219, %220, %cst_88 {dimension_numbers = #tpu.dot_dimension_numbers<[1], [0], [0], [1], [0, 0, 1, 1], [], []>} : vector<16x128xbf16>, vector<128x384xbf16>, vector<16x384xf32> -> vector<16x384xf32>
    %222 = arith.addf %221, %21 : vector<16x384xf32>
    %223 = vector.extract_strided_slice %218 {offsets = [0, 0], sizes = [16, 128], strides = [1, 1]} : vector<16x384xf32> to vector<16x128xf32>
    %224 = vector.extract_strided_slice %222 {offsets = [0, 0], sizes = [16, 128], strides = [1, 1]} : vector<16x384xf32> to vector<16x128xf32>
    %225 = arith.addf %223, %224 : vector<16x128xf32>
    %226 = arith.negf %225 : vector<16x128xf32>
    %227 = math.exp %226 : vector<16x128xf32>
    %cst_89 = arith.constant 1.000000e+00 : f32
    %228 = vector.broadcast %cst_89 : f32 to vector<16x128xf32>
    %229 = arith.addf %228, %227 : vector<16x128xf32>
    %230 = arith.divf %228, %229 : vector<16x128xf32>
    %231 = vector.extract_strided_slice %218 {offsets = [0, 128], sizes = [16, 128], strides = [1, 1]} : vector<16x384xf32> to vector<16x128xf32>
    %232 = vector.extract_strided_slice %222 {offsets = [0, 128], sizes = [16, 128], strides = [1, 1]} : vector<16x384xf32> to vector<16x128xf32>
    %233 = arith.addf %231, %232 : vector<16x128xf32>
    %234 = arith.negf %233 : vector<16x128xf32>
    %235 = math.exp %234 : vector<16x128xf32>
    %cst_90 = arith.constant 1.000000e+00 : f32
    %236 = vector.broadcast %cst_90 : f32 to vector<16x128xf32>
    %237 = arith.addf %236, %235 : vector<16x128xf32>
    %238 = arith.divf %236, %237 : vector<16x128xf32>
    %239 = vector.extract_strided_slice %218 {offsets = [0, 256], sizes = [16, 128], strides = [1, 1]} : vector<16x384xf32> to vector<16x128xf32>
    %240 = vector.extract_strided_slice %222 {offsets = [0, 256], sizes = [16, 128], strides = [1, 1]} : vector<16x384xf32> to vector<16x128xf32>
    %241 = arith.mulf %230, %240 : vector<16x128xf32>
    %242 = arith.addf %239, %241 : vector<16x128xf32>
    %243 = math.tanh %242 : vector<16x128xf32>
    %cst_91 = arith.constant 1.000000e+00 : f32
    %244 = vector.broadcast %cst_91 : f32 to vector<16x128xf32>
    %245 = arith.subf %244, %238 : vector<16x128xf32>
    %246 = arith.mulf %245, %243 : vector<16x128xf32>
    %247 = arith.mulf %238, %216 : vector<16x128xf32>
    %248 = arith.addf %246, %247 : vector<16x128xf32>
    %c0_92 = arith.constant 0 : index
    %c0_93 = arith.constant 0 : index
    %249 = vector.load %arg14[%c0_92, %c0_93] : memref<16x128xf32, #tpu.memory_space<vmem>>, vector<16x128xf32>
    tpu.vector_store %arg14[%c0_92, %c0_93], %248 {strides = array<i32>} : memref<16x128xf32, #tpu.memory_space<vmem>>, vector<16x128xf32>,
    %250 = arith.index_cast %215 : i32 to index
    %c0_94 = arith.constant 0 : index
    %251 = vector.load %arg13[%250, %c0_94] : memref<128x128xf32, #tpu.memory_space<vmem>>, vector<16x128xf32>
    tpu.vector_store %arg13[%250, %c0_94], %248 {strides = array<i32>} : memref<128x128xf32, #tpu.memory_space<vmem>>, vector<16x128xf32>,
    %c6_i32 = arith.constant 6 : i32
    %c16_i32_95 = arith.constant 16 : i32
    %252 = arith.muli %c6_i32, %c16_i32_95 : i32
    %253 = tpu.assume_multiple %252, 16 : i32
    %c0_96 = arith.constant 0 : index
    %c0_97 = arith.constant 0 : index
    %254 = vector.load %arg14[%c0_96, %c0_97] : memref<16x128xf32, #tpu.memory_space<vmem>>, vector<16x128xf32>
    %255 = arith.index_cast %253 : i32 to index
    %c0_98 = arith.constant 0 : index
    %256 = vector.load %arg12[%255, %c0_98] : memref<128x384xf32, #tpu.memory_space<vmem>>, vector<16x384xf32>
    %257 = arith.truncf %254 : vector<16x128xf32> to vector<16x128xbf16>
    %c0_99 = arith.constant 0 : index
    %c0_100 = arith.constant 0 : index
    %258 = vector.load %arg6[%c0_99, %c0_100] : memref<128x384xbf16, #tpu.memory_space<vmem>>, vector<128x384xbf16>
    %cst_101 = arith.constant dense<0.000000e+00> : vector<16x384xf32>
    %259 = tpu.matmul %257, %258, %cst_101 {dimension_numbers = #tpu.dot_dimension_numbers<[1], [0], [0], [1], [0, 0, 1, 1], [], []>} : vector<16x128xbf16>, vector<128x384xbf16>, vector<16x384xf32> -> vector<16x384xf32>
    %260 = arith.addf %259, %21 : vector<16x384xf32>
    %261 = vector.extract_strided_slice %256 {offsets = [0, 0], sizes = [16, 128], strides = [1, 1]} : vector<16x384xf32> to vector<16x128xf32>
    %262 = vector.extract_strided_slice %260 {offsets = [0, 0], sizes = [16, 128], strides = [1, 1]} : vector<16x384xf32> to vector<16x128xf32>
    %263 = arith.addf %261, %262 : vector<16x128xf32>
    %264 = arith.negf %263 : vector<16x128xf32>
    %265 = math.exp %264 : vector<16x128xf32>
    %cst_102 = arith.constant 1.000000e+00 : f32
    %266 = vector.broadcast %cst_102 : f32 to vector<16x128xf32>
    %267 = arith.addf %266, %265 : vector<16x128xf32>
    %268 = arith.divf %266, %267 : vector<16x128xf32>
    %269 = vector.extract_strided_slice %256 {offsets = [0, 128], sizes = [16, 128], strides = [1, 1]} : vector<16x384xf32> to vector<16x128xf32>
    %270 = vector.extract_strided_slice %260 {offsets = [0, 128], sizes = [16, 128], strides = [1, 1]} : vector<16x384xf32> to vector<16x128xf32>
    %271 = arith.addf %269, %270 : vector<16x128xf32>
    %272 = arith.negf %271 : vector<16x128xf32>
    %273 = math.exp %272 : vector<16x128xf32>
    %cst_103 = arith.constant 1.000000e+00 : f32
    %274 = vector.broadcast %cst_103 : f32 to vector<16x128xf32>
    %275 = arith.addf %274, %273 : vector<16x128xf32>
    %276 = arith.divf %274, %275 : vector<16x128xf32>
    %277 = vector.extract_strided_slice %256 {offsets = [0, 256], sizes = [16, 128], strides = [1, 1]} : vector<16x384xf32> to vector<16x128xf32>
    %278 = vector.extract_strided_slice %260 {offsets = [0, 256], sizes = [16, 128], strides = [1, 1]} : vector<16x384xf32> to vector<16x128xf32>
    %279 = arith.mulf %268, %278 : vector<16x128xf32>
    %280 = arith.addf %277, %279 : vector<16x128xf32>
    %281 = math.tanh %280 : vector<16x128xf32>
    %cst_104 = arith.constant 1.000000e+00 : f32
    %282 = vector.broadcast %cst_104 : f32 to vector<16x128xf32>
    %283 = arith.subf %282, %276 : vector<16x128xf32>
    %284 = arith.mulf %283, %281 : vector<16x128xf32>
    %285 = arith.mulf %276, %254 : vector<16x128xf32>
    %286 = arith.addf %284, %285 : vector<16x128xf32>
    %c0_105 = arith.constant 0 : index
    %c0_106 = arith.constant 0 : index
    %287 = vector.load %arg14[%c0_105, %c0_106] : memref<16x128xf32, #tpu.memory_space<vmem>>, vector<16x128xf32>
    tpu.vector_store %arg14[%c0_105, %c0_106], %286 {strides = array<i32>} : memref<16x128xf32, #tpu.memory_space<vmem>>, vector<16x128xf32>,
    %288 = arith.index_cast %253 : i32 to index
    %c0_107 = arith.constant 0 : index
    %289 = vector.load %arg13[%288, %c0_107] : memref<128x128xf32, #tpu.memory_space<vmem>>, vector<16x128xf32>
    tpu.vector_store %arg13[%288, %c0_107], %286 {strides = array<i32>} : memref<128x128xf32, #tpu.memory_space<vmem>>, vector<16x128xf32>,
    %c7_i32 = arith.constant 7 : i32
    %c16_i32_108 = arith.constant 16 : i32
    %290 = arith.muli %c7_i32, %c16_i32_108 : i32
    %291 = tpu.assume_multiple %290, 16 : i32
    %c0_109 = arith.constant 0 : index
    %c0_110 = arith.constant 0 : index
    %292 = vector.load %arg14[%c0_109, %c0_110] : memref<16x128xf32, #tpu.memory_space<vmem>>, vector<16x128xf32>
    %293 = arith.index_cast %291 : i32 to index
    %c0_111 = arith.constant 0 : index
    %294 = vector.load %arg12[%293, %c0_111] : memref<128x384xf32, #tpu.memory_space<vmem>>, vector<16x384xf32>
    %295 = arith.truncf %292 : vector<16x128xf32> to vector<16x128xbf16>
    %c0_112 = arith.constant 0 : index
    %c0_113 = arith.constant 0 : index
    %296 = vector.load %arg6[%c0_112, %c0_113] : memref<128x384xbf16, #tpu.memory_space<vmem>>, vector<128x384xbf16>
    %cst_114 = arith.constant dense<0.000000e+00> : vector<16x384xf32>
    %297 = tpu.matmul %295, %296, %cst_114 {dimension_numbers = #tpu.dot_dimension_numbers<[1], [0], [0], [1], [0, 0, 1, 1], [], []>} : vector<16x128xbf16>, vector<128x384xbf16>, vector<16x384xf32> -> vector<16x384xf32>
    %298 = arith.addf %297, %21 : vector<16x384xf32>
    %299 = vector.extract_strided_slice %294 {offsets = [0, 0], sizes = [16, 128], strides = [1, 1]} : vector<16x384xf32> to vector<16x128xf32>
    %300 = vector.extract_strided_slice %298 {offsets = [0, 0], sizes = [16, 128], strides = [1, 1]} : vector<16x384xf32> to vector<16x128xf32>
    %301 = arith.addf %299, %300 : vector<16x128xf32>
    %302 = arith.negf %301 : vector<16x128xf32>
    %303 = math.exp %302 : vector<16x128xf32>
    %cst_115 = arith.constant 1.000000e+00 : f32
    %304 = vector.broadcast %cst_115 : f32 to vector<16x128xf32>
    %305 = arith.addf %304, %303 : vector<16x128xf32>
    %306 = arith.divf %304, %305 : vector<16x128xf32>
    %307 = vector.extract_strided_slice %294 {offsets = [0, 128], sizes = [16, 128], strides = [1, 1]} : vector<16x384xf32> to vector<16x128xf32>
    %308 = vector.extract_strided_slice %298 {offsets = [0, 128], sizes = [16, 128], strides = [1, 1]} : vector<16x384xf32> to vector<16x128xf32>
    %309 = arith.addf %307, %308 : vector<16x128xf32>
    %310 = arith.negf %309 : vector<16x128xf32>
    %311 = math.exp %310 : vector<16x128xf32>
    %cst_116 = arith.constant 1.000000e+00 : f32
    %312 = vector.broadcast %cst_116 : f32 to vector<16x128xf32>
    %313 = arith.addf %312, %311 : vector<16x128xf32>
    %314 = arith.divf %312, %313 : vector<16x128xf32>
    %315 = vector.extract_strided_slice %294 {offsets = [0, 256], sizes = [16, 128], strides = [1, 1]} : vector<16x384xf32> to vector<16x128xf32>
    %316 = vector.extract_strided_slice %298 {offsets = [0, 256], sizes = [16, 128], strides = [1, 1]} : vector<16x384xf32> to vector<16x128xf32>
    %317 = arith.mulf %306, %316 : vector<16x128xf32>
    %318 = arith.addf %315, %317 : vector<16x128xf32>
    %319 = math.tanh %318 : vector<16x128xf32>
    %cst_117 = arith.constant 1.000000e+00 : f32
    %320 = vector.broadcast %cst_117 : f32 to vector<16x128xf32>
    %321 = arith.subf %320, %314 : vector<16x128xf32>
    %322 = arith.mulf %321, %319 : vector<16x128xf32>
    %323 = arith.mulf %314, %292 : vector<16x128xf32>
    %324 = arith.addf %322, %323 : vector<16x128xf32>
    %c0_118 = arith.constant 0 : index
    %c0_119 = arith.constant 0 : index
    %325 = vector.load %arg14[%c0_118, %c0_119] : memref<16x128xf32, #tpu.memory_space<vmem>>, vector<16x128xf32>
    tpu.vector_store %arg14[%c0_118, %c0_119], %324 {strides = array<i32>} : memref<16x128xf32, #tpu.memory_space<vmem>>, vector<16x128xf32>,
    %326 = arith.index_cast %291 : i32 to index
    %c0_120 = arith.constant 0 : index
    %327 = vector.load %arg13[%326, %c0_120] : memref<128x128xf32, #tpu.memory_space<vmem>>, vector<16x128xf32>
    tpu.vector_store %arg13[%326, %c0_120], %324 {strides = array<i32>} : memref<128x128xf32, #tpu.memory_space<vmem>>, vector<16x128xf32>,
    %c8_i32 = arith.constant 8 : i32
    %c0_121 = arith.constant 0 : index
    %c0_122 = arith.constant 0 : index
    %328 = vector.load %arg14[%c0_121, %c0_122] : memref<16x128xf32, #tpu.memory_space<vmem>>, vector<16x128xf32>
    %c0_123 = arith.constant 0 : index
    %c0_124 = arith.constant 0 : index
    %329 = vector.load %arg11[%c0_123, %c0_124] : memref<16x128xf32, #tpu.memory_space<vmem>>, vector<16x128xf32>
    tpu.vector_store %arg11[%c0_123, %c0_124], %328 {strides = array<i32>} : memref<16x128xf32, #tpu.memory_space<vmem>>, vector<16x128xf32>,
    %c0_125 = arith.constant 0 : index
    %c0_126 = arith.constant 0 : index
    %330 = vector.load %arg13[%c0_125, %c0_126] : memref<128x128xf32, #tpu.memory_space<vmem>>, vector<128x128xf32>
    %331 = arith.truncf %330 : vector<128x128xf32> to vector<128x128xbf16>
    %c0_127 = arith.constant 0 : index
    %c0_128 = arith.constant 0 : index
    %332 = vector.load %arg8[%c0_127, %c0_128] : memref<128x128xbf16, #tpu.memory_space<vmem>>, vector<128x128xbf16>
    %cst_129 = arith.constant dense<0.000000e+00> : vector<128x128xf32>
    %333 = tpu.matmul %331, %332, %cst_129 {dimension_numbers = #tpu.dot_dimension_numbers<[1], [0], [0], [1], [0, 0, 1, 1], [], []>} : vector<128x128xbf16>, vector<128x128xbf16>, vector<128x128xf32> -> vector<128x128xf32>
    %c0_130 = arith.constant 0 : index
    %c0_131 = arith.constant 0 : index
    %334 = vector.load %arg9[%c0_130, %c0_131] : memref<1x128xf32, #tpu.memory_space<vmem>>, vector<1x128xf32>
    %335 = vector.broadcast %334 : vector<1x128xf32> to vector<128x128xf32>
    %336 = arith.addf %333, %335 : vector<128x128xf32>
    %cst_132 = arith.constant dense<0xFF800000> : vector<128xf32>
    %337 = vector.multi_reduction <maximumf>, %336, %cst_132 [1] : vector<128x128xf32> to vector<128xf32>
    %338 = vector.shape_cast %337 : vector<128xf32> to vector<128x1xf32>
    %339 = vector.broadcast %338 : vector<128x1xf32> to vector<128x128xf32>
    %340 = arith.subf %336, %339 : vector<128x128xf32>
    %341 = math.exp %340 : vector<128x128xf32>
    %cst_133 = arith.constant dense<0.000000e+00> : vector<128xf32>
    %342 = vector.multi_reduction <add>, %341, %cst_133 [1] : vector<128x128xf32> to vector<128xf32>
    %343 = vector.shape_cast %342 : vector<128xf32> to vector<128x1xf32>
    %344 = math.log %343 : vector<128x1xf32>
    %345 = vector.broadcast %344 : vector<128x1xf32> to vector<128x128xf32>
    %346 = arith.subf %340, %345 : vector<128x128xf32>
    %c0_134 = arith.constant 0 : index
    %c0_135 = arith.constant 0 : index
    %c0_136 = arith.constant 0 : index
    %347 = vector.load %arg10[%c0_134, %c0_135, %c0_136] : memref<1x128x128xf32, #tpu.memory_space<vmem>>, vector<1x128x128xf32>
    %348 = vector.shape_cast %347 : vector<1x128x128xf32> to vector<128x128xf32>
    %349 = vector.shape_cast %346 : vector<128x128xf32> to vector<1x128x128xf32>
    tpu.vector_store %arg10[%c0_134, %c0_135, %c0_136], %349 {strides = array<i32>} : memref<1x128x128xf32, #tpu.memory_space<vmem>>, vector<1x128x128xf32>,
    return
  }
  func.func @transform_0(%arg0: i32) -> (i32, i32, i32) {
    %c0_i32 = arith.constant 0 : i32
    %c0_i32_0 = arith.constant 0 : i32
    %c0_i32_1 = arith.constant 0 : i32
    return %arg0, %c0_i32, %c0_i32_0 : i32, i32, i32
  }
  func.func @transform_1(%arg0: i32) -> (i32, i32) {
    %c0_i32 = arith.constant 0 : i32
    %c0_i32_0 = arith.constant 0 : i32
    return %arg0, %c0_i32 : i32, i32
  }
  func.func @transform_2(%arg0: i32) -> (i32, i32) {
    %c0_i32 = arith.constant 0 : i32
    %c0_i32_0 = arith.constant 0 : i32
    %c0_i32_1 = arith.constant 0 : i32
    return %c0_i32, %c0_i32_0 : i32, i32
  }
  func.func @transform_3(%arg0: i32) -> (i32, i32) {
    %c0_i32 = arith.constant 0 : i32
    %c0_i32_0 = arith.constant 0 : i32
    %c0_i32_1 = arith.constant 0 : i32
    return %c0_i32, %c0_i32_0 : i32, i32
  }
  func.func @transform_4(%arg0: i32) -> (i32, i32) {
    %c0_i32 = arith.constant 0 : i32
    %c0_i32_0 = arith.constant 0 : i32
    %c0_i32_1 = arith.constant 0 : i32
    return %c0_i32, %c0_i32_0 : i32, i32
  }
  func.func @transform_5(%arg0: i32) -> (i32, i32) {
    %c0_i32 = arith.constant 0 : i32
    %c0_i32_0 = arith.constant 0 : i32
    %c0_i32_1 = arith.constant 0 : i32
    return %c0_i32, %c0_i32_0 : i32, i32
  }
  func.func @transform_6(%arg0: i32) -> (i32, i32) {
    %c0_i32 = arith.constant 0 : i32
    %c0_i32_0 = arith.constant 0 : i32
    %c0_i32_1 = arith.constant 0 : i32
    return %c0_i32, %c0_i32_0 : i32, i32
  }
  func.func @transform_7(%arg0: i32) -> (i32, i32) {
    %c0_i32 = arith.constant 0 : i32
    %c0_i32_0 = arith.constant 0 : i32
    %c0_i32_1 = arith.constant 0 : i32
    return %c0_i32, %c0_i32_0 : i32, i32
  }
  func.func @transform_8(%arg0: i32) -> (i32, i32) {
    %c0_i32 = arith.constant 0 : i32
    %c0_i32_0 = arith.constant 0 : i32
    %c0_i32_1 = arith.constant 0 : i32
    return %c0_i32, %c0_i32_0 : i32, i32
  }
  func.func @transform_9(%arg0: i32) -> (i32, i32, i32) {
    %c0_i32 = arith.constant 0 : i32
    %c0_i32_0 = arith.constant 0 : i32
    %c0_i32_1 = arith.constant 0 : i32
    return %arg0, %c0_i32, %c0_i32_0 : i32, i32, i32
  }
  func.func @transform_10(%arg0: i32) -> (i32, i32) {
    %c0_i32 = arith.constant 0 : i32
    %c0_i32_0 = arith.constant 0 : i32
    return %arg0, %c0_i32 : i32, i32
  }
}

</mosaic_0001>

<llo_original>
// kernel: decoder_rnn_sequence.1
$region0: #{decoder_rnn_sequence.1}
  #allocation0 [shape = 'u32[]', space=smem, size = 0x4, offset = 0x4, fixed_abs, tag = 'smem constant byte address 0x4 - core index']
  #allocation1 [shape = 'u32[72,128]{1,0:T(1,128)}', space=vmem, size = 0x9000, scoped, tag = 'internal scratch']
  #allocation2 [shape = 'f32[128,384]{1,0:T(8,128)}', space=vmem, size = 0x30000, scoped, tag = 'scratch operand']
  #allocation3 [shape = 'f32[128,128]{1,0:T(8,128)}', space=vmem, size = 0x10000, scoped, tag = 'scratch operand']
  #allocation4 [shape = 'f32[16,128]{1,0:T(8,128)}', space=vmem, size = 0x2000, scoped, tag = 'scratch operand']
  %s0 = inlined_call_operand.vmem [shape: s32[1,128,1], index: 0, kind: input, shape index: {}]
  %s1 = inlined_call_operand.vmem [shape: f32[16,128], index: 1, kind: input, shape index: {}]
  %s2 = inlined_call_operand.vmem [shape: bf16[128,128], index: 2, kind: input, shape index: {}]
  %s3 = inlined_call_operand.hbm [shape: bf16[128,384], index: 3, kind: input, shape index: {}]
  %s4 = inlined_call_operand.vmem [shape: f32[1,384], index: 4, kind: input, shape index: {}]
  %s5 = inlined_call_operand.hbm [shape: bf16[128,384], index: 5, kind: input, shape index: {}]
  %s6 = inlined_call_operand.vmem [shape: f32[1,384], index: 6, kind: input, shape index: {}]
  %s7 = inlined_call_operand.vmem [shape: bf16[128,128], index: 7, kind: input, shape index: {}]
  %s8 = inlined_call_operand.vmem [shape: f32[1,128], index: 8, kind: input, shape index: {}]
  %s9 = inlined_call_operand.hbm [shape: f32[1,128,128], index: 9, kind: output, shape index: {0}]
  %s10 = inlined_call_operand.vmem [shape: f32[16,128], index: 10, kind: output, shape index: {1}]
  %11 = xla_tuple %s9, %s10
  %s12 = sld [smem:[#allocation0]]
  $region62: #{decoder_rnn_sequence.1} parent=0
    _
  %s14 = ssub.s32 1, %s12
  %s15 = scalar_select 0, %s14, %s12
  $region1: #{decoder_rnn_sequence.1} parent=0
    #allocation5 [shape = 'u8[98304]{0}', space=vmem, size = 0x18000, scoped, tag = 'input window, operand 3, single buffered']
    #allocation6 [shape = 's32[1]{0}', space=sflag, size = 0x4, scoped, tag = 'scoped memory for decoder_rnn_sequence.1']
    #allocation7 [shape = 's32[1]{0}', space=sflag, size = 0x4, scoped, tag = 'scoped memory for decoder_rnn_sequence.1']
    #allocation8 [shape = 'u8[98304]{0}', space=vmem, size = 0x18000, scoped, tag = 'input window, operand 5, single buffered']
    #allocation9 [shape = 's32[1]{0}', space=sflag, size = 0x4, scoped, tag = 'scoped memory for decoder_rnn_sequence.1']
    #allocation10 [shape = 'u8[65536]{0}', space=vmem, size = 0x10000, scoped, tag = 'output window, operand 0, single buffered']
    %16 = vsyncpa [#allocation6], 0
    %17 = vsyncpa [#allocation9], 0
    %18 = vsyncpa [#allocation7], 0
    // Predicated region
    $region2: #{decoder_rnn_sequence.1} parent=1 // pred_check
      _
    $region3: #{decoder_rnn_sequence.1} parent=1 // pred_check_branch
      %20 = sbr.rel (0) target = $region5
    $region4: #{decoder_rnn_sequence.1} parent=1 // pred_region
      _
    $region5: #{decoder_rnn_sequence.1} parent=1 // pred_fallthru
      _
    // Predicated region
    $region6: #{decoder_rnn_sequence.1} parent=1 // pred_check
      _
    $region7: #{decoder_rnn_sequence.1} parent=1 // pred_check_branch
      %22 = sbr.rel (0) target = $region9
    $region8: #{decoder_rnn_sequence.1} parent=1 // pred_region
      _
    $region9: #{decoder_rnn_sequence.1} parent=1 // pred_fallthru
      _
    // Predicated region
    $region10: #{decoder_rnn_sequence.1} parent=1 // pred_check
      _
    $region11: #{decoder_rnn_sequence.1} parent=1 // pred_check_branch
      %24 = sbr.rel (0) target = $region13
    $region12: #{decoder_rnn_sequence.1} parent=1 // pred_region
      _
    $region13: #{decoder_rnn_sequence.1} parent=1 // pred_fallthru
      _
    // Predicated region
    $region14: #{decoder_rnn_sequence.1} parent=1 // pred_check
      _
    $region15: #{decoder_rnn_sequence.1} parent=1 // pred_check_branch
      %26 = sbr.rel (0) target = $region17
    $region16: #{decoder_rnn_sequence.1} parent=1 // pred_region
      %28 = vsyncadd [#allocation6], 0
      %s29 = sshll.u32 %s3, 4
      %s30 = int_to_ptr.hbm [resolvable:$true] %s29
      %s31 = sshll.u32 [#allocation5], 4
      %s32 = int_to_ptr.vmem [resolvable:$true] %s31
      %37 = dma.hbm_to_vmem [thread:$0]  %s30, 3072, %s32, [#allocation6], 192, 192, 12
    $region17: #{decoder_rnn_sequence.1} parent=1 // pred_fallthru
      _
    // Predicated region
    $region18: #{decoder_rnn_sequence.1} parent=1 // pred_check
      _
    $region19: #{decoder_rnn_sequence.1} parent=1 // pred_check_branch
      %39 = sbr.rel (0) target = $region21
    $region20: #{decoder_rnn_sequence.1} parent=1 // pred_region
      _
    $region21: #{decoder_rnn_sequence.1} parent=1 // pred_fallthru
      _
    // Predicated region
    $region22: #{decoder_rnn_sequence.1} parent=1 // pred_check
      _
    $region23: #{decoder_rnn_sequence.1} parent=1 // pred_check_branch
      %41 = sbr.rel (0) target = $region25
    $region24: #{decoder_rnn_sequence.1} parent=1 // pred_region
      %43 = vsyncadd [#allocation9], 0
      %s44 = sshll.u32 %s5, 4
      %s45 = int_to_ptr.hbm [resolvable:$true] %s44
      %s46 = sshll.u32 [#allocation8], 4
      %s47 = int_to_ptr.vmem [resolvable:$true] %s46
      %52 = dma.hbm_to_vmem [thread:$0]  %s45, 3072, %s47, [#allocation9], 192, 192, 12
    $region25: #{decoder_rnn_sequence.1} parent=1 // pred_fallthru
      _
    // Predicated region
    $region26: #{decoder_rnn_sequence.1} parent=1 // pred_check
      _
    $region27: #{decoder_rnn_sequence.1} parent=1 // pred_check_branch
      %54 = sbr.rel (0) target = $region29
    $region28: #{decoder_rnn_sequence.1} parent=1 // pred_region
      _
    $region29: #{decoder_rnn_sequence.1} parent=1 // pred_fallthru
      _
    // Predicated region
    $region30: #{decoder_rnn_sequence.1} parent=1 // pred_check
      _
    $region31: #{decoder_rnn_sequence.1} parent=1 // pred_check_branch
      %56 = sbr.rel (0) target = $region33
    $region32: #{decoder_rnn_sequence.1} parent=1 // pred_region
      _
    $region33: #{decoder_rnn_sequence.1} parent=1 // pred_fallthru
      _
    // Predicated region
    $region34: #{decoder_rnn_sequence.1} parent=1 // pred_check
      _
    $region35: #{decoder_rnn_sequence.1} parent=1 // pred_check_branch
      %58 = sbr.rel (0) target = $region37
    $region36: #{decoder_rnn_sequence.1} parent=1 // pred_region
      _
    $region37: #{decoder_rnn_sequence.1} parent=1 // pred_fallthru
      _
    // Predicated region
    $region38: #{decoder_rnn_sequence.1} parent=1 // pred_check
      _
    $region39: #{decoder_rnn_sequence.1} parent=1 // pred_check_branch
      %60 = sbr.rel (0) target = $region41
    $region40: #{decoder_rnn_sequence.1} parent=1 // pred_region
      %62 = dma.done [#allocation6], 3072
    $region41: #{decoder_rnn_sequence.1} parent=1 // pred_fallthru
      _
    // Predicated region
    $region42: #{decoder_rnn_sequence.1} parent=1 // pred_check
      _
    $region43: #{decoder_rnn_sequence.1} parent=1 // pred_check_branch
      %64 = sbr.rel (0) target = $region45
    $region44: #{decoder_rnn_sequence.1} parent=1 // pred_region
      %66 = dma.done [#allocation9], 3072
    $region45: #{decoder_rnn_sequence.1} parent=1 // pred_fallthru
      _
    %v67 = vld [vmem:[%s0] sm:$0xff]
    %v68 = vld [vmem:[%s0 + $0x8] sm:$0xff]
    %v69 = vld [vmem:[%s0 + $0x10] sm:$0xff]
    %v70 = vld [vmem:[%s0 + $0x18] sm:$0xff]
    %v71 = vld [vmem:[%s0 + $0x20] sm:$0xff]
    %v72 = vld [vmem:[%s0 + $0x28] sm:$0xff]
    %v73 = vld [vmem:[%s0 + $0x30] sm:$0xff]
    %v74 = vld [vmem:[%s0 + $0x38] sm:$0xff]
    %v75 = vld [vmem:[%s0 + $0x40] sm:$0xff]
    %v76 = vld [vmem:[%s0 + $0x48] sm:$0xff]
    %v77 = vld [vmem:[%s0 + $0x50] sm:$0xff]
    %v78 = vld [vmem:[%s0 + $0x58] sm:$0xff]
    %v79 = vld [vmem:[%s0 + $0x60] sm:$0xff]
    %v80 = vld [vmem:[%s0 + $0x68] sm:$0xff]
    %v81 = vld [vmem:[%s0 + $0x70] sm:$0xff]
    %v82 = vld [vmem:[%s0 + $0x78] sm:$0xff]
    %v83 = vlaneseq
    %v84 = vand.u32 %v83, 127
    %85 = vset.pattern.permute.xlu0 0
    %86 = vperm.xlu0 %85, %v67
    %v87 = vpop.permute.xlu0 %86
    %88 = vset.pattern.permute.xlu0 0
    %89 = vperm.xlu0 %88, %v68
    %v90 = vpop.permute.xlu0 %89
    %91 = vset.pattern.permute.xlu0 0
    %92 = vperm.xlu0 %91, %v69
    %v93 = vpop.permute.xlu0 %92
    %94 = vset.pattern.permute.xlu0 0
    %95 = vperm.xlu0 %94, %v70
    %v96 = vpop.permute.xlu0 %95
    %97 = vset.pattern.permute.xlu0 0
    %98 = vperm.xlu0 %97, %v71
    %v99 = vpop.permute.xlu0 %98
    %100 = vset.pattern.permute.xlu0 0
    %101 = vperm.xlu0 %100, %v72
    %v102 = vpop.permute.xlu0 %101
    %103 = vset.pattern.permute.xlu0 0
    %104 = vperm.xlu0 %103, %v73
    %v105 = vpop.permute.xlu0 %104
    %106 = vset.pattern.permute.xlu0 0
    %107 = vperm.xlu0 %106, %v74
    %v108 = vpop.permute.xlu0 %107
    %109 = vset.pattern.permute.xlu0 0
    %110 = vperm.xlu0 %109, %v75
    %v111 = vpop.permute.xlu0 %110
    %112 = vset.pattern.permute.xlu0 0
    %113 = vperm.xlu0 %112, %v76
    %v114 = vpop.permute.xlu0 %113
    %115 = vset.pattern.permute.xlu0 0
    %116 = vperm.xlu0 %115, %v77
    %v117 = vpop.permute.xlu0 %116
    %118 = vset.pattern.permute.xlu0 0
    %119 = vperm.xlu0 %118, %v78
    %v120 = vpop.permute.xlu0 %119
    %121 = vset.pattern.permute.xlu0 0
    %122 = vperm.xlu0 %121, %v79
    %v123 = vpop.permute.xlu0 %122
    %124 = vset.pattern.permute.xlu0 0
    %125 = vperm.xlu0 %124, %v80
    %v126 = vpop.permute.xlu0 %125
    %127 = vset.pattern.permute.xlu0 0
    %128 = vperm.xlu0 %127, %v81
    %v129 = vpop.permute.xlu0 %128
    %130 = vset.pattern.permute.xlu0 0
    %131 = vperm.xlu0 %130, %v82
    %v132 = vpop.permute.xlu0 %131
    %vm133 = vcmp.eq.s32.totalorder %v84, %v87
    %vm134 = vcmp.eq.s32.totalorder %v84, %v90
    %vm135 = vcmp.eq.s32.totalorder %v84, %v93
    %vm136 = vcmp.eq.s32.totalorder %v84, %v96
    %vm137 = vcmp.eq.s32.totalorder %v84, %v99
    %vm138 = vcmp.eq.s32.totalorder %v84, %v102
    %vm139 = vcmp.eq.s32.totalorder %v84, %v105
    %vm140 = vcmp.eq.s32.totalorder %v84, %v108
    %vm141 = vcmp.eq.s32.totalorder %v84, %v111
    %vm142 = vcmp.eq.s32.totalorder %v84, %v114
    %vm143 = vcmp.eq.s32.totalorder %v84, %v117
    %vm144 = vcmp.eq.s32.totalorder %v84, %v120
    %vm145 = vcmp.eq.s32.totalorder %v84, %v123
    %vm146 = vcmp.eq.s32.totalorder %v84, %v126
    %vm147 = vcmp.eq.s32.totalorder %v84, %v129
    %vm148 = vcmp.eq.s32.totalorder %v84, %v132
    %v149 = vsel %vm133, 1, 0
    %v150 = vsel %vm134, 1, 0
    %v151 = vsel %vm135, 1, 0
    %v152 = vsel %vm136, 1, 0
    %v153 = vsel %vm137, 1, 0
    %v154 = vsel %vm138, 1, 0
    %v155 = vsel %vm139, 1, 0
    %v156 = vsel %vm140, 1, 0
    %v157 = vsel %vm141, 1, 0
    %v158 = vsel %vm142, 1, 0
    %v159 = vsel %vm143, 1, 0
    %v160 = vsel %vm144, 1, 0
    %v161 = vsel %vm145, 1, 0
    %v162 = vsel %vm146, 1, 0
    %v163 = vsel %vm147, 1, 0
    %v164 = vsel %vm148, 1, 0
    %v165 = vcvt.s32.f32 %v149
    %v166 = vcvt.s32.f32 %v150
    %v167 = vcvt.s32.f32 %v151
    %v168 = vcvt.s32.f32 %v152
    %v169 = vcvt.s32.f32 %v153
    %v170 = vcvt.s32.f32 %v154
    %v171 = vcvt.s32.f32 %v155
    %v172 = vcvt.s32.f32 %v156
    %v173 = vcvt.s32.f32 %v157
    %v174 = vcvt.s32.f32 %v158
    %v175 = vcvt.s32.f32 %v159
    %v176 = vcvt.s32.f32 %v160
    %v177 = vcvt.s32.f32 %v161
    %v178 = vcvt.s32.f32 %v162
    %v179 = vcvt.s32.f32 %v163
    %v180 = vcvt.s32.f32 %v164
    %v181 = vpack.c.bf16 %v166, %v165
    %v182 = vpack.c.bf16 %v168, %v167
    %v183 = vpack.c.bf16 %v170, %v169
    %v184 = vpack.c.bf16 %v172, %v171
    %v185 = vpack.c.bf16 %v174, %v173
    %v186 = vpack.c.bf16 %v176, %v175
    %v187 = vpack.c.bf16 %v178, %v177
    %v188 = vpack.c.bf16 %v180, %v179
    %v189 = vld [vmem:[%s2] sm:$0xf]
    %v190 = vld [vmem:[%s2 + $0x4] sm:$0xf]
    %v191 = vld [vmem:[%s2 + $0x8] sm:$0xf]
    %v192 = vld [vmem:[%s2 + $0xc] sm:$0xf]
    %v193 = vld [vmem:[%s2 + $0x10] sm:$0xf]
    %v194 = vld [vmem:[%s2 + $0x14] sm:$0xf]
    %v195 = vld [vmem:[%s2 + $0x18] sm:$0xf]
    %v196 = vld [vmem:[%s2 + $0x1c] sm:$0xf]
    %v197 = vld [vmem:[%s2 + $0x20] sm:$0xf]
    %v198 = vld [vmem:[%s2 + $0x24] sm:$0xf]
    %v199 = vld [vmem:[%s2 + $0x28] sm:$0xf]
    %v200 = vld [vmem:[%s2 + $0x2c] sm:$0xf]
    %v201 = vld [vmem:[%s2 + $0x30] sm:$0xf]
    %v202 = vld [vmem:[%s2 + $0x34] sm:$0xf]
    %v203 = vld [vmem:[%s2 + $0x38] sm:$0xf]
    %v204 = vld [vmem:[%s2 + $0x3c] sm:$0xf]
    %v221 = vunpack.c.l.b16 %v189
    %v222 = vunpack.c.l.b16 %v190
    %v223 = vunpack.c.l.b16 %v191
    %v224 = vunpack.c.l.b16 %v192
    %v225 = vunpack.c.l.b16 %v193
    %v226 = vunpack.c.l.b16 %v194
    %v227 = vunpack.c.l.b16 %v195
    %v228 = vunpack.c.l.b16 %v196
    %v229 = vunpack.c.l.b16 %v197
    %v230 = vunpack.c.l.b16 %v198
    %v231 = vunpack.c.l.b16 %v199
    %v232 = vunpack.c.l.b16 %v200
    %v233 = vunpack.c.l.b16 %v201
    %v234 = vunpack.c.l.b16 %v202
    %v235 = vunpack.c.l.b16 %v203
    %v236 = vunpack.c.l.b16 %v204
    %v237 = vpack.c.b16 %v222, %v221
    %v238 = vpack.c.b16 %v224, %v223
    %v239 = vpack.c.b16 %v226, %v225
    %v240 = vpack.c.b16 %v228, %v227
    %v241 = vpack.c.b16 %v230, %v229
    %v242 = vpack.c.b16 %v232, %v231
    %v243 = vpack.c.b16 %v234, %v233
    %v244 = vpack.c.b16 %v236, %v235
    %253 = vmatpush.bf16.msra.mxu0 %v244
    %254 = vmatpush.bf16.msra.mxu0 %v243
    %255 = vmatpush.bf16.msra.mxu0 %v242
    %256 = vmatpush.bf16.msra.mxu0 %v241
    %257 = vmatpush.bf16.msra.mxu0 %v240
    %258 = vmatpush.bf16.msra.mxu0 %v239
    %259 = vmatpush.bf16.msra.mxu0 %v238
    %260 = vmatpush.bf16.msra.mxu0 %v237
    %261 = vmatmul.bf16.gmra.mxu0 %v181
    %v262 = vpop.f32.mrf.mxu0
    %v263 = vadd.f32 0.0, %v262
    %v264 = vpop.f32.mrf.mxu0
    %v265 = vadd.f32 0.0, %v264
    %266 = vmatmul.bf16.gmra.mxu0 %v182
    %v267 = vpop.f32.mrf.mxu0
    %v268 = vadd.f32 0.0, %v267
    %v269 = vpop.f32.mrf.mxu0
    %v270 = vadd.f32 0.0, %v269
    %271 = vmatmul.bf16.gmra.mxu0 %v183
    %v272 = vpop.f32.mrf.mxu0
    %v273 = vadd.f32 0.0, %v272
    %v274 = vpop.f32.mrf.mxu0
    %v275 = vadd.f32 0.0, %v274
    %276 = vmatmul.bf16.gmra.mxu0 %v184
    %v277 = vpop.f32.mrf.mxu0
    %v278 = vadd.f32 0.0, %v277
    %v279 = vpop.f32.mrf.mxu0
    %v280 = vadd.f32 0.0, %v279
    %281 = vmatmul.bf16.gmra.mxu0 %v185
    %v282 = vpop.f32.mrf.mxu0
    %v283 = vadd.f32 0.0, %v282
    %v284 = vpop.f32.mrf.mxu0
    %v285 = vadd.f32 0.0, %v284
    %286 = vmatmul.bf16.gmra.mxu0 %v186
    %v287 = vpop.f32.mrf.mxu0
    %v288 = vadd.f32 0.0, %v287
    %v289 = vpop.f32.mrf.mxu0
    %v290 = vadd.f32 0.0, %v289
    %291 = vmatmul.bf16.gmra.mxu0 %v187
    %v292 = vpop.f32.mrf.mxu0
    %v293 = vadd.f32 0.0, %v292
    %v294 = vpop.f32.mrf.mxu0
    %v295 = vadd.f32 0.0, %v294
    %296 = vmatmul.bf16.gmra.mxu0 %v188
    %v297 = vpop.f32.mrf.mxu0
    %v298 = vadd.f32 0.0, %v297
    %v299 = vpop.f32.mrf.mxu0
    %v300 = vadd.f32 0.0, %v299
    %301 = vdwg.mxu0
    %v302 = vmax.f32 %v263, 0.0
    %v303 = vmax.f32 %v265, 0.0
    %v304 = vmax.f32 %v268, 0.0
    %v305 = vmax.f32 %v270, 0.0
    %v306 = vmax.f32 %v273, 0.0
    %v307 = vmax.f32 %v275, 0.0
    %v308 = vmax.f32 %v278, 0.0
    %v309 = vmax.f32 %v280, 0.0
    %v310 = vmax.f32 %v283, 0.0
    %v311 = vmax.f32 %v285, 0.0
    %v312 = vmax.f32 %v288, 0.0
    %v313 = vmax.f32 %v290, 0.0
    %v314 = vmax.f32 %v293, 0.0
    %v315 = vmax.f32 %v295, 0.0
    %v316 = vmax.f32 %v298, 0.0
    %v317 = vmax.f32 %v300, 0.0
    %v318 = vpack.c.bf16 %v303, %v302
    %v319 = vpack.c.bf16 %v305, %v304
    %v320 = vpack.c.bf16 %v307, %v306
    %v321 = vpack.c.bf16 %v309, %v308
    %v322 = vpack.c.bf16 %v311, %v310
    %v323 = vpack.c.bf16 %v313, %v312
    %v324 = vpack.c.bf16 %v315, %v314
    %v325 = vpack.c.bf16 %v317, %v316
    %v326 = vld [vmem:[#allocation5] sm:$0xff]
    %v327 = vld [vmem:[#allocation5 + $0x8] sm:$0xf]
    %v328 = vld [vmem:[#allocation5 + $0xc] sm:$0xff]
    %v329 = vld [vmem:[#allocation5 + $0x14] sm:$0xf]
    %v330 = vld [vmem:[#allocation5 + $0x18] sm:$0xff]
    %v331 = vld [vmem:[#allocation5 + $0x20] sm:$0xf]
    %v332 = vld [vmem:[#allocation5 + $0x24] sm:$0xff]
    %v333 = vld [vmem:[#allocation5 + $0x2c] sm:$0xf]
    %v334 = vld [vmem:[#allocation5 + $0x30] sm:$0xff]
    %v335 = vld [vmem:[#allocation5 + $0x38] sm:$0xf]
    %v336 = vld [vmem:[#allocation5 + $0x3c] sm:$0xff]
    %v337 = vld [vmem:[#allocation5 + $0x44] sm:$0xf]
    %v338 = vld [vmem:[#allocation5 + $0x48] sm:$0xff]
    %v339 = vld [vmem:[#allocation5 + $0x50] sm:$0xf]
    %v340 = vld [vmem:[#allocation5 + $0x54] sm:$0xff]
    %v341 = vld [vmem:[#allocation5 + $0x5c] sm:$0xf]
    %v342 = vld [vmem:[#allocation5 + $0x60] sm:$0xff]
    %v343 = vld [vmem:[#allocation5 + $0x68] sm:$0xf]
    %v344 = vld [vmem:[#allocation5 + $0x6c] sm:$0xff]
    %v345 = vld [vmem:[#allocation5 + $0x74] sm:$0xf]
    %v346 = vld [vmem:[#allocation5 + $0x78] sm:$0xff]
    %v347 = vld [vmem:[#allocation5 + $0x80] sm:$0xf]
    %v348 = vld [vmem:[#allocation5 + $0x84] sm:$0xff]
    %v349 = vld [vmem:[#allocation5 + $0x8c] sm:$0xf]
    %v350 = vld [vmem:[#allocation5 + $0x90] sm:$0xff]
    %v351 = vld [vmem:[#allocation5 + $0x98] sm:$0xf]
    %v352 = vld [vmem:[#allocation5 + $0x9c] sm:$0xff]
    %v353 = vld [vmem:[#allocation5 + $0xa4] sm:$0xf]
    %v354 = vld [vmem:[#allocation5 + $0xa8] sm:$0xff]
    %v355 = vld [vmem:[#allocation5 + $0xb0] sm:$0xf]
    %v356 = vld [vmem:[#allocation5 + $0xb4] sm:$0xff]
    %v357 = vld [vmem:[#allocation5 + $0xbc] sm:$0xf]
    %v358 = vld [vmem:[%s4] sm:$0x7]
    %v360 = vperm.slane %v358, 0
    %v361 = vperm.slane %v358, 1
    %v362 = vperm.slane %v358, 2
    %v398 = vunpack.c.l.b16 %v326
    %v399 = vunpack.c.h.b16 %v326
    %v400 = vunpack.c.l.b16 %v327
    %v401 = vunpack.c.l.b16 %v328
    %v402 = vunpack.c.h.b16 %v328
    %v403 = vunpack.c.l.b16 %v329
    %v404 = vunpack.c.l.b16 %v330
    %v405 = vunpack.c.h.b16 %v330
    %v406 = vunpack.c.l.b16 %v331
    %v407 = vunpack.c.l.b16 %v332
    %v408 = vunpack.c.h.b16 %v332
    %v409 = vunpack.c.l.b16 %v333
    %v410 = vunpack.c.l.b16 %v334
    %v411 = vunpack.c.h.b16 %v334
    %v412 = vunpack.c.l.b16 %v335
    %v413 = vunpack.c.l.b16 %v336
    %v414 = vunpack.c.h.b16 %v336
    %v415 = vunpack.c.l.b16 %v337
    %v416 = vunpack.c.l.b16 %v338
    %v417 = vunpack.c.h.b16 %v338
    %v418 = vunpack.c.l.b16 %v339
    %v419 = vunpack.c.l.b16 %v340
    %v420 = vunpack.c.h.b16 %v340
    %v421 = vunpack.c.l.b16 %v341
    %v422 = vunpack.c.l.b16 %v342
    %v423 = vunpack.c.h.b16 %v342
    %v424 = vunpack.c.l.b16 %v343
    %v425 = vunpack.c.l.b16 %v344
    %v426 = vunpack.c.h.b16 %v344
    %v427 = vunpack.c.l.b16 %v345
    %v428 = vunpack.c.l.b16 %v346
    %v429 = vunpack.c.h.b16 %v346
    %v430 = vunpack.c.l.b16 %v347
    %v431 = vunpack.c.l.b16 %v348
    %v432 = vunpack.c.h.b16 %v348
    %v433 = vunpack.c.l.b16 %v349
    %v434 = vunpack.c.l.b16 %v350
    %v435 = vunpack.c.h.b16 %v350
    %v436 = vunpack.c.l.b16 %v351
    %v437 = vunpack.c.l.b16 %v352
    %v438 = vunpack.c.h.b16 %v352
    %v439 = vunpack.c.l.b16 %v353
    %v440 = vunpack.c.l.b16 %v354
    %v441 = vunpack.c.h.b16 %v354
    %v442 = vunpack.c.l.b16 %v355
    %v443 = vunpack.c.l.b16 %v356
    %v444 = vunpack.c.h.b16 %v356
    %v445 = vunpack.c.l.b16 %v357
    %v446 = vpack.c.b16 %v401, %v398
    %v447 = vpack.c.b16 %v402, %v399
    %v448 = vpack.c.b16 %v403, %v400
    %v449 = vpack.c.b16 %v407, %v404
    %v450 = vpack.c.b16 %v408, %v405
    %v451 = vpack.c.b16 %v409, %v406
    %v452 = vpack.c.b16 %v413, %v410
    %v453 = vpack.c.b16 %v414, %v411
    %v454 = vpack.c.b16 %v415, %v412
    %v455 = vpack.c.b16 %v419, %v416
    %v456 = vpack.c.b16 %v420, %v417
    %v457 = vpack.c.b16 %v421, %v418
    %v458 = vpack.c.b16 %v425, %v422
    %v459 = vpack.c.b16 %v426, %v423
    %v460 = vpack.c.b16 %v427, %v424
    %v461 = vpack.c.b16 %v431, %v428
    %v462 = vpack.c.b16 %v432, %v429
    %v463 = vpack.c.b16 %v433, %v430
    %v464 = vpack.c.b16 %v437, %v434
    %v465 = vpack.c.b16 %v438, %v435
    %v466 = vpack.c.b16 %v439, %v436
    %v467 = vpack.c.b16 %v443, %v440
    %v468 = vpack.c.b16 %v444, %v441
    %v469 = vpack.c.b16 %v445, %v442
    %494 = vmatpush.bf16.msra.mxu0 %v467
    %495 = vmatpush.bf16.msra.mxu0 %v464
    %496 = vmatpush.bf16.msra.mxu0 %v461
    %497 = vmatpush.bf16.msra.mxu0 %v458
    %498 = vmatpush.bf16.msra.mxu0 %v455
    %499 = vmatpush.bf16.msra.mxu0 %v452
    %500 = vmatpush.bf16.msra.mxu0 %v449
    %501 = vmatpush.bf16.msra.mxu0 %v446
    %502 = vmatmul.bf16.gmra.mxu0 %v318
    %v503 = vpop.f32.mrf.mxu0
    %v504 = vadd.f32 %v360, %v503
    %v505 = vpop.f32.mrf.mxu0
    %v506 = vadd.f32 %v360, %v505
    %507 = vmatmul.bf16.gmra.mxu0 %v319
    %v508 = vpop.f32.mrf.mxu0
    %v509 = vadd.f32 %v360, %v508
    %v510 = vpop.f32.mrf.mxu0
    %v511 = vadd.f32 %v360, %v510
    %512 = vmatmul.bf16.gmra.mxu0 %v320
    %v513 = vpop.f32.mrf.mxu0
    %v514 = vadd.f32 %v360, %v513
    %v515 = vpop.f32.mrf.mxu0
    %v516 = vadd.f32 %v360, %v515
    %517 = vmatmul.bf16.gmra.mxu0 %v321
    %v518 = vpop.f32.mrf.mxu0
    %v519 = vadd.f32 %v360, %v518
    %v520 = vpop.f32.mrf.mxu0
    %v521 = vadd.f32 %v360, %v520
    %522 = vmatmul.bf16.gmra.mxu0 %v322
    %v523 = vpop.f32.mrf.mxu0
    %v524 = vadd.f32 %v360, %v523
    %v525 = vpop.f32.mrf.mxu0
    %v526 = vadd.f32 %v360, %v525
    %527 = vmatmul.bf16.gmra.mxu0 %v323
    %v528 = vpop.f32.mrf.mxu0
    %v529 = vadd.f32 %v360, %v528
    %v530 = vpop.f32.mrf.mxu0
    %v531 = vadd.f32 %v360, %v530
    %532 = vmatmul.bf16.gmra.mxu0 %v324
    %v533 = vpop.f32.mrf.mxu0
    %v534 = vadd.f32 %v360, %v533
    %v535 = vpop.f32.mrf.mxu0
    %v536 = vadd.f32 %v360, %v535
    %537 = vmatmul.bf16.gmra.mxu0 %v325
    %v538 = vpop.f32.mrf.mxu0
    %v539 = vadd.f32 %v360, %v538
    %v540 = vpop.f32.mrf.mxu0
    %v541 = vadd.f32 %v360, %v540
    %542 = vdwg.mxu0
    %543 = vmatpush.bf16.msra.mxu0 %v468
    %544 = vmatpush.bf16.msra.mxu0 %v465
    %545 = vmatpush.bf16.msra.mxu0 %v462
    %546 = vmatpush.bf16.msra.mxu0 %v459
    %547 = vmatpush.bf16.msra.mxu0 %v456
    %548 = vmatpush.bf16.msra.mxu0 %v453
    %549 = vmatpush.bf16.msra.mxu0 %v450
    %550 = vmatpush.bf16.msra.mxu0 %v447
    %551 = vmatmul.bf16.gmra.mxu0 %v318
    %v552 = vpop.f32.mrf.mxu0
    %v553 = vadd.f32 %v361, %v552
    %v554 = vpop.f32.mrf.mxu0
    %v555 = vadd.f32 %v361, %v554
    %556 = vmatmul.bf16.gmra.mxu0 %v319
    %v557 = vpop.f32.mrf.mxu0
    %v558 = vadd.f32 %v361, %v557
    %v559 = vpop.f32.mrf.mxu0
    %v560 = vadd.f32 %v361, %v559
    %561 = vmatmul.bf16.gmra.mxu0 %v320
    %v562 = vpop.f32.mrf.mxu0
    %v563 = vadd.f32 %v361, %v562
    %v564 = vpop.f32.mrf.mxu0
    %v565 = vadd.f32 %v361, %v564
    %566 = vmatmul.bf16.gmra.mxu0 %v321
    %v567 = vpop.f32.mrf.mxu0
    %v568 = vadd.f32 %v361, %v567
    %v569 = vpop.f32.mrf.mxu0
    %v570 = vadd.f32 %v361, %v569
    %571 = vmatmul.bf16.gmra.mxu0 %v322
    %v572 = vpop.f32.mrf.mxu0
    %v573 = vadd.f32 %v361, %v572
    %v574 = vpop.f32.mrf.mxu0
    %v575 = vadd.f32 %v361, %v574
    %576 = vmatmul.bf16.gmra.mxu0 %v323
    %v577 = vpop.f32.mrf.mxu0
    %v578 = vadd.f32 %v361, %v577
    %v579 = vpop.f32.mrf.mxu0
    %v580 = vadd.f32 %v361, %v579
    %581 = vmatmul.bf16.gmra.mxu0 %v324
    %v582 = vpop.f32.mrf.mxu0
    %v583 = vadd.f32 %v361, %v582
    %v584 = vpop.f32.mrf.mxu0
    %v585 = vadd.f32 %v361, %v584
    %586 = vmatmul.bf16.gmra.mxu0 %v325
    %v587 = vpop.f32.mrf.mxu0
    %v588 = vadd.f32 %v361, %v587
    %v589 = vpop.f32.mrf.mxu0
    %v590 = vadd.f32 %v361, %v589
    %591 = vdwg.mxu0
    %592 = vmatpush.bf16.msra.mxu0 %v469
    %593 = vmatpush.bf16.msra.mxu0 %v466
    %594 = vmatpush.bf16.msra.mxu0 %v463
    %595 = vmatpush.bf16.msra.mxu0 %v460
    %596 = vmatpush.bf16.msra.mxu0 %v457
    %597 = vmatpush.bf16.msra.mxu0 %v454
    %598 = vmatpush.bf16.msra.mxu0 %v451
    %599 = vmatpush.bf16.msra.mxu0 %v448
    %600 = vmatmul.bf16.gmra.mxu0 %v318
    %v601 = vpop.f32.mrf.mxu0
    %v602 = vadd.f32 %v362, %v601
    %v603 = vpop.f32.mrf.mxu0
    %v604 = vadd.f32 %v362, %v603
    %605 = vmatmul.bf16.gmra.mxu0 %v319
    %v606 = vpop.f32.mrf.mxu0
    %v607 = vadd.f32 %v362, %v606
    %v608 = vpop.f32.mrf.mxu0
    %v609 = vadd.f32 %v362, %v608
    %610 = vmatmul.bf16.gmra.mxu0 %v320
    %v611 = vpop.f32.mrf.mxu0
    %v612 = vadd.f32 %v362, %v611
    %v613 = vpop.f32.mrf.mxu0
    %v614 = vadd.f32 %v362, %v613
    %615 = vmatmul.bf16.gmra.mxu0 %v321
    %v616 = vpop.f32.mrf.mxu0
    %v617 = vadd.f32 %v362, %v616
    %v618 = vpop.f32.mrf.mxu0
    %v619 = vadd.f32 %v362, %v618
    %620 = vmatmul.bf16.gmra.mxu0 %v322
    %v621 = vpop.f32.mrf.mxu0
    %v622 = vadd.f32 %v362, %v621
    %v623 = vpop.f32.mrf.mxu0
    %v624 = vadd.f32 %v362, %v623
    %625 = vmatmul.bf16.gmra.mxu0 %v323
    %v626 = vpop.f32.mrf.mxu0
    %v627 = vadd.f32 %v362, %v626
    %v628 = vpop.f32.mrf.mxu0
    %v629 = vadd.f32 %v362, %v628
    %630 = vmatmul.bf16.gmra.mxu0 %v324
    %v631 = vpop.f32.mrf.mxu0
    %v632 = vadd.f32 %v362, %v631
    %v633 = vpop.f32.mrf.mxu0
    %v634 = vadd.f32 %v362, %v633
    %635 = vmatmul.bf16.gmra.mxu0 %v325
    %v636 = vpop.f32.mrf.mxu0
    %v637 = vadd.f32 %v362, %v636
    %v638 = vpop.f32.mrf.mxu0
    %v639 = vadd.f32 %v362, %v638
    %640 = vdwg.mxu0
    %641 = vst [vmem:[#allocation2] sm:$0xff] %v504
    %642 = vst [vmem:[#allocation2 + $0x8] sm:$0xff] %v553
    %643 = vst [vmem:[#allocation2 + $0x10] sm:$0xff] %v602
    %644 = vst [vmem:[#allocation2 + $0x18] sm:$0xff] %v506
    %645 = vst [vmem:[#allocation2 + $0x20] sm:$0xff] %v555
    %646 = vst [vmem:[#allocation2 + $0x28] sm:$0xff] %v604
    %647 = vst [vmem:[#allocation2 + $0x30] sm:$0xff] %v509
    %648 = vst [vmem:[#allocation2 + $0x38] sm:$0xff] %v558
    %649 = vst [vmem:[#allocation2 + $0x40] sm:$0xff] %v607
    %650 = vst [vmem:[#allocation2 + $0x48] sm:$0xff] %v511
    %651 = vst [vmem:[#allocation2 + $0x50] sm:$0xff] %v560
    %652 = vst [vmem:[#allocation2 + $0x58] sm:$0xff] %v609
    %653 = vst [vmem:[#allocation2 + $0x60] sm:$0xff] %v514
    %654 = vst [vmem:[#allocation2 + $0x68] sm:$0xff] %v563
    %655 = vst [vmem:[#allocation2 + $0x70] sm:$0xff] %v612
    %656 = vst [vmem:[#allocation2 + $0x78] sm:$0xff] %v516
    %657 = vst [vmem:[#allocation2 + $0x80] sm:$0xff] %v565
    %658 = vst [vmem:[#allocation2 + $0x88] sm:$0xff] %v614
    %659 = vst [vmem:[#allocation2 + $0x90] sm:$0xff] %v519
    %660 = vst [vmem:[#allocation2 + $0x98] sm:$0xff] %v568
    %661 = vst [vmem:[#allocation2 + $0xa0] sm:$0xff] %v617
    %662 = vst [vmem:[#allocation2 + $0xa8] sm:$0xff] %v521
    %663 = vst [vmem:[#allocation2 + $0xb0] sm:$0xff] %v570
    %664 = vst [vmem:[#allocation2 + $0xb8] sm:$0xff] %v619
    %665 = vst [vmem:[#allocation2 + $0xc0] sm:$0xff] %v524
    %666 = vst [vmem:[#allocation2 + $0xc8] sm:$0xff] %v573
    %667 = vst [vmem:[#allocation2 + $0xd0] sm:$0xff] %v622
    %668 = vst [vmem:[#allocation2 + $0xd8] sm:$0xff] %v526
    %669 = vst [vmem:[#allocation2 + $0xe0] sm:$0xff] %v575
    %670 = vst [vmem:[#allocation2 + $0xe8] sm:$0xff] %v624
    %671 = vst [vmem:[#allocation2 + $0xf0] sm:$0xff] %v529
    %672 = vst [vmem:[#allocation2 + $0xf8] sm:$0xff] %v578
    %673 = vst [vmem:[#allocation2 + $0x100] sm:$0xff] %v627
    %674 = vst [vmem:[#allocation2 + $0x108] sm:$0xff] %v531
    %675 = vst [vmem:[#allocation2 + $0x110] sm:$0xff] %v580
    %676 = vst [vmem:[#allocation2 + $0x118] sm:$0xff] %v629
    %677 = vst [vmem:[#allocation2 + $0x120] sm:$0xff] %v534
    %678 = vst [vmem:[#allocation2 + $0x128] sm:$0xff] %v583
    %679 = vst [vmem:[#allocation2 + $0x130] sm:$0xff] %v632
    %680 = vst [vmem:[#allocation2 + $0x138] sm:$0xff] %v536
    %681 = vst [vmem:[#allocation2 + $0x140] sm:$0xff] %v585
    %682 = vst [vmem:[#allocation2 + $0x148] sm:$0xff] %v634
    %683 = vst [vmem:[#allocation2 + $0x150] sm:$0xff] %v539
    %684 = vst [vmem:[#allocation2 + $0x158] sm:$0xff] %v588
    %685 = vst [vmem:[#allocation2 + $0x160] sm:$0xff] %v637
    %686 = vst [vmem:[#allocation2 + $0x168] sm:$0xff] %v541
    %687 = vst [vmem:[#allocation2 + $0x170] sm:$0xff] %v590
    %688 = vst [vmem:[#allocation2 + $0x178] sm:$0xff] %v639
    %v689 = vld [vmem:[%s6] sm:$0x7]
    %v691 = vperm.slane %v689, 0
    %v692 = vperm.slane %v689, 1
    %v693 = vperm.slane %v689, 2
    %v697 = vld [vmem:[%s1] sm:$0xff]
    %v698 = vld [vmem:[%s1 + $0x8] sm:$0xff]
    %699 = vst [vmem:[#allocation4] sm:$0xff] %v697
    %700 = vst [vmem:[#allocation4 + $0x8] sm:$0xff] %v698
    %v701 = vld [vmem:[#allocation4] sm:$0xff]
    %v702 = vld [vmem:[#allocation4 + $0x8] sm:$0xff]
    %s703 = smul.u32 0, 3
    %s704 = smul.addr %s703, 8
    %s705 = scalar_lea.vmem [#allocation2], %s704
    %v706 = vld [vmem:[%s705] sm:$0xff]
    %v707 = vld [vmem:[%s705 + $0x8] sm:$0xff]
    %v708 = vld [vmem:[%s705 + $0x10] sm:$0xff]
    %v709 = vld [vmem:[%s705 + $0x18] sm:$0xff]
    %v710 = vld [vmem:[%s705 + $0x20] sm:$0xff]
    %v711 = vld [vmem:[%s705 + $0x28] sm:$0xff]
    %v712 = vpack.c.bf16 %v702, %v701
    %v713 = vld [vmem:[#allocation8] sm:$0xff]
    %v714 = vld [vmem:[#allocation8 + $0x8] sm:$0xf]
    %v715 = vld [vmem:[#allocation8 + $0xc] sm:$0xff]
    %v716 = vld [vmem:[#allocation8 + $0x14] sm:$0xf]
    %v717 = vld [vmem:[#allocation8 + $0x18] sm:$0xff]
    %v718 = vld [vmem:[#allocation8 + $0x20] sm:$0xf]
    %v719 = vld [vmem:[#allocation8 + $0x24] sm:$0xff]
    %v720 = vld [vmem:[#allocation8 + $0x2c] sm:$0xf]
    %v721 = vld [vmem:[#allocation8 + $0x30] sm:$0xff]
    %v722 = vld [vmem:[#allocation8 + $0x38] sm:$0xf]
    %v723 = vld [vmem:[#allocation8 + $0x3c] sm:$0xff]
    %v724 = vld [vmem:[#allocation8 + $0x44] sm:$0xf]
    %v725 = vld [vmem:[#allocation8 + $0x48] sm:$0xff]
    %v726 = vld [vmem:[#allocation8 + $0x50] sm:$0xf]
    %v727 = vld [vmem:[#allocation8 + $0x54] sm:$0xff]
    %v728 = vld [vmem:[#allocation8 + $0x5c] sm:$0xf]
    %v729 = vld [vmem:[#allocation8 + $0x60] sm:$0xff]
    %v730 = vld [vmem:[#allocation8 + $0x68] sm:$0xf]
    %v731 = vld [vmem:[#allocation8 + $0x6c] sm:$0xff]
    %v732 = vld [vmem:[#allocation8 + $0x74] sm:$0xf]
    %v733 = vld [vmem:[#allocation8 + $0x78] sm:$0xff]
    %v734 = vld [vmem:[#allocation8 + $0x80] sm:$0xf]
    %v735 = vld [vmem:[#allocation8 + $0x84] sm:$0xff]
    %v736 = vld [vmem:[#allocation8 + $0x8c] sm:$0xf]
    %v737 = vld [vmem:[#allocation8 + $0x90] sm:$0xff]
    %v738 = vld [vmem:[#allocation8 + $0x98] sm:$0xf]
    %v739 = vld [vmem:[#allocation8 + $0x9c] sm:$0xff]
    %v740 = vld [vmem:[#allocation8 + $0xa4] sm:$0xf]
    %v741 = vld [vmem:[#allocation8 + $0xa8] sm:$0xff]
    %v742 = vld [vmem:[#allocation8 + $0xb0] sm:$0xf]
    %v743 = vld [vmem:[#allocation8 + $0xb4] sm:$0xff]
    %v744 = vld [vmem:[#allocation8 + $0xbc] sm:$0xf]
    %v777 = vunpack.c.l.b16 %v713
    %v778 = vunpack.c.h.b16 %v713
    %v779 = vunpack.c.l.b16 %v714
    %v780 = vunpack.c.l.b16 %v715
    %v781 = vunpack.c.h.b16 %v715
    %v782 = vunpack.c.l.b16 %v716
    %v783 = vunpack.c.l.b16 %v717
    %v784 = vunpack.c.h.b16 %v717
    %v785 = vunpack.c.l.b16 %v718
    %v786 = vunpack.c.l.b16 %v719
    %v787 = vunpack.c.h.b16 %v719
    %v788 = vunpack.c.l.b16 %v720
    %v789 = vunpack.c.l.b16 %v721
    %v790 = vunpack.c.h.b16 %v721
    %v791 = vunpack.c.l.b16 %v722
    %v792 = vunpack.c.l.b16 %v723
    %v793 = vunpack.c.h.b16 %v723
    %v794 = vunpack.c.l.b16 %v724
    %v795 = vunpack.c.l.b16 %v725
    %v796 = vunpack.c.h.b16 %v725
    %v797 = vunpack.c.l.b16 %v726
    %v798 = vunpack.c.l.b16 %v727
    %v799 = vunpack.c.h.b16 %v727
    %v800 = vunpack.c.l.b16 %v728
    %v801 = vunpack.c.l.b16 %v729
    %v802 = vunpack.c.h.b16 %v729
    %v803 = vunpack.c.l.b16 %v730
    %v804 = vunpack.c.l.b16 %v731
    %v805 = vunpack.c.h.b16 %v731
    %v806 = vunpack.c.l.b16 %v732
    %v807 = vunpack.c.l.b16 %v733
    %v808 = vunpack.c.h.b16 %v733
    %v809 = vunpack.c.l.b16 %v734
    %v810 = vunpack.c.l.b16 %v735
    %v811 = vunpack.c.h.b16 %v735
    %v812 = vunpack.c.l.b16 %v736
    %v813 = vunpack.c.l.b16 %v737
    %v814 = vunpack.c.h.b16 %v737
    %v815 = vunpack.c.l.b16 %v738
    %v816 = vunpack.c.l.b16 %v739
    %v817 = vunpack.c.h.b16 %v739
    %v818 = vunpack.c.l.b16 %v740
    %v819 = vunpack.c.l.b16 %v741
    %v820 = vunpack.c.h.b16 %v741
    %v821 = vunpack.c.l.b16 %v742
    %v822 = vunpack.c.l.b16 %v743
    %v823 = vunpack.c.h.b16 %v743
    %v824 = vunpack.c.l.b16 %v744
    %v825 = vpack.c.b16 %v780, %v777
    %v826 = vpack.c.b16 %v781, %v778
    %v827 = vpack.c.b16 %v782, %v779
    %v828 = vpack.c.b16 %v786, %v783
    %v829 = vpack.c.b16 %v787, %v784
    %v830 = vpack.c.b16 %v788, %v785
    %v831 = vpack.c.b16 %v792, %v789
    %v832 = vpack.c.b16 %v793, %v790
    %v833 = vpack.c.b16 %v794, %v791
    %v834 = vpack.c.b16 %v798, %v795
    %v835 = vpack.c.b16 %v799, %v796
    %v836 = vpack.c.b16 %v800, %v797
    %v837 = vpack.c.b16 %v804, %v801
    %v838 = vpack.c.b16 %v805, %v802
    %v839 = vpack.c.b16 %v806, %v803
    %v840 = vpack.c.b16 %v810, %v807
    %v841 = vpack.c.b16 %v811, %v808
    %v842 = vpack.c.b16 %v812, %v809
    %v843 = vpack.c.b16 %v816, %v813
    %v844 = vpack.c.b16 %v817, %v814
    %v845 = vpack.c.b16 %v818, %v815
    %v846 = vpack.c.b16 %v822, %v819
    %v847 = vpack.c.b16 %v823, %v820
    %v848 = vpack.c.b16 %v824, %v821
    %873 = vmatpush.bf16.msra.mxu0 %v846
    %874 = vmatpush.bf16.msra.mxu0 %v843
    %875 = vmatpush.bf16.msra.mxu0 %v840
    %876 = vmatpush.bf16.msra.mxu0 %v837
    %877 = vmatpush.bf16.msra.mxu0 %v834
    %878 = vmatpush.bf16.msra.mxu0 %v831
    %879 = vmatpush.bf16.msra.mxu0 %v828
    %880 = vmatpush.bf16.msra.mxu0 %v825
    %881 = vmatmul.bf16.gmra.mxu0 %v712
    %v882 = vpop.f32.mrf.mxu0
    %v883 = vadd.f32 %v691, %v882
    %v884 = vpop.f32.mrf.mxu0
    %v885 = vadd.f32 %v691, %v884
    %886 = vdwg.mxu0
    %887 = vmatpush.bf16.msra.mxu0 %v847
    %888 = vmatpush.bf16.msra.mxu0 %v844
    %889 = vmatpush.bf16.msra.mxu0 %v841
    %890 = vmatpush.bf16.msra.mxu0 %v838
    %891 = vmatpush.bf16.msra.mxu0 %v835
    %892 = vmatpush.bf16.msra.mxu0 %v832
    %893 = vmatpush.bf16.msra.mxu0 %v829
    %894 = vmatpush.bf16.msra.mxu0 %v826
    %895 = vmatmul.bf16.gmra.mxu0 %v712
    %v896 = vpop.f32.mrf.mxu0
    %v897 = vadd.f32 %v692, %v896
    %v898 = vpop.f32.mrf.mxu0
    %v899 = vadd.f32 %v692, %v898
    %900 = vdwg.mxu0
    %901 = vmatpush.bf16.msra.mxu0 %v848
    %902 = vmatpush.bf16.msra.mxu0 %v845
    %903 = vmatpush.bf16.msra.mxu0 %v842
    %904 = vmatpush.bf16.msra.mxu0 %v839
    %905 = vmatpush.bf16.msra.mxu0 %v836
    %906 = vmatpush.bf16.msra.mxu0 %v833
    %907 = vmatpush.bf16.msra.mxu0 %v830
    %908 = vmatpush.bf16.msra.mxu0 %v827
    %909 = vmatmul.bf16.gmra.mxu0 %v712
    %v910 = vpop.f32.mrf.mxu0
    %v911 = vadd.f32 %v693, %v910
    %v912 = vpop.f32.mrf.mxu0
    %v913 = vadd.f32 %v693, %v912
    %914 = vdwg.mxu0
    %v915 = vadd.f32 %v706, %v883
    %v916 = vadd.f32 %v709, %v885
    %v917 = vxor.u32 %v915, 2147483648
    %v918 = vxor.u32 %v916, 2147483648
    %v919 = vmul.f32 %v917, 1.442695
    %v920 = vpow.pop %v919
    %v921 = vmul.f32 %v918, 1.442695
    %v922 = vpow.pop %v921
    %v923 = vadd.f32 %v920, 1.0
    %v924 = vadd.f32 %v922, 1.0
    %v925 = vrcp.pop %v923
    %v926 = vmul.f32 %v923, %v925
    %v927 = vsub.f32 1.0, %v926
    %v928 = vmul.f32 %v925, %v927
    %v929 = vadd.f32 %v925, %v928
    %vm930 = vweird.f32 %v923
    %vm931 = vweird.f32 %v925
    %vm932 = vmor %vm930, %vm931
    %v933 = vsel %vm932, %v925, %v929
    %v934 = vand.u32 2147483647, %v923
    %vm935 = vcmp.eq.f32.partialorder %v934, 8.507059e+37
    %v936 = vand.u32 %v923, 2147483648
    %v937 = vor.u32 1.1754944e-38, %v936
    %v938 = vsel %vm935, %v937, %v933
    %v939 = vmul.f32 1.0, %v938
    %v940 = vrcp.pop %v924
    %v941 = vmul.f32 %v924, %v940
    %v942 = vsub.f32 1.0, %v941
    %v943 = vmul.f32 %v940, %v942
    %v944 = vadd.f32 %v940, %v943
    %vm945 = vweird.f32 %v924
    %vm946 = vweird.f32 %v940
    %vm947 = vmor %vm945, %vm946
    %v948 = vsel %vm947, %v940, %v944
    %v949 = vand.u32 2147483647, %v924
    %vm950 = vcmp.eq.f32.partialorder %v949, 8.507059e+37
    %v951 = vand.u32 %v924, 2147483648
    %v952 = vor.u32 1.1754944e-38, %v951
    %v953 = vsel %vm950, %v952, %v948
    %v954 = vmul.f32 1.0, %v953
    %v955 = vadd.f32 %v707, %v897
    %v956 = vadd.f32 %v710, %v899
    %v957 = vxor.u32 %v955, 2147483648
    %v958 = vxor.u32 %v956, 2147483648
    %v959 = vmul.f32 %v957, 1.442695
    %v960 = vpow.pop %v959
    %v961 = vmul.f32 %v958, 1.442695
    %v962 = vpow.pop %v961
    %v963 = vadd.f32 %v960, 1.0
    %v964 = vadd.f32 %v962, 1.0
    %v965 = vrcp.pop %v963
    %v966 = vmul.f32 %v963, %v965
    %v967 = vsub.f32 1.0, %v966
    %v968 = vmul.f32 %v965, %v967
    %v969 = vadd.f32 %v965, %v968
    %vm970 = vweird.f32 %v963
    %vm971 = vweird.f32 %v965
    %vm972 = vmor %vm970, %vm971
    %v973 = vsel %vm972, %v965, %v969
    %v974 = vand.u32 2147483647, %v963
    %vm975 = vcmp.eq.f32.partialorder %v974, 8.507059e+37
    %v976 = vand.u32 %v963, 2147483648
    %v977 = vor.u32 1.1754944e-38, %v976
    %v978 = vsel %vm975, %v977, %v973
    %v979 = vmul.f32 1.0, %v978
    %v980 = vrcp.pop %v964
    %v981 = vmul.f32 %v964, %v980
    %v982 = vsub.f32 1.0, %v981
    %v983 = vmul.f32 %v980, %v982
    %v984 = vadd.f32 %v980, %v983
    %vm985 = vweird.f32 %v964
    %vm986 = vweird.f32 %v980
    %vm987 = vmor %vm985, %vm986
    %v988 = vsel %vm987, %v980, %v984
    %v989 = vand.u32 2147483647, %v964
    %vm990 = vcmp.eq.f32.partialorder %v989, 8.507059e+37
    %v991 = vand.u32 %v964, 2147483648
    %v992 = vor.u32 1.1754944e-38, %v991
    %v993 = vsel %vm990, %v992, %v988
    %v994 = vmul.f32 1.0, %v993
    %v995 = vmul.f32 %v939, %v911
    %v996 = vmul.f32 %v954, %v913
    %v997 = vadd.f32 %v708, %v995
    %v998 = vadd.f32 %v711, %v996
    %v999 = vtanh.pop %v997
    %v1000 = vtanh.pop %v998
    %v1001 = vsub.f32 1.0, %v979
    %v1002 = vsub.f32 1.0, %v994
    %v1003 = vmul.f32 %v1001, %v999
    %v1004 = vmul.f32 %v1002, %v1000
    %v1005 = vmul.f32 %v979, %v701
    %v1006 = vmul.f32 %v994, %v702
    %v1007 = vadd.f32 %v1003, %v1005
    %v1008 = vadd.f32 %v1004, %v1006
    %1009 = vst [vmem:[#allocation4] sm:$0xff] %v1007
    %1010 = vst [vmem:[#allocation4 + $0x8] sm:$0xff] %v1008
    %1011 = vst [vmem:[#allocation3] sm:$0xff] %v1007
    %1012 = vst [vmem:[#allocation3 + $0x8] sm:$0xff] %v1008
    %v1013 = vld [vmem:[#allocation4] sm:$0xff]
    %v1014 = vld [vmem:[#allocation4 + $0x8] sm:$0xff]
    %s1015 = smul.u32 2, 3
    %s1016 = smul.addr %s1015, 8
    %s1017 = scalar_lea.vmem [#allocation2], %s1016
    %v1018 = vld [vmem:[%s1017] sm:$0xff]
    %v1019 = vld [vmem:[%s1017 + $0x8] sm:$0xff]
    %v1020 = vld [vmem:[%s1017 + $0x10] sm:$0xff]
    %v1021 = vld [vmem:[%s1017 + $0x18] sm:$0xff]
    %v1022 = vld [vmem:[%s1017 + $0x20] sm:$0xff]
    %v1023 = vld [vmem:[%s1017 + $0x28] sm:$0xff]
    %v1024 = vpack.c.bf16 %v1014, %v1013
    %v1025 = vld [vmem:[#allocation8] sm:$0xff]
    %v1026 = vld [vmem:[#allocation8 + $0x8] sm:$0xf]
    %v1027 = vld [vmem:[#allocation8 + $0xc] sm:$0xff]
    %v1028 = vld [vmem:[#allocation8 + $0x14] sm:$0xf]
    %v1029 = vld [vmem:[#allocation8 + $0x18] sm:$0xff]
    %v1030 = vld [vmem:[#allocation8 + $0x20] sm:$0xf]
    %v1031 = vld [vmem:[#allocation8 + $0x24] sm:$0xff]
    %v1032 = vld [vmem:[#allocation8 + $0x2c] sm:$0xf]
    %v1033 = vld [vmem:[#allocation8 + $0x30] sm:$0xff]
    %v1034 = vld [vmem:[#allocation8 + $0x38] sm:$0xf]
    %v1035 = vld [vmem:[#allocation8 + $0x3c] sm:$0xff]
    %v1036 = vld [vmem:[#allocation8 + $0x44] sm:$0xf]
    %v1037 = vld [vmem:[#allocation8 + $0x48] sm:$0xff]
    %v1038 = vld [vmem:[#allocation8 + $0x50] sm:$0xf]
    %v1039 = vld [vmem:[#allocation8 + $0x54] sm:$0xff]
    %v1040 = vld [vmem:[#allocation8 + $0x5c] sm:$0xf]
    %v1041 = vld [vmem:[#allocation8 + $0x60] sm:$0xff]
    %v1042 = vld [vmem:[#allocation8 + $0x68] sm:$0xf]
    %v1043 = vld [vmem:[#allocation8 + $0x6c] sm:$0xff]
    %v1044 = vld [vmem:[#allocation8 + $0x74] sm:$0xf]
    %v1045 = vld [vmem:[#allocation8 + $0x78] sm:$0xff]
    %v1046 = vld [vmem:[#allocation8 + $0x80] sm:$0xf]
    %v1047 = vld [vmem:[#allocation8 + $0x84] sm:$0xff]
    %v1048 = vld [vmem:[#allocation8 + $0x8c] sm:$0xf]
    %v1049 = vld [vmem:[#allocation8 + $0x90] sm:$0xff]
    %v1050 = vld [vmem:[#allocation8 + $0x98] sm:$0xf]
    %v1051 = vld [vmem:[#allocation8 + $0x9c] sm:$0xff]
    %v1052 = vld [vmem:[#allocation8 + $0xa4] sm:$0xf]
    %v1053 = vld [vmem:[#allocation8 + $0xa8] sm:$0xff]
    %v1054 = vld [vmem:[#allocation8 + $0xb0] sm:$0xf]
    %v1055 = vld [vmem:[#allocation8 + $0xb4] sm:$0xff]
    %v1056 = vld [vmem:[#allocation8 + $0xbc] sm:$0xf]
    %v1089 = vunpack.c.l.b16 %v1025
    %v1090 = vunpack.c.h.b16 %v1025
    %v1091 = vunpack.c.l.b16 %v1026
    %v1092 = vunpack.c.l.b16 %v1027
    %v1093 = vunpack.c.h.b16 %v1027
    %v1094 = vunpack.c.l.b16 %v1028
    %v1095 = vunpack.c.l.b16 %v1029
    %v1096 = vunpack.c.h.b16 %v1029
    %v1097 = vunpack.c.l.b16 %v1030
    %v1098 = vunpack.c.l.b16 %v1031
    %v1099 = vunpack.c.h.b16 %v1031
    %v1100 = vunpack.c.l.b16 %v1032
    %v1101 = vunpack.c.l.b16 %v1033
    %v1102 = vunpack.c.h.b16 %v1033
    %v1103 = vunpack.c.l.b16 %v1034
    %v1104 = vunpack.c.l.b16 %v1035
    %v1105 = vunpack.c.h.b16 %v1035
    %v1106 = vunpack.c.l.b16 %v1036
    %v1107 = vunpack.c.l.b16 %v1037
    %v1108 = vunpack.c.h.b16 %v1037
    %v1109 = vunpack.c.l.b16 %v1038
    %v1110 = vunpack.c.l.b16 %v1039
    %v1111 = vunpack.c.h.b16 %v1039
    %v1112 = vunpack.c.l.b16 %v1040
    %v1113 = vunpack.c.l.b16 %v1041
    %v1114 = vunpack.c.h.b16 %v1041
    %v1115 = vunpack.c.l.b16 %v1042
    %v1116 = vunpack.c.l.b16 %v1043
    %v1117 = vunpack.c.h.b16 %v1043
    %v1118 = vunpack.c.l.b16 %v1044
    %v1119 = vunpack.c.l.b16 %v1045
    %v1120 = vunpack.c.h.b16 %v1045
    %v1121 = vunpack.c.l.b16 %v1046
    %v1122 = vunpack.c.l.b16 %v1047
    %v1123 = vunpack.c.h.b16 %v1047
    %v1124 = vunpack.c.l.b16 %v1048
    %v1125 = vunpack.c.l.b16 %v1049
    %v1126 = vunpack.c.h.b16 %v1049
    %v1127 = vunpack.c.l.b16 %v1050
    %v1128 = vunpack.c.l.b16 %v1051
    %v1129 = vunpack.c.h.b16 %v1051
    %v1130 = vunpack.c.l.b16 %v1052
    %v1131 = vunpack.c.l.b16 %v1053
    %v1132 = vunpack.c.h.b16 %v1053
    %v1133 = vunpack.c.l.b16 %v1054
    %v1134 = vunpack.c.l.b16 %v1055
    %v1135 = vunpack.c.h.b16 %v1055
    %v1136 = vunpack.c.l.b16 %v1056
    %v1137 = vpack.c.b16 %v1092, %v1089
    %v1138 = vpack.c.b16 %v1093, %v1090
    %v1139 = vpack.c.b16 %v1094, %v1091
    %v1140 = vpack.c.b16 %v1098, %v1095
    %v1141 = vpack.c.b16 %v1099, %v1096
    %v1142 = vpack.c.b16 %v1100, %v1097
    %v1143 = vpack.c.b16 %v1104, %v1101
    %v1144 = vpack.c.b16 %v1105, %v1102
    %v1145 = vpack.c.b16 %v1106, %v1103
    %v1146 = vpack.c.b16 %v1110, %v1107
    %v1147 = vpack.c.b16 %v1111, %v1108
    %v1148 = vpack.c.b16 %v1112, %v1109
    %v1149 = vpack.c.b16 %v1116, %v1113
    %v1150 = vpack.c.b16 %v1117, %v1114
    %v1151 = vpack.c.b16 %v1118, %v1115
    %v1152 = vpack.c.b16 %v1122, %v1119
    %v1153 = vpack.c.b16 %v1123, %v1120
    %v1154 = vpack.c.b16 %v1124, %v1121
    %v1155 = vpack.c.b16 %v1128, %v1125
    %v1156 = vpack.c.b16 %v1129, %v1126
    %v1157 = vpack.c.b16 %v1130, %v1127
    %v1158 = vpack.c.b16 %v1134, %v1131
    %v1159 = vpack.c.b16 %v1135, %v1132
    %v1160 = vpack.c.b16 %v1136, %v1133
    %1185 = vmatpush.bf16.msra.mxu0 %v1158
    %1186 = vmatpush.bf16.msra.mxu0 %v1155
    %1187 = vmatpush.bf16.msra.mxu0 %v1152
    %1188 = vmatpush.bf16.msra.mxu0 %v1149
    %1189 = vmatpush.bf16.msra.mxu0 %v1146
    %1190 = vmatpush.bf16.msra.mxu0 %v1143
    %1191 = vmatpush.bf16.msra.mxu0 %v1140
    %1192 = vmatpush.bf16.msra.mxu0 %v1137
    %1193 = vmatmul.bf16.gmra.mxu0 %v1024
    %v1194 = vpop.f32.mrf.mxu0
    %v1195 = vadd.f32 %v691, %v1194
    %v1196 = vpop.f32.mrf.mxu0
    %v1197 = vadd.f32 %v691, %v1196
    %1198 = vdwg.mxu0
    %1199 = vmatpush.bf16.msra.mxu0 %v1159
    %1200 = vmatpush.bf16.msra.mxu0 %v1156
    %1201 = vmatpush.bf16.msra.mxu0 %v1153
    %1202 = vmatpush.bf16.msra.mxu0 %v1150
    %1203 = vmatpush.bf16.msra.mxu0 %v1147
    %1204 = vmatpush.bf16.msra.mxu0 %v1144
    %1205 = vmatpush.bf16.msra.mxu0 %v1141
    %1206 = vmatpush.bf16.msra.mxu0 %v1138
    %1207 = vmatmul.bf16.gmra.mxu0 %v1024
    %v1208 = vpop.f32.mrf.mxu0
    %v1209 = vadd.f32 %v692, %v1208
    %v1210 = vpop.f32.mrf.mxu0
    %v1211 = vadd.f32 %v692, %v1210
    %1212 = vdwg.mxu0
    %1213 = vmatpush.bf16.msra.mxu0 %v1160
    %1214 = vmatpush.bf16.msra.mxu0 %v1157
    %1215 = vmatpush.bf16.msra.mxu0 %v1154
    %1216 = vmatpush.bf16.msra.mxu0 %v1151
    %1217 = vmatpush.bf16.msra.mxu0 %v1148
    %1218 = vmatpush.bf16.msra.mxu0 %v1145
    %1219 = vmatpush.bf16.msra.mxu0 %v1142
    %1220 = vmatpush.bf16.msra.mxu0 %v1139
    %1221 = vmatmul.bf16.gmra.mxu0 %v1024
    %v1222 = vpop.f32.mrf.mxu0
    %v1223 = vadd.f32 %v693, %v1222
    %v1224 = vpop.f32.mrf.mxu0
    %v1225 = vadd.f32 %v693, %v1224
    %1226 = vdwg.mxu0
    %v1227 = vadd.f32 %v1018, %v1195
    %v1228 = vadd.f32 %v1021, %v1197
    %v1229 = vxor.u32 %v1227, 2147483648
    %v1230 = vxor.u32 %v1228, 2147483648
    %v1231 = vmul.f32 %v1229, 1.442695
    %v1232 = vpow.pop %v1231
    %v1233 = vmul.f32 %v1230, 1.442695
    %v1234 = vpow.pop %v1233
    %v1235 = vadd.f32 %v1232, 1.0
    %v1236 = vadd.f32 %v1234, 1.0
    %v1237 = vrcp.pop %v1235
    %v1238 = vmul.f32 %v1235, %v1237
    %v1239 = vsub.f32 1.0, %v1238
    %v1240 = vmul.f32 %v1237, %v1239
    %v1241 = vadd.f32 %v1237, %v1240
    %vm1242 = vweird.f32 %v1235
    %vm1243 = vweird.f32 %v1237
    %vm1244 = vmor %vm1242, %vm1243
    %v1245 = vsel %vm1244, %v1237, %v1241
    %v1246 = vand.u32 2147483647, %v1235
    %vm1247 = vcmp.eq.f32.partialorder %v1246, 8.507059e+37
    %v1248 = vand.u32 %v1235, 2147483648
    %v1249 = vor.u32 1.1754944e-38, %v1248
    %v1250 = vsel %vm1247, %v1249, %v1245
    %v1251 = vmul.f32 1.0, %v1250
    %v1252 = vrcp.pop %v1236
    %v1253 = vmul.f32 %v1236, %v1252
    %v1254 = vsub.f32 1.0, %v1253
    %v1255 = vmul.f32 %v1252, %v1254
    %v1256 = vadd.f32 %v1252, %v1255
    %vm1257 = vweird.f32 %v1236
    %vm1258 = vweird.f32 %v1252
    %vm1259 = vmor %vm1257, %vm1258
    %v1260 = vsel %vm1259, %v1252, %v1256
    %v1261 = vand.u32 2147483647, %v1236
    %vm1262 = vcmp.eq.f32.partialorder %v1261, 8.507059e+37
    %v1263 = vand.u32 %v1236, 2147483648
    %v1264 = vor.u32 1.1754944e-38, %v1263
    %v1265 = vsel %vm1262, %v1264, %v1260
    %v1266 = vmul.f32 1.0, %v1265
    %v1267 = vadd.f32 %v1019, %v1209
    %v1268 = vadd.f32 %v1022, %v1211
    %v1269 = vxor.u32 %v1267, 2147483648
    %v1270 = vxor.u32 %v1268, 2147483648
    %v1271 = vmul.f32 %v1269, 1.442695
    %v1272 = vpow.pop %v1271
    %v1273 = vmul.f32 %v1270, 1.442695
    %v1274 = vpow.pop %v1273
    %v1275 = vadd.f32 %v1272, 1.0
    %v1276 = vadd.f32 %v1274, 1.0
    %v1277 = vrcp.pop %v1275
    %v1278 = vmul.f32 %v1275, %v1277
    %v1279 = vsub.f32 1.0, %v1278
    %v1280 = vmul.f32 %v1277, %v1279
    %v1281 = vadd.f32 %v1277, %v1280
    %vm1282 = vweird.f32 %v1275
    %vm1283 = vweird.f32 %v1277
    %vm1284 = vmor %vm1282, %vm1283
    %v1285 = vsel %vm1284, %v1277, %v1281
    %v1286 = vand.u32 2147483647, %v1275
    %vm1287 = vcmp.eq.f32.partialorder %v1286, 8.507059e+37
    %v1288 = vand.u32 %v1275, 2147483648
    %v1289 = vor.u32 1.1754944e-38, %v1288
    %v1290 = vsel %vm1287, %v1289, %v1285
    %v1291 = vmul.f32 1.0, %v1290
    %v1292 = vrcp.pop %v1276
    %v1293 = vmul.f32 %v1276, %v1292
    %v1294 = vsub.f32 1.0, %v1293
    %v1295 = vmul.f32 %v1292, %v1294
    %v1296 = vadd.f32 %v1292, %v1295
    %vm1297 = vweird.f32 %v1276
    %vm1298 = vweird.f32 %v1292
    %vm1299 = vmor %vm1297, %vm1298
    %v1300 = vsel %vm1299, %v1292, %v1296
    %v1301 = vand.u32 2147483647, %v1276
    %vm1302 = vcmp.eq.f32.partialorder %v1301, 8.507059e+37
    %v1303 = vand.u32 %v1276, 2147483648
    %v1304 = vor.u32 1.1754944e-38, %v1303
    %v1305 = vsel %vm1302, %v1304, %v1300
    %v1306 = vmul.f32 1.0, %v1305
    %v1307 = vmul.f32 %v1251, %v1223
    %v1308 = vmul.f32 %v1266, %v1225
    %v1309 = vadd.f32 %v1020, %v1307
    %v1310 = vadd.f32 %v1023, %v1308
    %v1311 = vtanh.pop %v1309
    %v1312 = vtanh.pop %v1310
    %v1313 = vsub.f32 1.0, %v1291
    %v1314 = vsub.f32 1.0, %v1306
    %v1315 = vmul.f32 %v1313, %v1311
    %v1316 = vmul.f32 %v1314, %v1312
    %v1317 = vmul.f32 %v1291, %v1013
    %v1318 = vmul.f32 %v1306, %v1014
    %v1319 = vadd.f32 %v1315, %v1317
    %v1320 = vadd.f32 %v1316, %v1318
    %1321 = vst [vmem:[#allocation4] sm:$0xff] %v1319
    %1322 = vst [vmem:[#allocation4 + $0x8] sm:$0xff] %v1320
    %s1323 = scalar_lea.vmem [#allocation3], 16
    %1324 = vst [vmem:[%s1323] sm:$0xff] %v1319
    %1325 = vst [vmem:[%s1323 + $0x8] sm:$0xff] %v1320
    %v1326 = vld [vmem:[#allocation4] sm:$0xff]
    %v1327 = vld [vmem:[#allocation4 + $0x8] sm:$0xff]
    %s1328 = smul.u32 4, 3
    %s1329 = smul.addr %s1328, 8
    %s1330 = scalar_lea.vmem [#allocation2], %s1329
    %v1331 = vld [vmem:[%s1330] sm:$0xff]
    %v1332 = vld [vmem:[%s1330 + $0x8] sm:$0xff]
    %v1333 = vld [vmem:[%s1330 + $0x10] sm:$0xff]
    %v1334 = vld [vmem:[%s1330 + $0x18] sm:$0xff]
    %v1335 = vld [vmem:[%s1330 + $0x20] sm:$0xff]
    %v1336 = vld [vmem:[%s1330 + $0x28] sm:$0xff]
    %v1337 = vpack.c.bf16 %v1327, %v1326
    %v1338 = vld [vmem:[#allocation8] sm:$0xff]
    %v1339 = vld [vmem:[#allocation8 + $0x8] sm:$0xf]
    %v1340 = vld [vmem:[#allocation8 + $0xc] sm:$0xff]
    %v1341 = vld [vmem:[#allocation8 + $0x14] sm:$0xf]
    %v1342 = vld [vmem:[#allocation8 + $0x18] sm:$0xff]
    %v1343 = vld [vmem:[#allocation8 + $0x20] sm:$0xf]
    %v1344 = vld [vmem:[#allocation8 + $0x24] sm:$0xff]
    %v1345 = vld [vmem:[#allocation8 + $0x2c] sm:$0xf]
    %v1346 = vld [vmem:[#allocation8 + $0x30] sm:$0xff]
    %v1347 = vld [vmem:[#allocation8 + $0x38] sm:$0xf]
    %v1348 = vld [vmem:[#allocation8 + $0x3c] sm:$0xff]
    %v1349 = vld [vmem:[#allocation8 + $0x44] sm:$0xf]
    %v1350 = vld [vmem:[#allocation8 + $0x48] sm:$0xff]
    %v1351 = vld [vmem:[#allocation8 + $0x50] sm:$0xf]
    %v1352 = vld [vmem:[#allocation8 + $0x54] sm:$0xff]
    %v1353 = vld [vmem:[#allocation8 + $0x5c] sm:$0xf]
    %v1354 = vld [vmem:[#allocation8 + $0x60] sm:$0xff]
    %v1355 = vld [vmem:[#allocation8 + $0x68] sm:$0xf]
    %v1356 = vld [vmem:[#allocation8 + $0x6c] sm:$0xff]
    %v1357 = vld [vmem:[#allocation8 + $0x74] sm:$0xf]
    %v1358 = vld [vmem:[#allocation8 + $0x78] sm:$0xff]
    %v1359 = vld [vmem:[#allocation8 + $0x80] sm:$0xf]
    %v1360 = vld [vmem:[#allocation8 + $0x84] sm:$0xff]
    %v1361 = vld [vmem:[#allocation8 + $0x8c] sm:$0xf]
    %v1362 = vld [vmem:[#allocation8 + $0x90] sm:$0xff]
    %v1363 = vld [vmem:[#allocation8 + $0x98] sm:$0xf]
    %v1364 = vld [vmem:[#allocation8 + $0x9c] sm:$0xff]
    %v1365 = vld [vmem:[#allocation8 + $0xa4] sm:$0xf]
    %v1366 = vld [vmem:[#allocation8 + $0xa8] sm:$0xff]
    %v1367 = vld [vmem:[#allocation8 + $0xb0] sm:$0xf]
    %v1368 = vld [vmem:[#allocation8 + $0xb4] sm:$0xff]
    %v1369 = vld [vmem:[#allocation8 + $0xbc] sm:$0xf]
    %v1402 = vunpack.c.l.b16 %v1338
    %v1403 = vunpack.c.h.b16 %v1338
    %v1404 = vunpack.c.l.b16 %v1339
    %v1405 = vunpack.c.l.b16 %v1340
    %v1406 = vunpack.c.h.b16 %v1340
    %v1407 = vunpack.c.l.b16 %v1341
    %v1408 = vunpack.c.l.b16 %v1342
    %v1409 = vunpack.c.h.b16 %v1342
    %v1410 = vunpack.c.l.b16 %v1343
    %v1411 = vunpack.c.l.b16 %v1344
    %v1412 = vunpack.c.h.b16 %v1344
    %v1413 = vunpack.c.l.b16 %v1345
    %v1414 = vunpack.c.l.b16 %v1346
    %v1415 = vunpack.c.h.b16 %v1346
    %v1416 = vunpack.c.l.b16 %v1347
    %v1417 = vunpack.c.l.b16 %v1348
    %v1418 = vunpack.c.h.b16 %v1348
    %v1419 = vunpack.c.l.b16 %v1349
    %v1420 = vunpack.c.l.b16 %v1350
    %v1421 = vunpack.c.h.b16 %v1350
    %v1422 = vunpack.c.l.b16 %v1351
    %v1423 = vunpack.c.l.b16 %v1352
    %v1424 = vunpack.c.h.b16 %v1352
    %v1425 = vunpack.c.l.b16 %v1353
    %v1426 = vunpack.c.l.b16 %v1354
    %v1427 = vunpack.c.h.b16 %v1354
    %v1428 = vunpack.c.l.b16 %v1355
    %v1429 = vunpack.c.l.b16 %v1356
    %v1430 = vunpack.c.h.b16 %v1356
    %v1431 = vunpack.c.l.b16 %v1357
    %v1432 = vunpack.c.l.b16 %v1358
    %v1433 = vunpack.c.h.b16 %v1358
    %v1434 = vunpack.c.l.b16 %v1359
    %v1435 = vunpack.c.l.b16 %v1360
    %v1436 = vunpack.c.h.b16 %v1360
    %v1437 = vunpack.c.l.b16 %v1361
    %v1438 = vunpack.c.l.b16 %v1362
    %v1439 = vunpack.c.h.b16 %v1362
    %v1440 = vunpack.c.l.b16 %v1363
    %v1441 = vunpack.c.l.b16 %v1364
    %v1442 = vunpack.c.h.b16 %v1364
    %v1443 = vunpack.c.l.b16 %v1365
    %v1444 = vunpack.c.l.b16 %v1366
    %v1445 = vunpack.c.h.b16 %v1366
    %v1446 = vunpack.c.l.b16 %v1367
    %v1447 = vunpack.c.l.b16 %v1368
    %v1448 = vunpack.c.h.b16 %v1368
    %v1449 = vunpack.c.l.b16 %v1369
    %v1450 = vpack.c.b16 %v1405, %v1402
    %v1451 = vpack.c.b16 %v1406, %v1403
    %v1452 = vpack.c.b16 %v1407, %v1404
    %v1453 = vpack.c.b16 %v1411, %v1408
    %v1454 = vpack.c.b16 %v1412, %v1409
    %v1455 = vpack.c.b16 %v1413, %v1410
    %v1456 = vpack.c.b16 %v1417, %v1414
    %v1457 = vpack.c.b16 %v1418, %v1415
    %v1458 = vpack.c.b16 %v1419, %v1416
    %v1459 = vpack.c.b16 %v1423, %v1420
    %v1460 = vpack.c.b16 %v1424, %v1421
    %v1461 = vpack.c.b16 %v1425, %v1422
    %v1462 = vpack.c.b16 %v1429, %v1426
    %v1463 = vpack.c.b16 %v1430, %v1427
    %v1464 = vpack.c.b16 %v1431, %v1428
    %v1465 = vpack.c.b16 %v1435, %v1432
    %v1466 = vpack.c.b16 %v1436, %v1433
    %v1467 = vpack.c.b16 %v1437, %v1434
    %v1468 = vpack.c.b16 %v1441, %v1438
    %v1469 = vpack.c.b16 %v1442, %v1439
    %v1470 = vpack.c.b16 %v1443, %v1440
    %v1471 = vpack.c.b16 %v1447, %v1444
    %v1472 = vpack.c.b16 %v1448, %v1445
    %v1473 = vpack.c.b16 %v1449, %v1446
    %1498 = vmatpush.bf16.msra.mxu0 %v1471
    %1499 = vmatpush.bf16.msra.mxu0 %v1468
    %1500 = vmatpush.bf16.msra.mxu0 %v1465
    %1501 = vmatpush.bf16.msra.mxu0 %v1462
    %1502 = vmatpush.bf16.msra.mxu0 %v1459
    %1503 = vmatpush.bf16.msra.mxu0 %v1456
    %1504 = vmatpush.bf16.msra.mxu0 %v1453
    %1505 = vmatpush.bf16.msra.mxu0 %v1450
    %1506 = vmatmul.bf16.gmra.mxu0 %v1337
    %v1507 = vpop.f32.mrf.mxu0
    %v1508 = vadd.f32 %v691, %v1507
    %v1509 = vpop.f32.mrf.mxu0
    %v1510 = vadd.f32 %v691, %v1509
    %1511 = vdwg.mxu0
    %1512 = vmatpush.bf16.msra.mxu0 %v1472
    %1513 = vmatpush.bf16.msra.mxu0 %v1469
    %1514 = vmatpush.bf16.msra.mxu0 %v1466
    %1515 = vmatpush.bf16.msra.mxu0 %v1463
    %1516 = vmatpush.bf16.msra.mxu0 %v1460
    %1517 = vmatpush.bf16.msra.mxu0 %v1457
    %1518 = vmatpush.bf16.msra.mxu0 %v1454
    %1519 = vmatpush.bf16.msra.mxu0 %v1451
    %1520 = vmatmul.bf16.gmra.mxu0 %v1337
    %v1521 = vpop.f32.mrf.mxu0
    %v1522 = vadd.f32 %v692, %v1521
    %v1523 = vpop.f32.mrf.mxu0
    %v1524 = vadd.f32 %v692, %v1523
    %1525 = vdwg.mxu0
    %1526 = vmatpush.bf16.msra.mxu0 %v1473
    %1527 = vmatpush.bf16.msra.mxu0 %v1470
    %1528 = vmatpush.bf16.msra.mxu0 %v1467
    %1529 = vmatpush.bf16.msra.mxu0 %v1464
    %1530 = vmatpush.bf16.msra.mxu0 %v1461
    %1531 = vmatpush.bf16.msra.mxu0 %v1458
    %1532 = vmatpush.bf16.msra.mxu0 %v1455
    %1533 = vmatpush.bf16.msra.mxu0 %v1452
    %1534 = vmatmul.bf16.gmra.mxu0 %v1337
    %v1535 = vpop.f32.mrf.mxu0
    %v1536 = vadd.f32 %v693, %v1535
    %v1537 = vpop.f32.mrf.mxu0
    %v1538 = vadd.f32 %v693, %v1537
    %1539 = vdwg.mxu0
    %v1540 = vadd.f32 %v1331, %v1508
    %v1541 = vadd.f32 %v1334, %v1510
    %v1542 = vxor.u32 %v1540, 2147483648
    %v1543 = vxor.u32 %v1541, 2147483648
    %v1544 = vmul.f32 %v1542, 1.442695
    %v1545 = vpow.pop %v1544
    %v1546 = vmul.f32 %v1543, 1.442695
    %v1547 = vpow.pop %v1546
    %v1548 = vadd.f32 %v1545, 1.0
    %v1549 = vadd.f32 %v1547, 1.0
    %v1550 = vrcp.pop %v1548
    %v1551 = vmul.f32 %v1548, %v1550
    %v1552 = vsub.f32 1.0, %v1551
    %v1553 = vmul.f32 %v1550, %v1552
    %v1554 = vadd.f32 %v1550, %v1553
    %vm1555 = vweird.f32 %v1548
    %vm1556 = vweird.f32 %v1550
    %vm1557 = vmor %vm1555, %vm1556
    %v1558 = vsel %vm1557, %v1550, %v1554
    %v1559 = vand.u32 2147483647, %v1548
    %vm1560 = vcmp.eq.f32.partialorder %v1559, 8.507059e+37
    %v1561 = vand.u32 %v1548, 2147483648
    %v1562 = vor.u32 1.1754944e-38, %v1561
    %v1563 = vsel %vm1560, %v1562, %v1558
    %v1564 = vmul.f32 1.0, %v1563
    %v1565 = vrcp.pop %v1549
    %v1566 = vmul.f32 %v1549, %v1565
    %v1567 = vsub.f32 1.0, %v1566
    %v1568 = vmul.f32 %v1565, %v1567
    %v1569 = vadd.f32 %v1565, %v1568
    %vm1570 = vweird.f32 %v1549
    %vm1571 = vweird.f32 %v1565
    %vm1572 = vmor %vm1570, %vm1571
    %v1573 = vsel %vm1572, %v1565, %v1569
    %v1574 = vand.u32 2147483647, %v1549
    %vm1575 = vcmp.eq.f32.partialorder %v1574, 8.507059e+37
    %v1576 = vand.u32 %v1549, 2147483648
    %v1577 = vor.u32 1.1754944e-38, %v1576
    %v1578 = vsel %vm1575, %v1577, %v1573
    %v1579 = vmul.f32 1.0, %v1578
    %v1580 = vadd.f32 %v1332, %v1522
    %v1581 = vadd.f32 %v1335, %v1524
    %v1582 = vxor.u32 %v1580, 2147483648
    %v1583 = vxor.u32 %v1581, 2147483648
    %v1584 = vmul.f32 %v1582, 1.442695
    %v1585 = vpow.pop %v1584
    %v1586 = vmul.f32 %v1583, 1.442695
    %v1587 = vpow.pop %v1586
    %v1588 = vadd.f32 %v1585, 1.0
    %v1589 = vadd.f32 %v1587, 1.0
    %v1590 = vrcp.pop %v1588
    %v1591 = vmul.f32 %v1588, %v1590
    %v1592 = vsub.f32 1.0, %v1591
    %v1593 = vmul.f32 %v1590, %v1592
    %v1594 = vadd.f32 %v1590, %v1593
    %vm1595 = vweird.f32 %v1588
    %vm1596 = vweird.f32 %v1590
    %vm1597 = vmor %vm1595, %vm1596
    %v1598 = vsel %vm1597, %v1590, %v1594
    %v1599 = vand.u32 2147483647, %v1588
    %vm1600 = vcmp.eq.f32.partialorder %v1599, 8.507059e+37
    %v1601 = vand.u32 %v1588, 2147483648
    %v1602 = vor.u32 1.1754944e-38, %v1601
    %v1603 = vsel %vm1600, %v1602, %v1598
    %v1604 = vmul.f32 1.0, %v1603
    %v1605 = vrcp.pop %v1589
    %v1606 = vmul.f32 %v1589, %v1605
    %v1607 = vsub.f32 1.0, %v1606
    %v1608 = vmul.f32 %v1605, %v1607
    %v1609 = vadd.f32 %v1605, %v1608
    %vm1610 = vweird.f32 %v1589
    %vm1611 = vweird.f32 %v1605
    %vm1612 = vmor %vm1610, %vm1611
    %v1613 = vsel %vm1612, %v1605, %v1609
    %v1614 = vand.u32 2147483647, %v1589
    %vm1615 = vcmp.eq.f32.partialorder %v1614, 8.507059e+37
    %v1616 = vand.u32 %v1589, 2147483648
    %v1617 = vor.u32 1.1754944e-38, %v1616
    %v1618 = vsel %vm1615, %v1617, %v1613
    %v1619 = vmul.f32 1.0, %v1618
    %v1620 = vmul.f32 %v1564, %v1536
    %v1621 = vmul.f32 %v1579, %v1538
    %v1622 = vadd.f32 %v1333, %v1620
    %v1623 = vadd.f32 %v1336, %v1621
    %v1624 = vtanh.pop %v1622
    %v1625 = vtanh.pop %v1623
    %v1626 = vsub.f32 1.0, %v1604
    %v1627 = vsub.f32 1.0, %v1619
    %v1628 = vmul.f32 %v1626, %v1624
    %v1629 = vmul.f32 %v1627, %v1625
    %v1630 = vmul.f32 %v1604, %v1326
    %v1631 = vmul.f32 %v1619, %v1327
    %v1632 = vadd.f32 %v1628, %v1630
    %v1633 = vadd.f32 %v1629, %v1631
    %1634 = vst [vmem:[#allocation4] sm:$0xff] %v1632
    %1635 = vst [vmem:[#allocation4 + $0x8] sm:$0xff] %v1633
    %s1636 = scalar_lea.vmem [#allocation3], 32
    %1637 = vst [vmem:[%s1636] sm:$0xff] %v1632
    %1638 = vst [vmem:[%s1636 + $0x8] sm:$0xff] %v1633
    %v1639 = vld [vmem:[#allocation4] sm:$0xff]
    %v1640 = vld [vmem:[#allocation4 + $0x8] sm:$0xff]
    %s1641 = smul.u32 6, 3
    %s1642 = smul.addr %s1641, 8
    %s1643 = scalar_lea.vmem [#allocation2], %s1642
    %v1644 = vld [vmem:[%s1643] sm:$0xff]
    %v1645 = vld [vmem:[%s1643 + $0x8] sm:$0xff]
    %v1646 = vld [vmem:[%s1643 + $0x10] sm:$0xff]
    %v1647 = vld [vmem:[%s1643 + $0x18] sm:$0xff]
    %v1648 = vld [vmem:[%s1643 + $0x20] sm:$0xff]
    %v1649 = vld [vmem:[%s1643 + $0x28] sm:$0xff]
    %v1650 = vpack.c.bf16 %v1640, %v1639
    %v1651 = vld [vmem:[#allocation8] sm:$0xff]
    %v1652 = vld [vmem:[#allocation8 + $0x8] sm:$0xf]
    %v1653 = vld [vmem:[#allocation8 + $0xc] sm:$0xff]
    %v1654 = vld [vmem:[#allocation8 + $0x14] sm:$0xf]
    %v1655 = vld [vmem:[#allocation8 + $0x18] sm:$0xff]
    %v1656 = vld [vmem:[#allocation8 + $0x20] sm:$0xf]
    %v1657 = vld [vmem:[#allocation8 + $0x24] sm:$0xff]
    %v1658 = vld [vmem:[#allocation8 + $0x2c] sm:$0xf]
    %v1659 = vld [vmem:[#allocation8 + $0x30] sm:$0xff]
    %v1660 = vld [vmem:[#allocation8 + $0x38] sm:$0xf]
    %v1661 = vld [vmem:[#allocation8 + $0x3c] sm:$0xff]
    %v1662 = vld [vmem:[#allocation8 + $0x44] sm:$0xf]
    %v1663 = vld [vmem:[#allocation8 + $0x48] sm:$0xff]
    %v1664 = vld [vmem:[#allocation8 + $0x50] sm:$0xf]
    %v1665 = vld [vmem:[#allocation8 + $0x54] sm:$0xff]
    %v1666 = vld [vmem:[#allocation8 + $0x5c] sm:$0xf]
    %v1667 = vld [vmem:[#allocation8 + $0x60] sm:$0xff]
    %v1668 = vld [vmem:[#allocation8 + $0x68] sm:$0xf]
    %v1669 = vld [vmem:[#allocation8 + $0x6c] sm:$0xff]
    %v1670 = vld [vmem:[#allocation8 + $0x74] sm:$0xf]
    %v1671 = vld [vmem:[#allocation8 + $0x78] sm:$0xff]
    %v1672 = vld [vmem:[#allocation8 + $0x80] sm:$0xf]
    %v1673 = vld [vmem:[#allocation8 + $0x84] sm:$0xff]
    %v1674 = vld [vmem:[#allocation8 + $0x8c] sm:$0xf]
    %v1675 = vld [vmem:[#allocation8 + $0x90] sm:$0xff]
    %v1676 = vld [vmem:[#allocation8 + $0x98] sm:$0xf]
    %v1677 = vld [vmem:[#allocation8 + $0x9c] sm:$0xff]
    %v1678 = vld [vmem:[#allocation8 + $0xa4] sm:$0xf]
    %v1679 = vld [vmem:[#allocation8 + $0xa8] sm:$0xff]
    %v1680 = vld [vmem:[#allocation8 + $0xb0] sm:$0xf]
    %v1681 = vld [vmem:[#allocation8 + $0xb4] sm:$0xff]
    %v1682 = vld [vmem:[#allocation8 + $0xbc] sm:$0xf]
    %v1715 = vunpack.c.l.b16 %v1651
    %v1716 = vunpack.c.h.b16 %v1651
    %v1717 = vunpack.c.l.b16 %v1652
    %v1718 = vunpack.c.l.b16 %v1653
    %v1719 = vunpack.c.h.b16 %v1653
    %v1720 = vunpack.c.l.b16 %v1654
    %v1721 = vunpack.c.l.b16 %v1655
    %v1722 = vunpack.c.h.b16 %v1655
    %v1723 = vunpack.c.l.b16 %v1656
    %v1724 = vunpack.c.l.b16 %v1657
    %v1725 = vunpack.c.h.b16 %v1657
    %v1726 = vunpack.c.l.b16 %v1658
    %v1727 = vunpack.c.l.b16 %v1659
    %v1728 = vunpack.c.h.b16 %v1659
    %v1729 = vunpack.c.l.b16 %v1660
    %v1730 = vunpack.c.l.b16 %v1661
    %v1731 = vunpack.c.h.b16 %v1661
    %v1732 = vunpack.c.l.b16 %v1662
    %v1733 = vunpack.c.l.b16 %v1663
    %v1734 = vunpack.c.h.b16 %v1663
    %v1735 = vunpack.c.l.b16 %v1664
    %v1736 = vunpack.c.l.b16 %v1665
    %v1737 = vunpack.c.h.b16 %v1665
    %v1738 = vunpack.c.l.b16 %v1666
    %v1739 = vunpack.c.l.b16 %v1667
    %v1740 = vunpack.c.h.b16 %v1667
    %v1741 = vunpack.c.l.b16 %v1668
    %v1742 = vunpack.c.l.b16 %v1669
    %v1743 = vunpack.c.h.b16 %v1669
    %v1744 = vunpack.c.l.b16 %v1670
    %v1745 = vunpack.c.l.b16 %v1671
    %v1746 = vunpack.c.h.b16 %v1671
    %v1747 = vunpack.c.l.b16 %v1672
    %v1748 = vunpack.c.l.b16 %v1673
    %v1749 = vunpack.c.h.b16 %v1673
    %v1750 = vunpack.c.l.b16 %v1674
    %v1751 = vunpack.c.l.b16 %v1675
    %v1752 = vunpack.c.h.b16 %v1675
    %v1753 = vunpack.c.l.b16 %v1676
    %v1754 = vunpack.c.l.b16 %v1677
    %v1755 = vunpack.c.h.b16 %v1677
    %v1756 = vunpack.c.l.b16 %v1678
    %v1757 = vunpack.c.l.b16 %v1679
    %v1758 = vunpack.c.h.b16 %v1679
    %v1759 = vunpack.c.l.b16 %v1680
    %v1760 = vunpack.c.l.b16 %v1681
    %v1761 = vunpack.c.h.b16 %v1681
    %v1762 = vunpack.c.l.b16 %v1682
    %v1763 = vpack.c.b16 %v1718, %v1715
    %v1764 = vpack.c.b16 %v1719, %v1716
    %v1765 = vpack.c.b16 %v1720, %v1717
    %v1766 = vpack.c.b16 %v1724, %v1721
    %v1767 = vpack.c.b16 %v1725, %v1722
    %v1768 = vpack.c.b16 %v1726, %v1723
    %v1769 = vpack.c.b16 %v1730, %v1727
    %v1770 = vpack.c.b16 %v1731, %v1728
    %v1771 = vpack.c.b16 %v1732, %v1729
    %v1772 = vpack.c.b16 %v1736, %v1733
    %v1773 = vpack.c.b16 %v1737, %v1734
    %v1774 = vpack.c.b16 %v1738, %v1735
    %v1775 = vpack.c.b16 %v1742, %v1739
    %v1776 = vpack.c.b16 %v1743, %v1740
    %v1777 = vpack.c.b16 %v1744, %v1741
    %v1778 = vpack.c.b16 %v1748, %v1745
    %v1779 = vpack.c.b16 %v1749, %v1746
    %v1780 = vpack.c.b16 %v1750, %v1747
    %v1781 = vpack.c.b16 %v1754, %v1751
    %v1782 = vpack.c.b16 %v1755, %v1752
    %v1783 = vpack.c.b16 %v1756, %v1753
    %v1784 = vpack.c.b16 %v1760, %v1757
    %v1785 = vpack.c.b16 %v1761, %v1758
    %v1786 = vpack.c.b16 %v1762, %v1759
    %1811 = vmatpush.bf16.msra.mxu0 %v1784
    %1812 = vmatpush.bf16.msra.mxu0 %v1781
    %1813 = vmatpush.bf16.msra.mxu0 %v1778
    %1814 = vmatpush.bf16.msra.mxu0 %v1775
    %1815 = vmatpush.bf16.msra.mxu0 %v1772
    %1816 = vmatpush.bf16.msra.mxu0 %v1769
    %1817 = vmatpush.bf16.msra.mxu0 %v1766
    %1818 = vmatpush.bf16.msra.mxu0 %v1763
    %1819 = vmatmul.bf16.gmra.mxu0 %v1650
    %v1820 = vpop.f32.mrf.mxu0
    %v1821 = vadd.f32 %v691, %v1820
    %v1822 = vpop.f32.mrf.mxu0
    %v1823 = vadd.f32 %v691, %v1822
    %1824 = vdwg.mxu0
    %1825 = vmatpush.bf16.msra.mxu0 %v1785
    %1826 = vmatpush.bf16.msra.mxu0 %v1782
    %1827 = vmatpush.bf16.msra.mxu0 %v1779
    %1828 = vmatpush.bf16.msra.mxu0 %v1776
    %1829 = vmatpush.bf16.msra.mxu0 %v1773
    %1830 = vmatpush.bf16.msra.mxu0 %v1770
    %1831 = vmatpush.bf16.msra.mxu0 %v1767
    %1832 = vmatpush.bf16.msra.mxu0 %v1764
    %1833 = vmatmul.bf16.gmra.mxu0 %v1650
    %v1834 = vpop.f32.mrf.mxu0
    %v1835 = vadd.f32 %v692, %v1834
    %v1836 = vpop.f32.mrf.mxu0
    %v1837 = vadd.f32 %v692, %v1836
    %1838 = vdwg.mxu0
    %1839 = vmatpush.bf16.msra.mxu0 %v1786
    %1840 = vmatpush.bf16.msra.mxu0 %v1783
    %1841 = vmatpush.bf16.msra.mxu0 %v1780
    %1842 = vmatpush.bf16.msra.mxu0 %v1777
    %1843 = vmatpush.bf16.msra.mxu0 %v1774
    %1844 = vmatpush.bf16.msra.mxu0 %v1771
    %1845 = vmatpush.bf16.msra.mxu0 %v1768
    %1846 = vmatpush.bf16.msra.mxu0 %v1765
    %1847 = vmatmul.bf16.gmra.mxu0 %v1650
    %v1848 = vpop.f32.mrf.mxu0
    %v1849 = vadd.f32 %v693, %v1848
    %v1850 = vpop.f32.mrf.mxu0
    %v1851 = vadd.f32 %v693, %v1850
    %1852 = vdwg.mxu0
    %v1853 = vadd.f32 %v1644, %v1821
    %v1854 = vadd.f32 %v1647, %v1823
    %v1855 = vxor.u32 %v1853, 2147483648
    %v1856 = vxor.u32 %v1854, 2147483648
    %v1857 = vmul.f32 %v1855, 1.442695
    %v1858 = vpow.pop %v1857
    %v1859 = vmul.f32 %v1856, 1.442695
    %v1860 = vpow.pop %v1859
    %v1861 = vadd.f32 %v1858, 1.0
    %v1862 = vadd.f32 %v1860, 1.0
    %v1863 = vrcp.pop %v1861
    %v1864 = vmul.f32 %v1861, %v1863
    %v1865 = vsub.f32 1.0, %v1864
    %v1866 = vmul.f32 %v1863, %v1865
    %v1867 = vadd.f32 %v1863, %v1866
    %vm1868 = vweird.f32 %v1861
    %vm1869 = vweird.f32 %v1863
    %vm1870 = vmor %vm1868, %vm1869
    %v1871 = vsel %vm1870, %v1863, %v1867
    %v1872 = vand.u32 2147483647, %v1861
    %vm1873 = vcmp.eq.f32.partialorder %v1872, 8.507059e+37
    %v1874 = vand.u32 %v1861, 2147483648
    %v1875 = vor.u32 1.1754944e-38, %v1874
    %v1876 = vsel %vm1873, %v1875, %v1871
    %v1877 = vmul.f32 1.0, %v1876
    %v1878 = vrcp.pop %v1862
    %v1879 = vmul.f32 %v1862, %v1878
    %v1880 = vsub.f32 1.0, %v1879
    %v1881 = vmul.f32 %v1878, %v1880
    %v1882 = vadd.f32 %v1878, %v1881
    %vm1883 = vweird.f32 %v1862
    %vm1884 = vweird.f32 %v1878
    %vm1885 = vmor %vm1883, %vm1884
    %v1886 = vsel %vm1885, %v1878, %v1882
    %v1887 = vand.u32 2147483647, %v1862
    %vm1888 = vcmp.eq.f32.partialorder %v1887, 8.507059e+37
    %v1889 = vand.u32 %v1862, 2147483648
    %v1890 = vor.u32 1.1754944e-38, %v1889
    %v1891 = vsel %vm1888, %v1890, %v1886
    %v1892 = vmul.f32 1.0, %v1891
    %v1893 = vadd.f32 %v1645, %v1835
    %v1894 = vadd.f32 %v1648, %v1837
    %v1895 = vxor.u32 %v1893, 2147483648
    %v1896 = vxor.u32 %v1894, 2147483648
    %v1897 = vmul.f32 %v1895, 1.442695
    %v1898 = vpow.pop %v1897
    %v1899 = vmul.f32 %v1896, 1.442695
    %v1900 = vpow.pop %v1899
    %v1901 = vadd.f32 %v1898, 1.0
    %v1902 = vadd.f32 %v1900, 1.0
    %v1903 = vrcp.pop %v1901
    %v1904 = vmul.f32 %v1901, %v1903
    %v1905 = vsub.f32 1.0, %v1904
    %v1906 = vmul.f32 %v1903, %v1905
    %v1907 = vadd.f32 %v1903, %v1906
    %vm1908 = vweird.f32 %v1901
    %vm1909 = vweird.f32 %v1903
    %vm1910 = vmor %vm1908, %vm1909
    %v1911 = vsel %vm1910, %v1903, %v1907
    %v1912 = vand.u32 2147483647, %v1901
    %vm1913 = vcmp.eq.f32.partialorder %v1912, 8.507059e+37
    %v1914 = vand.u32 %v1901, 2147483648
    %v1915 = vor.u32 1.1754944e-38, %v1914
    %v1916 = vsel %vm1913, %v1915, %v1911
    %v1917 = vmul.f32 1.0, %v1916
    %v1918 = vrcp.pop %v1902
    %v1919 = vmul.f32 %v1902, %v1918
    %v1920 = vsub.f32 1.0, %v1919
    %v1921 = vmul.f32 %v1918, %v1920
    %v1922 = vadd.f32 %v1918, %v1921
    %vm1923 = vweird.f32 %v1902
    %vm1924 = vweird.f32 %v1918
    %vm1925 = vmor %vm1923, %vm1924
    %v1926 = vsel %vm1925, %v1918, %v1922
    %v1927 = vand.u32 2147483647, %v1902
    %vm1928 = vcmp.eq.f32.partialorder %v1927, 8.507059e+37
    %v1929 = vand.u32 %v1902, 2147483648
    %v1930 = vor.u32 1.1754944e-38, %v1929
    %v1931 = vsel %vm1928, %v1930, %v1926
    %v1932 = vmul.f32 1.0, %v1931
    %v1933 = vmul.f32 %v1877, %v1849
    %v1934 = vmul.f32 %v1892, %v1851
    %v1935 = vadd.f32 %v1646, %v1933
    %v1936 = vadd.f32 %v1649, %v1934
    %v1937 = vtanh.pop %v1935
    %v1938 = vtanh.pop %v1936
    %v1939 = vsub.f32 1.0, %v1917
    %v1940 = vsub.f32 1.0, %v1932
    %v1941 = vmul.f32 %v1939, %v1937
    %v1942 = vmul.f32 %v1940, %v1938
    %v1943 = vmul.f32 %v1917, %v1639
    %v1944 = vmul.f32 %v1932, %v1640
    %v1945 = vadd.f32 %v1941, %v1943
    %v1946 = vadd.f32 %v1942, %v1944
    %1947 = vst [vmem:[#allocation4] sm:$0xff] %v1945
    %1948 = vst [vmem:[#allocation4 + $0x8] sm:$0xff] %v1946
    %s1949 = scalar_lea.vmem [#allocation3], 48
    %1950 = vst [vmem:[%s1949] sm:$0xff] %v1945
    %1951 = vst [vmem:[%s1949 + $0x8] sm:$0xff] %v1946
    %v1952 = vld [vmem:[#allocation4] sm:$0xff]
    %v1953 = vld [vmem:[#allocation4 + $0x8] sm:$0xff]
    %s1954 = smul.u32 8, 3
    %s1955 = smul.addr %s1954, 8
    %s1956 = scalar_lea.vmem [#allocation2], %s1955
    %v1957 = vld [vmem:[%s1956] sm:$0xff]
    %v1958 = vld [vmem:[%s1956 + $0x8] sm:$0xff]
    %v1959 = vld [vmem:[%s1956 + $0x10] sm:$0xff]
    %v1960 = vld [vmem:[%s1956 + $0x18] sm:$0xff]
    %v1961 = vld [vmem:[%s1956 + $0x20] sm:$0xff]
    %v1962 = vld [vmem:[%s1956 + $0x28] sm:$0xff]
    %v1963 = vpack.c.bf16 %v1953, %v1952
    %v1964 = vld [vmem:[#allocation8] sm:$0xff]
    %v1965 = vld [vmem:[#allocation8 + $0x8] sm:$0xf]
    %v1966 = vld [vmem:[#allocation8 + $0xc] sm:$0xff]
    %v1967 = vld [vmem:[#allocation8 + $0x14] sm:$0xf]
    %v1968 = vld [vmem:[#allocation8 + $0x18] sm:$0xff]
    %v1969 = vld [vmem:[#allocation8 + $0x20] sm:$0xf]
    %v1970 = vld [vmem:[#allocation8 + $0x24] sm:$0xff]
    %v1971 = vld [vmem:[#allocation8 + $0x2c] sm:$0xf]
    %v1972 = vld [vmem:[#allocation8 + $0x30] sm:$0xff]
    %v1973 = vld [vmem:[#allocation8 + $0x38] sm:$0xf]
    %v1974 = vld [vmem:[#allocation8 + $0x3c] sm:$0xff]
    %v1975 = vld [vmem:[#allocation8 + $0x44] sm:$0xf]
    %v1976 = vld [vmem:[#allocation8 + $0x48] sm:$0xff]
    %v1977 = vld [vmem:[#allocation8 + $0x50] sm:$0xf]
    %v1978 = vld [vmem:[#allocation8 + $0x54] sm:$0xff]
    %v1979 = vld [vmem:[#allocation8 + $0x5c] sm:$0xf]
    %v1980 = vld [vmem:[#allocation8 + $0x60] sm:$0xff]
    %v1981 = vld [vmem:[#allocation8 + $0x68] sm:$0xf]
    %v1982 = vld [vmem:[#allocation8 + $0x6c] sm:$0xff]
    %v1983 = vld [vmem:[#allocation8 + $0x74] sm:$0xf]
    %v1984 = vld [vmem:[#allocation8 + $0x78] sm:$0xff]
    %v1985 = vld [vmem:[#allocation8 + $0x80] sm:$0xf]
    %v1986 = vld [vmem:[#allocation8 + $0x84] sm:$0xff]
    %v1987 = vld [vmem:[#allocation8 + $0x8c] sm:$0xf]
    %v1988 = vld [vmem:[#allocation8 + $0x90] sm:$0xff]
    %v1989 = vld [vmem:[#allocation8 + $0x98] sm:$0xf]
    %v1990 = vld [vmem:[#allocation8 + $0x9c] sm:$0xff]
    %v1991 = vld [vmem:[#allocation8 + $0xa4] sm:$0xf]
    %v1992 = vld [vmem:[#allocation8 + $0xa8] sm:$0xff]
    %v1993 = vld [vmem:[#allocation8 + $0xb0] sm:$0xf]
    %v1994 = vld [vmem:[#allocation8 + $0xb4] sm:$0xff]
    %v1995 = vld [vmem:[#allocation8 + $0xbc] sm:$0xf]
    %v2028 = vunpack.c.l.b16 %v1964
    %v2029 = vunpack.c.h.b16 %v1964
    %v2030 = vunpack.c.l.b16 %v1965
    %v2031 = vunpack.c.l.b16 %v1966
    %v2032 = vunpack.c.h.b16 %v1966
    %v2033 = vunpack.c.l.b16 %v1967
    %v2034 = vunpack.c.l.b16 %v1968
    %v2035 = vunpack.c.h.b16 %v1968
    %v2036 = vunpack.c.l.b16 %v1969
    %v2037 = vunpack.c.l.b16 %v1970
    %v2038 = vunpack.c.h.b16 %v1970
    %v2039 = vunpack.c.l.b16 %v1971
    %v2040 = vunpack.c.l.b16 %v1972
    %v2041 = vunpack.c.h.b16 %v1972
    %v2042 = vunpack.c.l.b16 %v1973
    %v2043 = vunpack.c.l.b16 %v1974
    %v2044 = vunpack.c.h.b16 %v1974
    %v2045 = vunpack.c.l.b16 %v1975
    %v2046 = vunpack.c.l.b16 %v1976
    %v2047 = vunpack.c.h.b16 %v1976
    %v2048 = vunpack.c.l.b16 %v1977
    %v2049 = vunpack.c.l.b16 %v1978
    %v2050 = vunpack.c.h.b16 %v1978
    %v2051 = vunpack.c.l.b16 %v1979
    %v2052 = vunpack.c.l.b16 %v1980
    %v2053 = vunpack.c.h.b16 %v1980
    %v2054 = vunpack.c.l.b16 %v1981
    %v2055 = vunpack.c.l.b16 %v1982
    %v2056 = vunpack.c.h.b16 %v1982
    %v2057 = vunpack.c.l.b16 %v1983
    %v2058 = vunpack.c.l.b16 %v1984
    %v2059 = vunpack.c.h.b16 %v1984
    %v2060 = vunpack.c.l.b16 %v1985
    %v2061 = vunpack.c.l.b16 %v1986
    %v2062 = vunpack.c.h.b16 %v1986
    %v2063 = vunpack.c.l.b16 %v1987
    %v2064 = vunpack.c.l.b16 %v1988
    %v2065 = vunpack.c.h.b16 %v1988
    %v2066 = vunpack.c.l.b16 %v1989
    %v2067 = vunpack.c.l.b16 %v1990
    %v2068 = vunpack.c.h.b16 %v1990
    %v2069 = vunpack.c.l.b16 %v1991
    %v2070 = vunpack.c.l.b16 %v1992
    %v2071 = vunpack.c.h.b16 %v1992
    %v2072 = vunpack.c.l.b16 %v1993
    %v2073 = vunpack.c.l.b16 %v1994
    %v2074 = vunpack.c.h.b16 %v1994
    %v2075 = vunpack.c.l.b16 %v1995
    %v2076 = vpack.c.b16 %v2031, %v2028
    %v2077 = vpack.c.b16 %v2032, %v2029
    %v2078 = vpack.c.b16 %v2033, %v2030
    %v2079 = vpack.c.b16 %v2037, %v2034
    %v2080 = vpack.c.b16 %v2038, %v2035
    %v2081 = vpack.c.b16 %v2039, %v2036
    %v2082 = vpack.c.b16 %v2043, %v2040
    %v2083 = vpack.c.b16 %v2044, %v2041
    %v2084 = vpack.c.b16 %v2045, %v2042
    %v2085 = vpack.c.b16 %v2049, %v2046
    %v2086 = vpack.c.b16 %v2050, %v2047
    %v2087 = vpack.c.b16 %v2051, %v2048
    %v2088 = vpack.c.b16 %v2055, %v2052
    %v2089 = vpack.c.b16 %v2056, %v2053
    %v2090 = vpack.c.b16 %v2057, %v2054
    %v2091 = vpack.c.b16 %v2061, %v2058
    %v2092 = vpack.c.b16 %v2062, %v2059
    %v2093 = vpack.c.b16 %v2063, %v2060
    %v2094 = vpack.c.b16 %v2067, %v2064
    %v2095 = vpack.c.b16 %v2068, %v2065
    %v2096 = vpack.c.b16 %v2069, %v2066
    %v2097 = vpack.c.b16 %v2073, %v2070
    %v2098 = vpack.c.b16 %v2074, %v2071
    %v2099 = vpack.c.b16 %v2075, %v2072
    %2124 = vmatpush.bf16.msra.mxu0 %v2097
    %2125 = vmatpush.bf16.msra.mxu0 %v2094
    %2126 = vmatpush.bf16.msra.mxu0 %v2091
    %2127 = vmatpush.bf16.msra.mxu0 %v2088
    %2128 = vmatpush.bf16.msra.mxu0 %v2085
    %2129 = vmatpush.bf16.msra.mxu0 %v2082
    %2130 = vmatpush.bf16.msra.mxu0 %v2079
    %2131 = vmatpush.bf16.msra.mxu0 %v2076
    %2132 = vmatmul.bf16.gmra.mxu0 %v1963
    %v2133 = vpop.f32.mrf.mxu0
    %v2134 = vadd.f32 %v691, %v2133
    %v2135 = vpop.f32.mrf.mxu0
    %v2136 = vadd.f32 %v691, %v2135
    %2137 = vdwg.mxu0
    %2138 = vmatpush.bf16.msra.mxu0 %v2098
    %2139 = vmatpush.bf16.msra.mxu0 %v2095
    %2140 = vmatpush.bf16.msra.mxu0 %v2092
    %2141 = vmatpush.bf16.msra.mxu0 %v2089
    %2142 = vmatpush.bf16.msra.mxu0 %v2086
    %2143 = vmatpush.bf16.msra.mxu0 %v2083
    %2144 = vmatpush.bf16.msra.mxu0 %v2080
    %2145 = vmatpush.bf16.msra.mxu0 %v2077
    %2146 = vmatmul.bf16.gmra.mxu0 %v1963
    %v2147 = vpop.f32.mrf.mxu0
    %v2148 = vadd.f32 %v692, %v2147
    %v2149 = vpop.f32.mrf.mxu0
    %v2150 = vadd.f32 %v692, %v2149
    %2151 = vdwg.mxu0
    %2152 = vmatpush.bf16.msra.mxu0 %v2099
    %2153 = vmatpush.bf16.msra.mxu0 %v2096
    %2154 = vmatpush.bf16.msra.mxu0 %v2093
    %2155 = vmatpush.bf16.msra.mxu0 %v2090
    %2156 = vmatpush.bf16.msra.mxu0 %v2087
    %2157 = vmatpush.bf16.msra.mxu0 %v2084
    %2158 = vmatpush.bf16.msra.mxu0 %v2081
    %2159 = vmatpush.bf16.msra.mxu0 %v2078
    %2160 = vmatmul.bf16.gmra.mxu0 %v1963
    %v2161 = vpop.f32.mrf.mxu0
    %v2162 = vadd.f32 %v693, %v2161
    %v2163 = vpop.f32.mrf.mxu0
    %v2164 = vadd.f32 %v693, %v2163
    %2165 = vdwg.mxu0
    %v2166 = vadd.f32 %v1957, %v2134
    %v2167 = vadd.f32 %v1960, %v2136
    %v2168 = vxor.u32 %v2166, 2147483648
    %v2169 = vxor.u32 %v2167, 2147483648
    %v2170 = vmul.f32 %v2168, 1.442695
    %v2171 = vpow.pop %v2170
    %v2172 = vmul.f32 %v2169, 1.442695
    %v2173 = vpow.pop %v2172
    %v2174 = vadd.f32 %v2171, 1.0
    %v2175 = vadd.f32 %v2173, 1.0
    %v2176 = vrcp.pop %v2174
    %v2177 = vmul.f32 %v2174, %v2176
    %v2178 = vsub.f32 1.0, %v2177
    %v2179 = vmul.f32 %v2176, %v2178
    %v2180 = vadd.f32 %v2176, %v2179
    %vm2181 = vweird.f32 %v2174
    %vm2182 = vweird.f32 %v2176
    %vm2183 = vmor %vm2181, %vm2182
    %v2184 = vsel %vm2183, %v2176, %v2180
    %v2185 = vand.u32 2147483647, %v2174
    %vm2186 = vcmp.eq.f32.partialorder %v2185, 8.507059e+37
    %v2187 = vand.u32 %v2174, 2147483648
    %v2188 = vor.u32 1.1754944e-38, %v2187
    %v2189 = vsel %vm2186, %v2188, %v2184
    %v2190 = vmul.f32 1.0, %v2189
    %v2191 = vrcp.pop %v2175
    %v2192 = vmul.f32 %v2175, %v2191
    %v2193 = vsub.f32 1.0, %v2192
    %v2194 = vmul.f32 %v2191, %v2193
    %v2195 = vadd.f32 %v2191, %v2194
    %vm2196 = vweird.f32 %v2175
    %vm2197 = vweird.f32 %v2191
    %vm2198 = vmor %vm2196, %vm2197
    %v2199 = vsel %vm2198, %v2191, %v2195
    %v2200 = vand.u32 2147483647, %v2175
    %vm2201 = vcmp.eq.f32.partialorder %v2200, 8.507059e+37
    %v2202 = vand.u32 %v2175, 2147483648
    %v2203 = vor.u32 1.1754944e-38, %v2202
    %v2204 = vsel %vm2201, %v2203, %v2199
    %v2205 = vmul.f32 1.0, %v2204
    %v2206 = vadd.f32 %v1958, %v2148
    %v2207 = vadd.f32 %v1961, %v2150
    %v2208 = vxor.u32 %v2206, 2147483648
    %v2209 = vxor.u32 %v2207, 2147483648
    %v2210 = vmul.f32 %v2208, 1.442695
    %v2211 = vpow.pop %v2210
    %v2212 = vmul.f32 %v2209, 1.442695
    %v2213 = vpow.pop %v2212
    %v2214 = vadd.f32 %v2211, 1.0
    %v2215 = vadd.f32 %v2213, 1.0
    %v2216 = vrcp.pop %v2214
    %v2217 = vmul.f32 %v2214, %v2216
    %v2218 = vsub.f32 1.0, %v2217
    %v2219 = vmul.f32 %v2216, %v2218
    %v2220 = vadd.f32 %v2216, %v2219
    %vm2221 = vweird.f32 %v2214
    %vm2222 = vweird.f32 %v2216
    %vm2223 = vmor %vm2221, %vm2222
    %v2224 = vsel %vm2223, %v2216, %v2220
    %v2225 = vand.u32 2147483647, %v2214
    %vm2226 = vcmp.eq.f32.partialorder %v2225, 8.507059e+37
    %v2227 = vand.u32 %v2214, 2147483648
    %v2228 = vor.u32 1.1754944e-38, %v2227
    %v2229 = vsel %vm2226, %v2228, %v2224
    %v2230 = vmul.f32 1.0, %v2229
    %v2231 = vrcp.pop %v2215
    %v2232 = vmul.f32 %v2215, %v2231
    %v2233 = vsub.f32 1.0, %v2232
    %v2234 = vmul.f32 %v2231, %v2233
    %v2235 = vadd.f32 %v2231, %v2234
    %vm2236 = vweird.f32 %v2215
    %vm2237 = vweird.f32 %v2231
    %vm2238 = vmor %vm2236, %vm2237
    %v2239 = vsel %vm2238, %v2231, %v2235
    %v2240 = vand.u32 2147483647, %v2215
    %vm2241 = vcmp.eq.f32.partialorder %v2240, 8.507059e+37
    %v2242 = vand.u32 %v2215, 2147483648
    %v2243 = vor.u32 1.1754944e-38, %v2242
    %v2244 = vsel %vm2241, %v2243, %v2239
    %v2245 = vmul.f32 1.0, %v2244
    %v2246 = vmul.f32 %v2190, %v2162
    %v2247 = vmul.f32 %v2205, %v2164
    %v2248 = vadd.f32 %v1959, %v2246
    %v2249 = vadd.f32 %v1962, %v2247
    %v2250 = vtanh.pop %v2248
    %v2251 = vtanh.pop %v2249
    %v2252 = vsub.f32 1.0, %v2230
    %v2253 = vsub.f32 1.0, %v2245
    %v2254 = vmul.f32 %v2252, %v2250
    %v2255 = vmul.f32 %v2253, %v2251
    %v2256 = vmul.f32 %v2230, %v1952
    %v2257 = vmul.f32 %v2245, %v1953
    %v2258 = vadd.f32 %v2254, %v2256
    %v2259 = vadd.f32 %v2255, %v2257
    %2260 = vst [vmem:[#allocation4] sm:$0xff] %v2258
    %2261 = vst [vmem:[#allocation4 + $0x8] sm:$0xff] %v2259
    %s2262 = scalar_lea.vmem [#allocation3], 64
    %2263 = vst [vmem:[%s2262] sm:$0xff] %v2258
    %2264 = vst [vmem:[%s2262 + $0x8] sm:$0xff] %v2259
    %v2265 = vld [vmem:[#allocation4] sm:$0xff]
    %v2266 = vld [vmem:[#allocation4 + $0x8] sm:$0xff]
    %s2267 = smul.u32 10, 3
    %s2268 = smul.addr %s2267, 8
    %s2269 = scalar_lea.vmem [#allocation2], %s2268
    %v2270 = vld [vmem:[%s2269] sm:$0xff]
    %v2271 = vld [vmem:[%s2269 + $0x8] sm:$0xff]
    %v2272 = vld [vmem:[%s2269 + $0x10] sm:$0xff]
    %v2273 = vld [vmem:[%s2269 + $0x18] sm:$0xff]
    %v2274 = vld [vmem:[%s2269 + $0x20] sm:$0xff]
    %v2275 = vld [vmem:[%s2269 + $0x28] sm:$0xff]
    %v2276 = vpack.c.bf16 %v2266, %v2265
    %v2277 = vld [vmem:[#allocation8] sm:$0xff]
    %v2278 = vld [vmem:[#allocation8 + $0x8] sm:$0xf]
    %v2279 = vld [vmem:[#allocation8 + $0xc] sm:$0xff]
    %v2280 = vld [vmem:[#allocation8 + $0x14] sm:$0xf]
    %v2281 = vld [vmem:[#allocation8 + $0x18] sm:$0xff]
    %v2282 = vld [vmem:[#allocation8 + $0x20] sm:$0xf]
    %v2283 = vld [vmem:[#allocation8 + $0x24] sm:$0xff]
    %v2284 = vld [vmem:[#allocation8 + $0x2c] sm:$0xf]
    %v2285 = vld [vmem:[#allocation8 + $0x30] sm:$0xff]
    %v2286 = vld [vmem:[#allocation8 + $0x38] sm:$0xf]
    %v2287 = vld [vmem:[#allocation8 + $0x3c] sm:$0xff]
    %v2288 = vld [vmem:[#allocation8 + $0x44] sm:$0xf]
    %v2289 = vld [vmem:[#allocation8 + $0x48] sm:$0xff]
    %v2290 = vld [vmem:[#allocation8 + $0x50] sm:$0xf]
    %v2291 = vld [vmem:[#allocation8 + $0x54] sm:$0xff]
    %v2292 = vld [vmem:[#allocation8 + $0x5c] sm:$0xf]
    %v2293 = vld [vmem:[#allocation8 + $0x60] sm:$0xff]
    %v2294 = vld [vmem:[#allocation8 + $0x68] sm:$0xf]
    %v2295 = vld [vmem:[#allocation8 + $0x6c] sm:$0xff]
    %v2296 = vld [vmem:[#allocation8 + $0x74] sm:$0xf]
    %v2297 = vld [vmem:[#allocation8 + $0x78] sm:$0xff]
    %v2298 = vld [vmem:[#allocation8 + $0x80] sm:$0xf]
    %v2299 = vld [vmem:[#allocation8 + $0x84] sm:$0xff]
    %v2300 = vld [vmem:[#allocation8 + $0x8c] sm:$0xf]
    %v2301 = vld [vmem:[#allocation8 + $0x90] sm:$0xff]
    %v2302 = vld [vmem:[#allocation8 + $0x98] sm:$0xf]
    %v2303 = vld [vmem:[#allocation8 + $0x9c] sm:$0xff]
    %v2304 = vld [vmem:[#allocation8 + $0xa4] sm:$0xf]
    %v2305 = vld [vmem:[#allocation8 + $0xa8] sm:$0xff]
    %v2306 = vld [vmem:[#allocation8 + $0xb0] sm:$0xf]
    %v2307 = vld [vmem:[#allocation8 + $0xb4] sm:$0xff]
    %v2308 = vld [vmem:[#allocation8 + $0xbc] sm:$0xf]
    %v2341 = vunpack.c.l.b16 %v2277
    %v2342 = vunpack.c.h.b16 %v2277
    %v2343 = vunpack.c.l.b16 %v2278
    %v2344 = vunpack.c.l.b16 %v2279
    %v2345 = vunpack.c.h.b16 %v2279
    %v2346 = vunpack.c.l.b16 %v2280
    %v2347 = vunpack.c.l.b16 %v2281
    %v2348 = vunpack.c.h.b16 %v2281
    %v2349 = vunpack.c.l.b16 %v2282
    %v2350 = vunpack.c.l.b16 %v2283
    %v2351 = vunpack.c.h.b16 %v2283
    %v2352 = vunpack.c.l.b16 %v2284
    %v2353 = vunpack.c.l.b16 %v2285
    %v2354 = vunpack.c.h.b16 %v2285
    %v2355 = vunpack.c.l.b16 %v2286
    %v2356 = vunpack.c.l.b16 %v2287
    %v2357 = vunpack.c.h.b16 %v2287
    %v2358 = vunpack.c.l.b16 %v2288
    %v2359 = vunpack.c.l.b16 %v2289
    %v2360 = vunpack.c.h.b16 %v2289
    %v2361 = vunpack.c.l.b16 %v2290
    %v2362 = vunpack.c.l.b16 %v2291
    %v2363 = vunpack.c.h.b16 %v2291
    %v2364 = vunpack.c.l.b16 %v2292
    %v2365 = vunpack.c.l.b16 %v2293
    %v2366 = vunpack.c.h.b16 %v2293
    %v2367 = vunpack.c.l.b16 %v2294
    %v2368 = vunpack.c.l.b16 %v2295
    %v2369 = vunpack.c.h.b16 %v2295
    %v2370 = vunpack.c.l.b16 %v2296
    %v2371 = vunpack.c.l.b16 %v2297
    %v2372 = vunpack.c.h.b16 %v2297
    %v2373 = vunpack.c.l.b16 %v2298
    %v2374 = vunpack.c.l.b16 %v2299
    %v2375 = vunpack.c.h.b16 %v2299
    %v2376 = vunpack.c.l.b16 %v2300
    %v2377 = vunpack.c.l.b16 %v2301
    %v2378 = vunpack.c.h.b16 %v2301
    %v2379 = vunpack.c.l.b16 %v2302
    %v2380 = vunpack.c.l.b16 %v2303
    %v2381 = vunpack.c.h.b16 %v2303
    %v2382 = vunpack.c.l.b16 %v2304
    %v2383 = vunpack.c.l.b16 %v2305
    %v2384 = vunpack.c.h.b16 %v2305
    %v2385 = vunpack.c.l.b16 %v2306
    %v2386 = vunpack.c.l.b16 %v2307
    %v2387 = vunpack.c.h.b16 %v2307
    %v2388 = vunpack.c.l.b16 %v2308
    %v2389 = vpack.c.b16 %v2344, %v2341
    %v2390 = vpack.c.b16 %v2345, %v2342
    %v2391 = vpack.c.b16 %v2346, %v2343
    %v2392 = vpack.c.b16 %v2350, %v2347
    %v2393 = vpack.c.b16 %v2351, %v2348
    %v2394 = vpack.c.b16 %v2352, %v2349
    %v2395 = vpack.c.b16 %v2356, %v2353
    %v2396 = vpack.c.b16 %v2357, %v2354
    %v2397 = vpack.c.b16 %v2358, %v2355
    %v2398 = vpack.c.b16 %v2362, %v2359
    %v2399 = vpack.c.b16 %v2363, %v2360
    %v2400 = vpack.c.b16 %v2364, %v2361
    %v2401 = vpack.c.b16 %v2368, %v2365
    %v2402 = vpack.c.b16 %v2369, %v2366
    %v2403 = vpack.c.b16 %v2370, %v2367
    %v2404 = vpack.c.b16 %v2374, %v2371
    %v2405 = vpack.c.b16 %v2375, %v2372
    %v2406 = vpack.c.b16 %v2376, %v2373
    %v2407 = vpack.c.b16 %v2380, %v2377
    %v2408 = vpack.c.b16 %v2381, %v2378
    %v2409 = vpack.c.b16 %v2382, %v2379
    %v2410 = vpack.c.b16 %v2386, %v2383
    %v2411 = vpack.c.b16 %v2387, %v2384
    %v2412 = vpack.c.b16 %v2388, %v2385
    %2437 = vmatpush.bf16.msra.mxu0 %v2410
    %2438 = vmatpush.bf16.msra.mxu0 %v2407
    %2439 = vmatpush.bf16.msra.mxu0 %v2404
    %2440 = vmatpush.bf16.msra.mxu0 %v2401
    %2441 = vmatpush.bf16.msra.mxu0 %v2398
    %2442 = vmatpush.bf16.msra.mxu0 %v2395
    %2443 = vmatpush.bf16.msra.mxu0 %v2392
    %2444 = vmatpush.bf16.msra.mxu0 %v2389
    %2445 = vmatmul.bf16.gmra.mxu0 %v2276
    %v2446 = vpop.f32.mrf.mxu0
    %v2447 = vadd.f32 %v691, %v2446
    %v2448 = vpop.f32.mrf.mxu0
    %v2449 = vadd.f32 %v691, %v2448
    %2450 = vdwg.mxu0
    %2451 = vmatpush.bf16.msra.mxu0 %v2411
    %2452 = vmatpush.bf16.msra.mxu0 %v2408
    %2453 = vmatpush.bf16.msra.mxu0 %v2405
    %2454 = vmatpush.bf16.msra.mxu0 %v2402
    %2455 = vmatpush.bf16.msra.mxu0 %v2399
    %2456 = vmatpush.bf16.msra.mxu0 %v2396
    %2457 = vmatpush.bf16.msra.mxu0 %v2393
    %2458 = vmatpush.bf16.msra.mxu0 %v2390
    %2459 = vmatmul.bf16.gmra.mxu0 %v2276
    %v2460 = vpop.f32.mrf.mxu0
    %v2461 = vadd.f32 %v692, %v2460
    %v2462 = vpop.f32.mrf.mxu0
    %v2463 = vadd.f32 %v692, %v2462
    %2464 = vdwg.mxu0
    %2465 = vmatpush.bf16.msra.mxu0 %v2412
    %2466 = vmatpush.bf16.msra.mxu0 %v2409
    %2467 = vmatpush.bf16.msra.mxu0 %v2406
    %2468 = vmatpush.bf16.msra.mxu0 %v2403
    %2469 = vmatpush.bf16.msra.mxu0 %v2400
    %2470 = vmatpush.bf16.msra.mxu0 %v2397
    %2471 = vmatpush.bf16.msra.mxu0 %v2394
    %2472 = vmatpush.bf16.msra.mxu0 %v2391
    %2473 = vmatmul.bf16.gmra.mxu0 %v2276
    %v2474 = vpop.f32.mrf.mxu0
    %v2475 = vadd.f32 %v693, %v2474
    %v2476 = vpop.f32.mrf.mxu0
    %v2477 = vadd.f32 %v693, %v2476
    %2478 = vdwg.mxu0
    %v2479 = vadd.f32 %v2270, %v2447
    %v2480 = vadd.f32 %v2273, %v2449
    %v2481 = vxor.u32 %v2479, 2147483648
    %v2482 = vxor.u32 %v2480, 2147483648
    %v2483 = vmul.f32 %v2481, 1.442695
    %v2484 = vpow.pop %v2483
    %v2485 = vmul.f32 %v2482, 1.442695
    %v2486 = vpow.pop %v2485
    %v2487 = vadd.f32 %v2484, 1.0
    %v2488 = vadd.f32 %v2486, 1.0
    %v2489 = vrcp.pop %v2487
    %v2490 = vmul.f32 %v2487, %v2489
    %v2491 = vsub.f32 1.0, %v2490
    %v2492 = vmul.f32 %v2489, %v2491
    %v2493 = vadd.f32 %v2489, %v2492
    %vm2494 = vweird.f32 %v2487
    %vm2495 = vweird.f32 %v2489
    %vm2496 = vmor %vm2494, %vm2495
    %v2497 = vsel %vm2496, %v2489, %v2493
    %v2498 = vand.u32 2147483647, %v2487
    %vm2499 = vcmp.eq.f32.partialorder %v2498, 8.507059e+37
    %v2500 = vand.u32 %v2487, 2147483648
    %v2501 = vor.u32 1.1754944e-38, %v2500
    %v2502 = vsel %vm2499, %v2501, %v2497
    %v2503 = vmul.f32 1.0, %v2502
    %v2504 = vrcp.pop %v2488
    %v2505 = vmul.f32 %v2488, %v2504
    %v2506 = vsub.f32 1.0, %v2505
    %v2507 = vmul.f32 %v2504, %v2506
    %v2508 = vadd.f32 %v2504, %v2507
    %vm2509 = vweird.f32 %v2488
    %vm2510 = vweird.f32 %v2504
    %vm2511 = vmor %vm2509, %vm2510
    %v2512 = vsel %vm2511, %v2504, %v2508
    %v2513 = vand.u32 2147483647, %v2488
    %vm2514 = vcmp.eq.f32.partialorder %v2513, 8.507059e+37
    %v2515 = vand.u32 %v2488, 2147483648
    %v2516 = vor.u32 1.1754944e-38, %v2515
    %v2517 = vsel %vm2514, %v2516, %v2512
    %v2518 = vmul.f32 1.0, %v2517
    %v2519 = vadd.f32 %v2271, %v2461
    %v2520 = vadd.f32 %v2274, %v2463
    %v2521 = vxor.u32 %v2519, 2147483648
    %v2522 = vxor.u32 %v2520, 2147483648
    %v2523 = vmul.f32 %v2521, 1.442695
    %v2524 = vpow.pop %v2523
    %v2525 = vmul.f32 %v2522, 1.442695
    %v2526 = vpow.pop %v2525
    %v2527 = vadd.f32 %v2524, 1.0
    %v2528 = vadd.f32 %v2526, 1.0
    %v2529 = vrcp.pop %v2527
    %v2530 = vmul.f32 %v2527, %v2529
    %v2531 = vsub.f32 1.0, %v2530
    %v2532 = vmul.f32 %v2529, %v2531
    %v2533 = vadd.f32 %v2529, %v2532
    %vm2534 = vweird.f32 %v2527
    %vm2535 = vweird.f32 %v2529
    %vm2536 = vmor %vm2534, %vm2535
    %v2537 = vsel %vm2536, %v2529, %v2533
    %v2538 = vand.u32 2147483647, %v2527
    %vm2539 = vcmp.eq.f32.partialorder %v2538, 8.507059e+37
    %v2540 = vand.u32 %v2527, 2147483648
    %v2541 = vor.u32 1.1754944e-38, %v2540
    %v2542 = vsel %vm2539, %v2541, %v2537
    %v2543 = vmul.f32 1.0, %v2542
    %v2544 = vrcp.pop %v2528
    %v2545 = vmul.f32 %v2528, %v2544
    %v2546 = vsub.f32 1.0, %v2545
    %v2547 = vmul.f32 %v2544, %v2546
    %v2548 = vadd.f32 %v2544, %v2547
    %vm2549 = vweird.f32 %v2528
    %vm2550 = vweird.f32 %v2544
    %vm2551 = vmor %vm2549, %vm2550
    %v2552 = vsel %vm2551, %v2544, %v2548
    %v2553 = vand.u32 2147483647, %v2528
    %vm2554 = vcmp.eq.f32.partialorder %v2553, 8.507059e+37
    %v2555 = vand.u32 %v2528, 2147483648
    %v2556 = vor.u32 1.1754944e-38, %v2555
    %v2557 = vsel %vm2554, %v2556, %v2552
    %v2558 = vmul.f32 1.0, %v2557
    %v2559 = vmul.f32 %v2503, %v2475
    %v2560 = vmul.f32 %v2518, %v2477
    %v2561 = vadd.f32 %v2272, %v2559
    %v2562 = vadd.f32 %v2275, %v2560
    %v2563 = vtanh.pop %v2561
    %v2564 = vtanh.pop %v2562
    %v2565 = vsub.f32 1.0, %v2543
    %v2566 = vsub.f32 1.0, %v2558
    %v2567 = vmul.f32 %v2565, %v2563
    %v2568 = vmul.f32 %v2566, %v2564
    %v2569 = vmul.f32 %v2543, %v2265
    %v2570 = vmul.f32 %v2558, %v2266
    %v2571 = vadd.f32 %v2567, %v2569
    %v2572 = vadd.f32 %v2568, %v2570
    %2573 = vst [vmem:[#allocation4] sm:$0xff] %v2571
    %2574 = vst [vmem:[#allocation4 + $0x8] sm:$0xff] %v2572
    %s2575 = scalar_lea.vmem [#allocation3], 80
    %2576 = vst [vmem:[%s2575] sm:$0xff] %v2571
    %2577 = vst [vmem:[%s2575 + $0x8] sm:$0xff] %v2572
    %v2578 = vld [vmem:[#allocation4] sm:$0xff]
    %v2579 = vld [vmem:[#allocation4 + $0x8] sm:$0xff]
    %s2580 = smul.u32 12, 3
    %s2581 = smul.addr %s2580, 8
    %s2582 = scalar_lea.vmem [#allocation2], %s2581
    %v2583 = vld [vmem:[%s2582] sm:$0xff]
    %v2584 = vld [vmem:[%s2582 + $0x8] sm:$0xff]
    %v2585 = vld [vmem:[%s2582 + $0x10] sm:$0xff]
    %v2586 = vld [vmem:[%s2582 + $0x18] sm:$0xff]
    %v2587 = vld [vmem:[%s2582 + $0x20] sm:$0xff]
    %v2588 = vld [vmem:[%s2582 + $0x28] sm:$0xff]
    %v2589 = vpack.c.bf16 %v2579, %v2578
    %v2590 = vld [vmem:[#allocation8] sm:$0xff]
    %v2591 = vld [vmem:[#allocation8 + $0x8] sm:$0xf]
    %v2592 = vld [vmem:[#allocation8 + $0xc] sm:$0xff]
    %v2593 = vld [vmem:[#allocation8 + $0x14] sm:$0xf]
    %v2594 = vld [vmem:[#allocation8 + $0x18] sm:$0xff]
    %v2595 = vld [vmem:[#allocation8 + $0x20] sm:$0xf]
    %v2596 = vld [vmem:[#allocation8 + $0x24] sm:$0xff]
    %v2597 = vld [vmem:[#allocation8 + $0x2c] sm:$0xf]
    %v2598 = vld [vmem:[#allocation8 + $0x30] sm:$0xff]
    %v2599 = vld [vmem:[#allocation8 + $0x38] sm:$0xf]
    %v2600 = vld [vmem:[#allocation8 + $0x3c] sm:$0xff]
    %v2601 = vld [vmem:[#allocation8 + $0x44] sm:$0xf]
    %v2602 = vld [vmem:[#allocation8 + $0x48] sm:$0xff]
    %v2603 = vld [vmem:[#allocation8 + $0x50] sm:$0xf]
    %v2604 = vld [vmem:[#allocation8 + $0x54] sm:$0xff]
    %v2605 = vld [vmem:[#allocation8 + $0x5c] sm:$0xf]
    %v2606 = vld [vmem:[#allocation8 + $0x60] sm:$0xff]
    %v2607 = vld [vmem:[#allocation8 + $0x68] sm:$0xf]
    %v2608 = vld [vmem:[#allocation8 + $0x6c] sm:$0xff]
    %v2609 = vld [vmem:[#allocation8 + $0x74] sm:$0xf]
    %v2610 = vld [vmem:[#allocation8 + $0x78] sm:$0xff]
    %v2611 = vld [vmem:[#allocation8 + $0x80] sm:$0xf]
    %v2612 = vld [vmem:[#allocation8 + $0x84] sm:$0xff]
    %v2613 = vld [vmem:[#allocation8 + $0x8c] sm:$0xf]
    %v2614 = vld [vmem:[#allocation8 + $0x90] sm:$0xff]
    %v2615 = vld [vmem:[#allocation8 + $0x98] sm:$0xf]
    %v2616 = vld [vmem:[#allocation8 + $0x9c] sm:$0xff]
    %v2617 = vld [vmem:[#allocation8 + $0xa4] sm:$0xf]
    %v2618 = vld [vmem:[#allocation8 + $0xa8] sm:$0xff]
    %v2619 = vld [vmem:[#allocation8 + $0xb0] sm:$0xf]
    %v2620 = vld [vmem:[#allocation8 + $0xb4] sm:$0xff]
    %v2621 = vld [vmem:[#allocation8 + $0xbc] sm:$0xf]
    %v2654 = vunpack.c.l.b16 %v2590
    %v2655 = vunpack.c.h.b16 %v2590
    %v2656 = vunpack.c.l.b16 %v2591
    %v2657 = vunpack.c.l.b16 %v2592
    %v2658 = vunpack.c.h.b16 %v2592
    %v2659 = vunpack.c.l.b16 %v2593
    %v2660 = vunpack.c.l.b16 %v2594
    %v2661 = vunpack.c.h.b16 %v2594
    %v2662 = vunpack.c.l.b16 %v2595
    %v2663 = vunpack.c.l.b16 %v2596
    %v2664 = vunpack.c.h.b16 %v2596
    %v2665 = vunpack.c.l.b16 %v2597
    %v2666 = vunpack.c.l.b16 %v2598
    %v2667 = vunpack.c.h.b16 %v2598
    %v2668 = vunpack.c.l.b16 %v2599
    %v2669 = vunpack.c.l.b16 %v2600
    %v2670 = vunpack.c.h.b16 %v2600
    %v2671 = vunpack.c.l.b16 %v2601
    %v2672 = vunpack.c.l.b16 %v2602
    %v2673 = vunpack.c.h.b16 %v2602
    %v2674 = vunpack.c.l.b16 %v2603
    %v2675 = vunpack.c.l.b16 %v2604
    %v2676 = vunpack.c.h.b16 %v2604
    %v2677 = vunpack.c.l.b16 %v2605
    %v2678 = vunpack.c.l.b16 %v2606
    %v2679 = vunpack.c.h.b16 %v2606
    %v2680 = vunpack.c.l.b16 %v2607
    %v2681 = vunpack.c.l.b16 %v2608
    %v2682 = vunpack.c.h.b16 %v2608
    %v2683 = vunpack.c.l.b16 %v2609
    %v2684 = vunpack.c.l.b16 %v2610
    %v2685 = vunpack.c.h.b16 %v2610
    %v2686 = vunpack.c.l.b16 %v2611
    %v2687 = vunpack.c.l.b16 %v2612
    %v2688 = vunpack.c.h.b16 %v2612
    %v2689 = vunpack.c.l.b16 %v2613
    %v2690 = vunpack.c.l.b16 %v2614
    %v2691 = vunpack.c.h.b16 %v2614
    %v2692 = vunpack.c.l.b16 %v2615
    %v2693 = vunpack.c.l.b16 %v2616
    %v2694 = vunpack.c.h.b16 %v2616
    %v2695 = vunpack.c.l.b16 %v2617
    %v2696 = vunpack.c.l.b16 %v2618
    %v2697 = vunpack.c.h.b16 %v2618
    %v2698 = vunpack.c.l.b16 %v2619
    %v2699 = vunpack.c.l.b16 %v2620
    %v2700 = vunpack.c.h.b16 %v2620
    %v2701 = vunpack.c.l.b16 %v2621
    %v2702 = vpack.c.b16 %v2657, %v2654
    %v2703 = vpack.c.b16 %v2658, %v2655
    %v2704 = vpack.c.b16 %v2659, %v2656
    %v2705 = vpack.c.b16 %v2663, %v2660
    %v2706 = vpack.c.b16 %v2664, %v2661
    %v2707 = vpack.c.b16 %v2665, %v2662
    %v2708 = vpack.c.b16 %v2669, %v2666
    %v2709 = vpack.c.b16 %v2670, %v2667
    %v2710 = vpack.c.b16 %v2671, %v2668
    %v2711 = vpack.c.b16 %v2675, %v2672
    %v2712 = vpack.c.b16 %v2676, %v2673
    %v2713 = vpack.c.b16 %v2677, %v2674
    %v2714 = vpack.c.b16 %v2681, %v2678
    %v2715 = vpack.c.b16 %v2682, %v2679
    %v2716 = vpack.c.b16 %v2683, %v2680
    %v2717 = vpack.c.b16 %v2687, %v2684
    %v2718 = vpack.c.b16 %v2688, %v2685
    %v2719 = vpack.c.b16 %v2689, %v2686
    %v2720 = vpack.c.b16 %v2693, %v2690
    %v2721 = vpack.c.b16 %v2694, %v2691
    %v2722 = vpack.c.b16 %v2695, %v2692
    %v2723 = vpack.c.b16 %v2699, %v2696
    %v2724 = vpack.c.b16 %v2700, %v2697
    %v2725 = vpack.c.b16 %v2701, %v2698
    %2750 = vmatpush.bf16.msra.mxu0 %v2723
    %2751 = vmatpush.bf16.msra.mxu0 %v2720
    %2752 = vmatpush.bf16.msra.mxu0 %v2717
    %2753 = vmatpush.bf16.msra.mxu0 %v2714
    %2754 = vmatpush.bf16.msra.mxu0 %v2711
    %2755 = vmatpush.bf16.msra.mxu0 %v2708
    %2756 = vmatpush.bf16.msra.mxu0 %v2705
    %2757 = vmatpush.bf16.msra.mxu0 %v2702
    %2758 = vmatmul.bf16.gmra.mxu0 %v2589
    %v2759 = vpop.f32.mrf.mxu0
    %v2760 = vadd.f32 %v691, %v2759
    %v2761 = vpop.f32.mrf.mxu0
    %v2762 = vadd.f32 %v691, %v2761
    %2763 = vdwg.mxu0
    %2764 = vmatpush.bf16.msra.mxu0 %v2724
    %2765 = vmatpush.bf16.msra.mxu0 %v2721
    %2766 = vmatpush.bf16.msra.mxu0 %v2718
    %2767 = vmatpush.bf16.msra.mxu0 %v2715
    %2768 = vmatpush.bf16.msra.mxu0 %v2712
    %2769 = vmatpush.bf16.msra.mxu0 %v2709
    %2770 = vmatpush.bf16.msra.mxu0 %v2706
    %2771 = vmatpush.bf16.msra.mxu0 %v2703
    %2772 = vmatmul.bf16.gmra.mxu0 %v2589
    %v2773 = vpop.f32.mrf.mxu0
    %v2774 = vadd.f32 %v692, %v2773
    %v2775 = vpop.f32.mrf.mxu0
    %v2776 = vadd.f32 %v692, %v2775
    %2777 = vdwg.mxu0
    %2778 = vmatpush.bf16.msra.mxu0 %v2725
    %2779 = vmatpush.bf16.msra.mxu0 %v2722
    %2780 = vmatpush.bf16.msra.mxu0 %v2719
    %2781 = vmatpush.bf16.msra.mxu0 %v2716
    %2782 = vmatpush.bf16.msra.mxu0 %v2713
    %2783 = vmatpush.bf16.msra.mxu0 %v2710
    %2784 = vmatpush.bf16.msra.mxu0 %v2707
    %2785 = vmatpush.bf16.msra.mxu0 %v2704
    %2786 = vmatmul.bf16.gmra.mxu0 %v2589
    %v2787 = vpop.f32.mrf.mxu0
    %v2788 = vadd.f32 %v693, %v2787
    %v2789 = vpop.f32.mrf.mxu0
    %v2790 = vadd.f32 %v693, %v2789
    %2791 = vdwg.mxu0
    %v2792 = vadd.f32 %v2583, %v2760
    %v2793 = vadd.f32 %v2586, %v2762
    %v2794 = vxor.u32 %v2792, 2147483648
    %v2795 = vxor.u32 %v2793, 2147483648
    %v2796 = vmul.f32 %v2794, 1.442695
    %v2797 = vpow.pop %v2796
    %v2798 = vmul.f32 %v2795, 1.442695
    %v2799 = vpow.pop %v2798
    %v2800 = vadd.f32 %v2797, 1.0
    %v2801 = vadd.f32 %v2799, 1.0
    %v2802 = vrcp.pop %v2800
    %v2803 = vmul.f32 %v2800, %v2802
    %v2804 = vsub.f32 1.0, %v2803
    %v2805 = vmul.f32 %v2802, %v2804
    %v2806 = vadd.f32 %v2802, %v2805
    %vm2807 = vweird.f32 %v2800
    %vm2808 = vweird.f32 %v2802
    %vm2809 = vmor %vm2807, %vm2808
    %v2810 = vsel %vm2809, %v2802, %v2806
    %v2811 = vand.u32 2147483647, %v2800
    %vm2812 = vcmp.eq.f32.partialorder %v2811, 8.507059e+37
    %v2813 = vand.u32 %v2800, 2147483648
    %v2814 = vor.u32 1.1754944e-38, %v2813
    %v2815 = vsel %vm2812, %v2814, %v2810
    %v2816 = vmul.f32 1.0, %v2815
    %v2817 = vrcp.pop %v2801
    %v2818 = vmul.f32 %v2801, %v2817
    %v2819 = vsub.f32 1.0, %v2818
    %v2820 = vmul.f32 %v2817, %v2819
    %v2821 = vadd.f32 %v2817, %v2820
    %vm2822 = vweird.f32 %v2801
    %vm2823 = vweird.f32 %v2817
    %vm2824 = vmor %vm2822, %vm2823
    %v2825 = vsel %vm2824, %v2817, %v2821
    %v2826 = vand.u32 2147483647, %v2801
    %vm2827 = vcmp.eq.f32.partialorder %v2826, 8.507059e+37
    %v2828 = vand.u32 %v2801, 2147483648
    %v2829 = vor.u32 1.1754944e-38, %v2828
    %v2830 = vsel %vm2827, %v2829, %v2825
    %v2831 = vmul.f32 1.0, %v2830
    %v2832 = vadd.f32 %v2584, %v2774
    %v2833 = vadd.f32 %v2587, %v2776
    %v2834 = vxor.u32 %v2832, 2147483648
    %v2835 = vxor.u32 %v2833, 2147483648
    %v2836 = vmul.f32 %v2834, 1.442695
    %v2837 = vpow.pop %v2836
    %v2838 = vmul.f32 %v2835, 1.442695
    %v2839 = vpow.pop %v2838
    %v2840 = vadd.f32 %v2837, 1.0
    %v2841 = vadd.f32 %v2839, 1.0
    %v2842 = vrcp.pop %v2840
    %v2843 = vmul.f32 %v2840, %v2842
    %v2844 = vsub.f32 1.0, %v2843
    %v2845 = vmul.f32 %v2842, %v2844
    %v2846 = vadd.f32 %v2842, %v2845
    %vm2847 = vweird.f32 %v2840
    %vm2848 = vweird.f32 %v2842
    %vm2849 = vmor %vm2847, %vm2848
    %v2850 = vsel %vm2849, %v2842, %v2846
    %v2851 = vand.u32 2147483647, %v2840
    %vm2852 = vcmp.eq.f32.partialorder %v2851, 8.507059e+37
    %v2853 = vand.u32 %v2840, 2147483648
    %v2854 = vor.u32 1.1754944e-38, %v2853
    %v2855 = vsel %vm2852, %v2854, %v2850
    %v2856 = vmul.f32 1.0, %v2855
    %v2857 = vrcp.pop %v2841
    %v2858 = vmul.f32 %v2841, %v2857
    %v2859 = vsub.f32 1.0, %v2858
    %v2860 = vmul.f32 %v2857, %v2859
    %v2861 = vadd.f32 %v2857, %v2860
    %vm2862 = vweird.f32 %v2841
    %vm2863 = vweird.f32 %v2857
    %vm2864 = vmor %vm2862, %vm2863
    %v2865 = vsel %vm2864, %v2857, %v2861
    %v2866 = vand.u32 2147483647, %v2841
    %vm2867 = vcmp.eq.f32.partialorder %v2866, 8.507059e+37
    %v2868 = vand.u32 %v2841, 2147483648
    %v2869 = vor.u32 1.1754944e-38, %v2868
    %v2870 = vsel %vm2867, %v2869, %v2865
    %v2871 = vmul.f32 1.0, %v2870
    %v2872 = vmul.f32 %v2816, %v2788
    %v2873 = vmul.f32 %v2831, %v2790
    %v2874 = vadd.f32 %v2585, %v2872
    %v2875 = vadd.f32 %v2588, %v2873
    %v2876 = vtanh.pop %v2874
    %v2877 = vtanh.pop %v2875
    %v2878 = vsub.f32 1.0, %v2856
    %v2879 = vsub.f32 1.0, %v2871
    %v2880 = vmul.f32 %v2878, %v2876
    %v2881 = vmul.f32 %v2879, %v2877
    %v2882 = vmul.f32 %v2856, %v2578
    %v2883 = vmul.f32 %v2871, %v2579
    %v2884 = vadd.f32 %v2880, %v2882
    %v2885 = vadd.f32 %v2881, %v2883
    %2886 = vst [vmem:[#allocation4] sm:$0xff] %v2884
    %2887 = vst [vmem:[#allocation4 + $0x8] sm:$0xff] %v2885
    %s2888 = scalar_lea.vmem [#allocation3], 96
    %2889 = vst [vmem:[%s2888] sm:$0xff] %v2884
    %2890 = vst [vmem:[%s2888 + $0x8] sm:$0xff] %v2885
    %v2891 = vld [vmem:[#allocation4] sm:$0xff]
    %v2892 = vld [vmem:[#allocation4 + $0x8] sm:$0xff]
    %s2893 = smul.u32 14, 3
    %s2894 = smul.addr %s2893, 8
    %s2895 = scalar_lea.vmem [#allocation2], %s2894
    %v2896 = vld [vmem:[%s2895] sm:$0xff]
    %v2897 = vld [vmem:[%s2895 + $0x8] sm:$0xff]
    %v2898 = vld [vmem:[%s2895 + $0x10] sm:$0xff]
    %v2899 = vld [vmem:[%s2895 + $0x18] sm:$0xff]
    %v2900 = vld [vmem:[%s2895 + $0x20] sm:$0xff]
    %v2901 = vld [vmem:[%s2895 + $0x28] sm:$0xff]
    %v2902 = vpack.c.bf16 %v2892, %v2891
    %v2903 = vld [vmem:[#allocation8] sm:$0xff]
    %v2904 = vld [vmem:[#allocation8 + $0x8] sm:$0xf]
    %v2905 = vld [vmem:[#allocation8 + $0xc] sm:$0xff]
    %v2906 = vld [vmem:[#allocation8 + $0x14] sm:$0xf]
    %v2907 = vld [vmem:[#allocation8 + $0x18] sm:$0xff]
    %v2908 = vld [vmem:[#allocation8 + $0x20] sm:$0xf]
    %v2909 = vld [vmem:[#allocation8 + $0x24] sm:$0xff]
    %v2910 = vld [vmem:[#allocation8 + $0x2c] sm:$0xf]
    %v2911 = vld [vmem:[#allocation8 + $0x30] sm:$0xff]
    %v2912 = vld [vmem:[#allocation8 + $0x38] sm:$0xf]
    %v2913 = vld [vmem:[#allocation8 + $0x3c] sm:$0xff]
    %v2914 = vld [vmem:[#allocation8 + $0x44] sm:$0xf]
    %v2915 = vld [vmem:[#allocation8 + $0x48] sm:$0xff]
    %v2916 = vld [vmem:[#allocation8 + $0x50] sm:$0xf]
    %v2917 = vld [vmem:[#allocation8 + $0x54] sm:$0xff]
    %v2918 = vld [vmem:[#allocation8 + $0x5c] sm:$0xf]
    %v2919 = vld [vmem:[#allocation8 + $0x60] sm:$0xff]
    %v2920 = vld [vmem:[#allocation8 + $0x68] sm:$0xf]
    %v2921 = vld [vmem:[#allocation8 + $0x6c] sm:$0xff]
    %v2922 = vld [vmem:[#allocation8 + $0x74] sm:$0xf]
    %v2923 = vld [vmem:[#allocation8 + $0x78] sm:$0xff]
    %v2924 = vld [vmem:[#allocation8 + $0x80] sm:$0xf]
    %v2925 = vld [vmem:[#allocation8 + $0x84] sm:$0xff]
    %v2926 = vld [vmem:[#allocation8 + $0x8c] sm:$0xf]
    %v2927 = vld [vmem:[#allocation8 + $0x90] sm:$0xff]
    %v2928 = vld [vmem:[#allocation8 + $0x98] sm:$0xf]
    %v2929 = vld [vmem:[#allocation8 + $0x9c] sm:$0xff]
    %v2930 = vld [vmem:[#allocation8 + $0xa4] sm:$0xf]
    %v2931 = vld [vmem:[#allocation8 + $0xa8] sm:$0xff]
    %v2932 = vld [vmem:[#allocation8 + $0xb0] sm:$0xf]
    %v2933 = vld [vmem:[#allocation8 + $0xb4] sm:$0xff]
    %v2934 = vld [vmem:[#allocation8 + $0xbc] sm:$0xf]
    %v2967 = vunpack.c.l.b16 %v2903
    %v2968 = vunpack.c.h.b16 %v2903
    %v2969 = vunpack.c.l.b16 %v2904
    %v2970 = vunpack.c.l.b16 %v2905
    %v2971 = vunpack.c.h.b16 %v2905
    %v2972 = vunpack.c.l.b16 %v2906
    %v2973 = vunpack.c.l.b16 %v2907
    %v2974 = vunpack.c.h.b16 %v2907
    %v2975 = vunpack.c.l.b16 %v2908
    %v2976 = vunpack.c.l.b16 %v2909
    %v2977 = vunpack.c.h.b16 %v2909
    %v2978 = vunpack.c.l.b16 %v2910
    %v2979 = vunpack.c.l.b16 %v2911
    %v2980 = vunpack.c.h.b16 %v2911
    %v2981 = vunpack.c.l.b16 %v2912
    %v2982 = vunpack.c.l.b16 %v2913
    %v2983 = vunpack.c.h.b16 %v2913
    %v2984 = vunpack.c.l.b16 %v2914
    %v2985 = vunpack.c.l.b16 %v2915
    %v2986 = vunpack.c.h.b16 %v2915
    %v2987 = vunpack.c.l.b16 %v2916
    %v2988 = vunpack.c.l.b16 %v2917
    %v2989 = vunpack.c.h.b16 %v2917
    %v2990 = vunpack.c.l.b16 %v2918
    %v2991 = vunpack.c.l.b16 %v2919
    %v2992 = vunpack.c.h.b16 %v2919
    %v2993 = vunpack.c.l.b16 %v2920
    %v2994 = vunpack.c.l.b16 %v2921
    %v2995 = vunpack.c.h.b16 %v2921
    %v2996 = vunpack.c.l.b16 %v2922
    %v2997 = vunpack.c.l.b16 %v2923
    %v2998 = vunpack.c.h.b16 %v2923
    %v2999 = vunpack.c.l.b16 %v2924
    %v3000 = vunpack.c.l.b16 %v2925
    %v3001 = vunpack.c.h.b16 %v2925
    %v3002 = vunpack.c.l.b16 %v2926
    %v3003 = vunpack.c.l.b16 %v2927
    %v3004 = vunpack.c.h.b16 %v2927
    %v3005 = vunpack.c.l.b16 %v2928
    %v3006 = vunpack.c.l.b16 %v2929
    %v3007 = vunpack.c.h.b16 %v2929
    %v3008 = vunpack.c.l.b16 %v2930
    %v3009 = vunpack.c.l.b16 %v2931
    %v3010 = vunpack.c.h.b16 %v2931
    %v3011 = vunpack.c.l.b16 %v2932
    %v3012 = vunpack.c.l.b16 %v2933
    %v3013 = vunpack.c.h.b16 %v2933
    %v3014 = vunpack.c.l.b16 %v2934
    %v3015 = vpack.c.b16 %v2970, %v2967
    %v3016 = vpack.c.b16 %v2971, %v2968
    %v3017 = vpack.c.b16 %v2972, %v2969
    %v3018 = vpack.c.b16 %v2976, %v2973
    %v3019 = vpack.c.b16 %v2977, %v2974
    %v3020 = vpack.c.b16 %v2978, %v2975
    %v3021 = vpack.c.b16 %v2982, %v2979
    %v3022 = vpack.c.b16 %v2983, %v2980
    %v3023 = vpack.c.b16 %v2984, %v2981
    %v3024 = vpack.c.b16 %v2988, %v2985
    %v3025 = vpack.c.b16 %v2989, %v2986
    %v3026 = vpack.c.b16 %v2990, %v2987
    %v3027 = vpack.c.b16 %v2994, %v2991
    %v3028 = vpack.c.b16 %v2995, %v2992
    %v3029 = vpack.c.b16 %v2996, %v2993
    %v3030 = vpack.c.b16 %v3000, %v2997
    %v3031 = vpack.c.b16 %v3001, %v2998
    %v3032 = vpack.c.b16 %v3002, %v2999
    %v3033 = vpack.c.b16 %v3006, %v3003
    %v3034 = vpack.c.b16 %v3007, %v3004
    %v3035 = vpack.c.b16 %v3008, %v3005
    %v3036 = vpack.c.b16 %v3012, %v3009
    %v3037 = vpack.c.b16 %v3013, %v3010
    %v3038 = vpack.c.b16 %v3014, %v3011
    %3063 = vmatpush.bf16.msra.mxu0 %v3036
    %3064 = vmatpush.bf16.msra.mxu0 %v3033
    %3065 = vmatpush.bf16.msra.mxu0 %v3030
    %3066 = vmatpush.bf16.msra.mxu0 %v3027
    %3067 = vmatpush.bf16.msra.mxu0 %v3024
    %3068 = vmatpush.bf16.msra.mxu0 %v3021
    %3069 = vmatpush.bf16.msra.mxu0 %v3018
    %3070 = vmatpush.bf16.msra.mxu0 %v3015
    %3071 = vmatmul.bf16.gmra.mxu0 %v2902
    %v3072 = vpop.f32.mrf.mxu0
    %v3073 = vadd.f32 %v691, %v3072
    %v3074 = vpop.f32.mrf.mxu0
    %v3075 = vadd.f32 %v691, %v3074
    %3076 = vdwg.mxu0
    %3077 = vmatpush.bf16.msra.mxu0 %v3037
    %3078 = vmatpush.bf16.msra.mxu0 %v3034
    %3079 = vmatpush.bf16.msra.mxu0 %v3031
    %3080 = vmatpush.bf16.msra.mxu0 %v3028
    %3081 = vmatpush.bf16.msra.mxu0 %v3025
    %3082 = vmatpush.bf16.msra.mxu0 %v3022
    %3083 = vmatpush.bf16.msra.mxu0 %v3019
    %3084 = vmatpush.bf16.msra.mxu0 %v3016
    %3085 = vmatmul.bf16.gmra.mxu0 %v2902
    %v3086 = vpop.f32.mrf.mxu0
    %v3087 = vadd.f32 %v692, %v3086
    %v3088 = vpop.f32.mrf.mxu0
    %v3089 = vadd.f32 %v692, %v3088
    %3090 = vdwg.mxu0
    %3091 = vmatpush.bf16.msra.mxu0 %v3038
    %3092 = vmatpush.bf16.msra.mxu0 %v3035
    %3093 = vmatpush.bf16.msra.mxu0 %v3032
    %3094 = vmatpush.bf16.msra.mxu0 %v3029
    %3095 = vmatpush.bf16.msra.mxu0 %v3026
    %3096 = vmatpush.bf16.msra.mxu0 %v3023
    %3097 = vmatpush.bf16.msra.mxu0 %v3020
    %3098 = vmatpush.bf16.msra.mxu0 %v3017
    %3099 = vmatmul.bf16.gmra.mxu0 %v2902
    %v3100 = vpop.f32.mrf.mxu0
    %v3101 = vadd.f32 %v693, %v3100
    %v3102 = vpop.f32.mrf.mxu0
    %v3103 = vadd.f32 %v693, %v3102
    %3104 = vdwg.mxu0
    %v3105 = vadd.f32 %v2896, %v3073
    %v3106 = vadd.f32 %v2899, %v3075
    %v3107 = vxor.u32 %v3105, 2147483648
    %v3108 = vxor.u32 %v3106, 2147483648
    %v3109 = vmul.f32 %v3107, 1.442695
    %v3110 = vpow.pop %v3109
    %v3111 = vmul.f32 %v3108, 1.442695
    %v3112 = vpow.pop %v3111
    %v3113 = vadd.f32 %v3110, 1.0
    %v3114 = vadd.f32 %v3112, 1.0
    %v3115 = vrcp.pop %v3113
    %v3116 = vmul.f32 %v3113, %v3115
    %v3117 = vsub.f32 1.0, %v3116
    %v3118 = vmul.f32 %v3115, %v3117
    %v3119 = vadd.f32 %v3115, %v3118
    %vm3120 = vweird.f32 %v3113
    %vm3121 = vweird.f32 %v3115
    %vm3122 = vmor %vm3120, %vm3121
    %v3123 = vsel %vm3122, %v3115, %v3119
    %v3124 = vand.u32 2147483647, %v3113
    %vm3125 = vcmp.eq.f32.partialorder %v3124, 8.507059e+37
    %v3126 = vand.u32 %v3113, 2147483648
    %v3127 = vor.u32 1.1754944e-38, %v3126
    %v3128 = vsel %vm3125, %v3127, %v3123
    %v3129 = vmul.f32 1.0, %v3128
    %v3130 = vrcp.pop %v3114
    %v3131 = vmul.f32 %v3114, %v3130
    %v3132 = vsub.f32 1.0, %v3131
    %v3133 = vmul.f32 %v3130, %v3132
    %v3134 = vadd.f32 %v3130, %v3133
    %vm3135 = vweird.f32 %v3114
    %vm3136 = vweird.f32 %v3130
    %vm3137 = vmor %vm3135, %vm3136
    %v3138 = vsel %vm3137, %v3130, %v3134
    %v3139 = vand.u32 2147483647, %v3114
    %vm3140 = vcmp.eq.f32.partialorder %v3139, 8.507059e+37
    %v3141 = vand.u32 %v3114, 2147483648
    %v3142 = vor.u32 1.1754944e-38, %v3141
    %v3143 = vsel %vm3140, %v3142, %v3138
    %v3144 = vmul.f32 1.0, %v3143
    %v3145 = vadd.f32 %v2897, %v3087
    %v3146 = vadd.f32 %v2900, %v3089
    %v3147 = vxor.u32 %v3145, 2147483648
    %v3148 = vxor.u32 %v3146, 2147483648
    %v3149 = vmul.f32 %v3147, 1.442695
    %v3150 = vpow.pop %v3149
    %v3151 = vmul.f32 %v3148, 1.442695
    %v3152 = vpow.pop %v3151
    %v3153 = vadd.f32 %v3150, 1.0
    %v3154 = vadd.f32 %v3152, 1.0
    %v3155 = vrcp.pop %v3153
    %v3156 = vmul.f32 %v3153, %v3155
    %v3157 = vsub.f32 1.0, %v3156
    %v3158 = vmul.f32 %v3155, %v3157
    %v3159 = vadd.f32 %v3155, %v3158
    %vm3160 = vweird.f32 %v3153
    %vm3161 = vweird.f32 %v3155
    %vm3162 = vmor %vm3160, %vm3161
    %v3163 = vsel %vm3162, %v3155, %v3159
    %v3164 = vand.u32 2147483647, %v3153
    %vm3165 = vcmp.eq.f32.partialorder %v3164, 8.507059e+37
    %v3166 = vand.u32 %v3153, 2147483648
    %v3167 = vor.u32 1.1754944e-38, %v3166
    %v3168 = vsel %vm3165, %v3167, %v3163
    %v3169 = vmul.f32 1.0, %v3168
    %v3170 = vrcp.pop %v3154
    %v3171 = vmul.f32 %v3154, %v3170
    %v3172 = vsub.f32 1.0, %v3171
    %v3173 = vmul.f32 %v3170, %v3172
    %v3174 = vadd.f32 %v3170, %v3173
    %vm3175 = vweird.f32 %v3154
    %vm3176 = vweird.f32 %v3170
    %vm3177 = vmor %vm3175, %vm3176
    %v3178 = vsel %vm3177, %v3170, %v3174
    %v3179 = vand.u32 2147483647, %v3154
    %vm3180 = vcmp.eq.f32.partialorder %v3179, 8.507059e+37
    %v3181 = vand.u32 %v3154, 2147483648
    %v3182 = vor.u32 1.1754944e-38, %v3181
    %v3183 = vsel %vm3180, %v3182, %v3178
    %v3184 = vmul.f32 1.0, %v3183
    %v3185 = vmul.f32 %v3129, %v3101
    %v3186 = vmul.f32 %v3144, %v3103
    %v3187 = vadd.f32 %v2898, %v3185
    %v3188 = vadd.f32 %v2901, %v3186
    %v3189 = vtanh.pop %v3187
    %v3190 = vtanh.pop %v3188
    %v3191 = vsub.f32 1.0, %v3169
    %v3192 = vsub.f32 1.0, %v3184
    %v3193 = vmul.f32 %v3191, %v3189
    %v3194 = vmul.f32 %v3192, %v3190
    %v3195 = vmul.f32 %v3169, %v2891
    %v3196 = vmul.f32 %v3184, %v2892
    %v3197 = vadd.f32 %v3193, %v3195
    %v3198 = vadd.f32 %v3194, %v3196
    %3199 = vst [vmem:[#allocation4] sm:$0xff] %v3197
    %3200 = vst [vmem:[#allocation4 + $0x8] sm:$0xff] %v3198
    %s3201 = scalar_lea.vmem [#allocation3], 112
    %3202 = vst [vmem:[%s3201] sm:$0xff] %v3197
    %3203 = vst [vmem:[%s3201 + $0x8] sm:$0xff] %v3198
    %v3204 = vld [vmem:[#allocation4] sm:$0xff]
    %v3205 = vld [vmem:[#allocation4 + $0x8] sm:$0xff]
    %3206 = vst [vmem:[%s10] sm:$0xff] %v3204
    %3207 = vst [vmem:[%s10 + $0x8] sm:$0xff] %v3205
    %v3208 = vld [vmem:[#allocation3] sm:$0xff]
    %v3209 = vld [vmem:[#allocation3 + $0x8] sm:$0xff]
    %v3210 = vld [vmem:[#allocation3 + $0x10] sm:$0xff]
    %v3211 = vld [vmem:[#allocation3 + $0x18] sm:$0xff]
    %v3212 = vld [vmem:[#allocation3 + $0x20] sm:$0xff]
    %v3213 = vld [vmem:[#allocation3 + $0x28] sm:$0xff]
    %v3214 = vld [vmem:[#allocation3 + $0x30] sm:$0xff]
    %v3215 = vld [vmem:[#allocation3 + $0x38] sm:$0xff]
    %v3216 = vld [vmem:[#allocation3 + $0x40] sm:$0xff]
    %v3217 = vld [vmem:[#allocation3 + $0x48] sm:$0xff]
    %v3218 = vld [vmem:[#allocation3 + $0x50] sm:$0xff]
    %v3219 = vld [vmem:[#allocation3 + $0x58] sm:$0xff]
    %v3220 = vld [vmem:[#allocation3 + $0x60] sm:$0xff]
    %v3221 = vld [vmem:[#allocation3 + $0x68] sm:$0xff]
    %v3222 = vld [vmem:[#allocation3 + $0x70] sm:$0xff]
    %v3223 = vld [vmem:[#allocation3 + $0x78] sm:$0xff]
    %v3224 = vpack.c.bf16 %v3209, %v3208
    %v3225 = vpack.c.bf16 %v3211, %v3210
    %v3226 = vpack.c.bf16 %v3213, %v3212
    %v3227 = vpack.c.bf16 %v3215, %v3214
    %v3228 = vpack.c.bf16 %v3217, %v3216
    %v3229 = vpack.c.bf16 %v3219, %v3218
    %v3230 = vpack.c.bf16 %v3221, %v3220
    %v3231 = vpack.c.bf16 %v3223, %v3222
    %v3232 = vld [vmem:[%s7] sm:$0xf]
    %v3233 = vld [vmem:[%s7 + $0x4] sm:$0xf]
    %v3234 = vld [vmem:[%s7 + $0x8] sm:$0xf]
    %v3235 = vld [vmem:[%s7 + $0xc] sm:$0xf]
    %v3236 = vld [vmem:[%s7 + $0x10] sm:$0xf]
    %v3237 = vld [vmem:[%s7 + $0x14] sm:$0xf]
    %v3238 = vld [vmem:[%s7 + $0x18] sm:$0xf]
    %v3239 = vld [vmem:[%s7 + $0x1c] sm:$0xf]
    %v3240 = vld [vmem:[%s7 + $0x20] sm:$0xf]
    %v3241 = vld [vmem:[%s7 + $0x24] sm:$0xf]
    %v3242 = vld [vmem:[%s7 + $0x28] sm:$0xf]
    %v3243 = vld [vmem:[%s7 + $0x2c] sm:$0xf]
    %v3244 = vld [vmem:[%s7 + $0x30] sm:$0xf]
    %v3245 = vld [vmem:[%s7 + $0x34] sm:$0xf]
    %v3246 = vld [vmem:[%s7 + $0x38] sm:$0xf]
    %v3247 = vld [vmem:[%s7 + $0x3c] sm:$0xf]
    %v3248 = vld [vmem:[%s8] sm:$0x1]
    %v3250 = vperm.slane %v3248, 0
    %v3268 = vunpack.c.l.b16 %v3232
    %v3269 = vunpack.c.l.b16 %v3233
    %v3270 = vunpack.c.l.b16 %v3234
    %v3271 = vunpack.c.l.b16 %v3235
    %v3272 = vunpack.c.l.b16 %v3236
    %v3273 = vunpack.c.l.b16 %v3237
    %v3274 = vunpack.c.l.b16 %v3238
    %v3275 = vunpack.c.l.b16 %v3239
    %v3276 = vunpack.c.l.b16 %v3240
    %v3277 = vunpack.c.l.b16 %v3241
    %v3278 = vunpack.c.l.b16 %v3242
    %v3279 = vunpack.c.l.b16 %v3243
    %v3280 = vunpack.c.l.b16 %v3244
    %v3281 = vunpack.c.l.b16 %v3245
    %v3282 = vunpack.c.l.b16 %v3246
    %v3283 = vunpack.c.l.b16 %v3247
    %v3284 = vpack.c.b16 %v3269, %v3268
    %v3285 = vpack.c.b16 %v3271, %v3270
    %v3286 = vpack.c.b16 %v3273, %v3272
    %v3287 = vpack.c.b16 %v3275, %v3274
    %v3288 = vpack.c.b16 %v3277, %v3276
    %v3289 = vpack.c.b16 %v3279, %v3278
    %v3290 = vpack.c.b16 %v3281, %v3280
    %v3291 = vpack.c.b16 %v3283, %v3282
    %3300 = vmatpush.bf16.msra.mxu0 %v3291
    %3301 = vmatpush.bf16.msra.mxu0 %v3290
    %3302 = vmatpush.bf16.msra.mxu0 %v3289
    %3303 = vmatpush.bf16.msra.mxu0 %v3288
    %3304 = vmatpush.bf16.msra.mxu0 %v3287
    %3305 = vmatpush.bf16.msra.mxu0 %v3286
    %3306 = vmatpush.bf16.msra.mxu0 %v3285
    %3307 = vmatpush.bf16.msra.mxu0 %v3284
    %3308 = vmatmul.bf16.gmra.mxu0 %v3224
    %v3309 = vpop.f32.mrf.mxu0
    %v3310 = vadd.f32 %v3250, %v3309
    %v3311 = vpop.f32.mrf.mxu0
    %v3312 = vadd.f32 %v3250, %v3311
    %3313 = vmatmul.bf16.gmra.mxu0 %v3225
    %v3314 = vpop.f32.mrf.mxu0
    %v3315 = vadd.f32 %v3250, %v3314
    %v3316 = vpop.f32.mrf.mxu0
    %v3317 = vadd.f32 %v3250, %v3316
    %3318 = vmatmul.bf16.gmra.mxu0 %v3226
    %v3319 = vpop.f32.mrf.mxu0
    %v3320 = vadd.f32 %v3250, %v3319
    %v3321 = vpop.f32.mrf.mxu0
    %v3322 = vadd.f32 %v3250, %v3321
    %3323 = vmatmul.bf16.gmra.mxu0 %v3227
    %v3324 = vpop.f32.mrf.mxu0
    %v3325 = vadd.f32 %v3250, %v3324
    %v3326 = vpop.f32.mrf.mxu0
    %v3327 = vadd.f32 %v3250, %v3326
    %3328 = vmatmul.bf16.gmra.mxu0 %v3228
    %v3329 = vpop.f32.mrf.mxu0
    %v3330 = vadd.f32 %v3250, %v3329
    %v3331 = vpop.f32.mrf.mxu0
    %v3332 = vadd.f32 %v3250, %v3331
    %3333 = vmatmul.bf16.gmra.mxu0 %v3229
    %v3334 = vpop.f32.mrf.mxu0
    %v3335 = vadd.f32 %v3250, %v3334
    %v3336 = vpop.f32.mrf.mxu0
    %v3337 = vadd.f32 %v3250, %v3336
    %3338 = vmatmul.bf16.gmra.mxu0 %v3230
    %v3339 = vpop.f32.mrf.mxu0
    %v3340 = vadd.f32 %v3250, %v3339
    %v3341 = vpop.f32.mrf.mxu0
    %v3342 = vadd.f32 %v3250, %v3341
    %3343 = vmatmul.bf16.gmra.mxu0 %v3231
    %v3344 = vpop.f32.mrf.mxu0
    %v3345 = vadd.f32 %v3250, %v3344
    %v3346 = vpop.f32.mrf.mxu0
    %v3347 = vadd.f32 %v3250, %v3346
    %3348 = vdwg.mxu0
    %3349 = vmax.xlane.f32.xlu0 %v3310
    %v3350 = vpop.xlane.xlu0 %3349
    %3351 = vmax.xlane.f32.xlu0 %v3312
    %v3352 = vpop.xlane.xlu0 %3351
    %3353 = vmax.xlane.f32.xlu0 %v3315
    %v3354 = vpop.xlane.xlu0 %3353
    %3355 = vmax.xlane.f32.xlu0 %v3317
    %v3356 = vpop.xlane.xlu0 %3355
    %3357 = vmax.xlane.f32.xlu0 %v3320
    %v3358 = vpop.xlane.xlu0 %3357
    %3359 = vmax.xlane.f32.xlu0 %v3322
    %v3360 = vpop.xlane.xlu0 %3359
    %3361 = vmax.xlane.f32.xlu0 %v3325
    %v3362 = vpop.xlane.xlu0 %3361
    %3363 = vmax.xlane.f32.xlu0 %v3327
    %v3364 = vpop.xlane.xlu0 %3363
    %3365 = vmax.xlane.f32.xlu0 %v3330
    %v3366 = vpop.xlane.xlu0 %3365
    %3367 = vmax.xlane.f32.xlu0 %v3332
    %v3368 = vpop.xlane.xlu0 %3367
    %3369 = vmax.xlane.f32.xlu0 %v3335
    %v3370 = vpop.xlane.xlu0 %3369
    %3371 = vmax.xlane.f32.xlu0 %v3337
    %v3372 = vpop.xlane.xlu0 %3371
    %3373 = vmax.xlane.f32.xlu0 %v3340
    %v3374 = vpop.xlane.xlu0 %3373
    %3375 = vmax.xlane.f32.xlu0 %v3342
    %v3376 = vpop.xlane.xlu0 %3375
    %3377 = vmax.xlane.f32.xlu0 %v3345
    %v3378 = vpop.xlane.xlu0 %3377
    %3379 = vmax.xlane.f32.xlu0 %v3347
    %v3380 = vpop.xlane.xlu0 %3379
    %v3381 = vsub.f32 %v3310, %v3350
    %v3382 = vsub.f32 %v3312, %v3352
    %v3383 = vsub.f32 %v3315, %v3354
    %v3384 = vsub.f32 %v3317, %v3356
    %v3385 = vsub.f32 %v3320, %v3358
    %v3386 = vsub.f32 %v3322, %v3360
    %v3387 = vsub.f32 %v3325, %v3362
    %v3388 = vsub.f32 %v3327, %v3364
    %v3389 = vsub.f32 %v3330, %v3366
    %v3390 = vsub.f32 %v3332, %v3368
    %v3391 = vsub.f32 %v3335, %v3370
    %v3392 = vsub.f32 %v3337, %v3372
    %v3393 = vsub.f32 %v3340, %v3374
    %v3394 = vsub.f32 %v3342, %v3376
    %v3395 = vsub.f32 %v3345, %v3378
    %v3396 = vsub.f32 %v3347, %v3380
    %v3397 = vmul.f32 %v3381, 1.442695
    %v3398 = vpow.pop %v3397
    %v3399 = vmul.f32 %v3382, 1.442695
    %v3400 = vpow.pop %v3399
    %v3401 = vmul.f32 %v3383, 1.442695
    %v3402 = vpow.pop %v3401
    %v3403 = vmul.f32 %v3384, 1.442695
    %v3404 = vpow.pop %v3403
    %v3405 = vmul.f32 %v3385, 1.442695
    %v3406 = vpow.pop %v3405
    %v3407 = vmul.f32 %v3386, 1.442695
    %v3408 = vpow.pop %v3407
    %v3409 = vmul.f32 %v3387, 1.442695
    %v3410 = vpow.pop %v3409
    %v3411 = vmul.f32 %v3388, 1.442695
    %v3412 = vpow.pop %v3411
    %v3413 = vmul.f32 %v3389, 1.442695
    %v3414 = vpow.pop %v3413
    %v3415 = vmul.f32 %v3390, 1.442695
    %v3416 = vpow.pop %v3415
    %v3417 = vmul.f32 %v3391, 1.442695
    %v3418 = vpow.pop %v3417
    %v3419 = vmul.f32 %v3392, 1.442695
    %v3420 = vpow.pop %v3419
    %v3421 = vmul.f32 %v3393, 1.442695
    %v3422 = vpow.pop %v3421
    %v3423 = vmul.f32 %v3394, 1.442695
    %v3424 = vpow.pop %v3423
    %v3425 = vmul.f32 %v3395, 1.442695
    %v3426 = vpow.pop %v3425
    %v3427 = vmul.f32 %v3396, 1.442695
    %v3428 = vpow.pop %v3427
    %3429 = vadd.xlane.f32.xlu0 %v3398
    %v3430 = vpop.xlane.xlu0 %3429
    %3431 = vadd.xlane.f32.xlu0 %v3400
    %v3432 = vpop.xlane.xlu0 %3431
    %3433 = vadd.xlane.f32.xlu0 %v3402
    %v3434 = vpop.xlane.xlu0 %3433
    %3435 = vadd.xlane.f32.xlu0 %v3404
    %v3436 = vpop.xlane.xlu0 %3435
    %3437 = vadd.xlane.f32.xlu0 %v3406
    %v3438 = vpop.xlane.xlu0 %3437
    %3439 = vadd.xlane.f32.xlu0 %v3408
    %v3440 = vpop.xlane.xlu0 %3439
    %3441 = vadd.xlane.f32.xlu0 %v3410
    %v3442 = vpop.xlane.xlu0 %3441
    %3443 = vadd.xlane.f32.xlu0 %v3412
    %v3444 = vpop.xlane.xlu0 %3443
    %3445 = vadd.xlane.f32.xlu0 %v3414
    %v3446 = vpop.xlane.xlu0 %3445
    %3447 = vadd.xlane.f32.xlu0 %v3416
    %v3448 = vpop.xlane.xlu0 %3447
    %3449 = vadd.xlane.f32.xlu0 %v3418
    %v3450 = vpop.xlane.xlu0 %3449
    %3451 = vadd.xlane.f32.xlu0 %v3420
    %v3452 = vpop.xlane.xlu0 %3451
    %3453 = vadd.xlane.f32.xlu0 %v3422
    %v3454 = vpop.xlane.xlu0 %3453
    %3455 = vadd.xlane.f32.xlu0 %v3424
    %v3456 = vpop.xlane.xlu0 %3455
    %3457 = vadd.xlane.f32.xlu0 %v3426
    %v3458 = vpop.xlane.xlu0 %3457
    %3459 = vadd.xlane.f32.xlu0 %v3428
    %v3460 = vpop.xlane.xlu0 %3459
    %v3461 = vlog2.pop %v3430
    %v3462 = vmul.f32 %v3461, 0.6931472
    %v3463 = vlog2.pop %v3432
    %v3464 = vmul.f32 %v3463, 0.6931472
    %v3465 = vlog2.pop %v3434
    %v3466 = vmul.f32 %v3465, 0.6931472
    %v3467 = vlog2.pop %v3436
    %v3468 = vmul.f32 %v3467, 0.6931472
    %v3469 = vlog2.pop %v3438
    %v3470 = vmul.f32 %v3469, 0.6931472
    %v3471 = vlog2.pop %v3440
    %v3472 = vmul.f32 %v3471, 0.6931472
    %v3473 = vlog2.pop %v3442
    %v3474 = vmul.f32 %v3473, 0.6931472
    %v3475 = vlog2.pop %v3444
    %v3476 = vmul.f32 %v3475, 0.6931472
    %v3477 = vlog2.pop %v3446
    %v3478 = vmul.f32 %v3477, 0.6931472
    %v3479 = vlog2.pop %v3448
    %v3480 = vmul.f32 %v3479, 0.6931472
    %v3481 = vlog2.pop %v3450
    %v3482 = vmul.f32 %v3481, 0.6931472
    %v3483 = vlog2.pop %v3452
    %v3484 = vmul.f32 %v3483, 0.6931472
    %v3485 = vlog2.pop %v3454
    %v3486 = vmul.f32 %v3485, 0.6931472
    %v3487 = vlog2.pop %v3456
    %v3488 = vmul.f32 %v3487, 0.6931472
    %v3489 = vlog2.pop %v3458
    %v3490 = vmul.f32 %v3489, 0.6931472
    %v3491 = vlog2.pop %v3460
    %v3492 = vmul.f32 %v3491, 0.6931472
    %v3493 = vsub.f32 %v3381, %v3462
    %v3494 = vsub.f32 %v3382, %v3464
    %v3495 = vsub.f32 %v3383, %v3466
    %v3496 = vsub.f32 %v3384, %v3468
    %v3497 = vsub.f32 %v3385, %v3470
    %v3498 = vsub.f32 %v3386, %v3472
    %v3499 = vsub.f32 %v3387, %v3474
    %v3500 = vsub.f32 %v3388, %v3476
    %v3501 = vsub.f32 %v3389, %v3478
    %v3502 = vsub.f32 %v3390, %v3480
    %v3503 = vsub.f32 %v3391, %v3482
    %v3504 = vsub.f32 %v3392, %v3484
    %v3505 = vsub.f32 %v3393, %v3486
    %v3506 = vsub.f32 %v3394, %v3488
    %v3507 = vsub.f32 %v3395, %v3490
    %v3508 = vsub.f32 %v3396, %v3492
    %3509 = vst [vmem:[#allocation10] sm:$0xff] %v3493
    %3510 = vst [vmem:[#allocation10 + $0x8] sm:$0xff] %v3494
    %3511 = vst [vmem:[#allocation10 + $0x10] sm:$0xff] %v3495
    %3512 = vst [vmem:[#allocation10 + $0x18] sm:$0xff] %v3496
    %3513 = vst [vmem:[#allocation10 + $0x20] sm:$0xff] %v3497
    %3514 = vst [vmem:[#allocation10 + $0x28] sm:$0xff] %v3498
    %3515 = vst [vmem:[#allocation10 + $0x30] sm:$0xff] %v3499
    %3516 = vst [vmem:[#allocation10 + $0x38] sm:$0xff] %v3500
    %3517 = vst [vmem:[#allocation10 + $0x40] sm:$0xff] %v3501
    %3518 = vst [vmem:[#allocation10 + $0x48] sm:$0xff] %v3502
    %3519 = vst [vmem:[#allocation10 + $0x50] sm:$0xff] %v3503
    %3520 = vst [vmem:[#allocation10 + $0x58] sm:$0xff] %v3504
    %3521 = vst [vmem:[#allocation10 + $0x60] sm:$0xff] %v3505
    %3522 = vst [vmem:[#allocation10 + $0x68] sm:$0xff] %v3506
    %3523 = vst [vmem:[#allocation10 + $0x70] sm:$0xff] %v3507
    %3524 = vst [vmem:[#allocation10 + $0x78] sm:$0xff] %v3508
    // Predicated region
    $region46: #{decoder_rnn_sequence.1} parent=1 // pred_check
      _
    $region47: #{decoder_rnn_sequence.1} parent=1 // pred_check_branch
      %3526 = sbr.rel (0) target = $region49
    $region48: #{decoder_rnn_sequence.1} parent=1 // pred_region
      %3528 = vsyncadd [#allocation7], 0
      %s3529 = sshll.u32 [#allocation10], 4
      %s3530 = int_to_ptr.vmem [resolvable:$true] %s3529
      %s3531 = sshll.u32 %s9, 4
      %s3532 = int_to_ptr.hbm [resolvable:$true] %s3531
      %3537 = dma.vmem_to_hbm [thread:$0]  %s3530, 2048, %s3532, [#allocation7], 128, 128, 8
    $region49: #{decoder_rnn_sequence.1} parent=1 // pred_fallthru
      _
    // Predicated region
    $region50: #{decoder_rnn_sequence.1} parent=1 // pred_check
      _
    $region51: #{decoder_rnn_sequence.1} parent=1 // pred_check_branch
      %3539 = sbr.rel (0) target = $region53
    $region52: #{decoder_rnn_sequence.1} parent=1 // pred_region
      _
    $region53: #{decoder_rnn_sequence.1} parent=1 // pred_fallthru
      _
    // Predicated region
    $region54: #{decoder_rnn_sequence.1} parent=1 // pred_check
      _
    $region55: #{decoder_rnn_sequence.1} parent=1 // pred_check_branch
      %3541 = sbr.rel (0) target = $region57
    $region56: #{decoder_rnn_sequence.1} parent=1 // pred_region
      %3543 = dma.done [#allocation7], 2048
    $region57: #{decoder_rnn_sequence.1} parent=1 // pred_fallthru
      _
    // Predicated region
    $region58: #{decoder_rnn_sequence.1} parent=1 // pred_check
      _
    $region59: #{decoder_rnn_sequence.1} parent=1 // pred_check_branch
      %3545 = sbr.rel (0) target = $region61
    $region60: #{decoder_rnn_sequence.1} parent=1 // pred_region
      _
    $region61: #{decoder_rnn_sequence.1} parent=1 // pred_fallthru
      _
    %3546 = vsyncpa [#allocation6], 1
    %3547 = vsyncpa [#allocation9], 1
    %3548 = vsyncpa [#allocation7], 1

</llo_original>
